<compile_context>
chip_gen: v7x
topology: tpu7x:2x2x1
jax: 0.10.0
libtpu: 0.0.40
codegen_flags: <defaults>
</compile_context>

<pallas_src>
import jax
import jax.numpy as jnp
from jax.experimental import pallas as pl
from jax.experimental.pallas import tpu as pltpu


def mlp_kernel(x_ref, w1_ref, b1_ref, w2_ref, b2_ref,
               w3_ref, b3_ref, w4_ref, b4_ref, o_ref):
    # fc1 + ReLU (bf16 MXU inputs, f32 accumulate, bias/ReLU in f32)
    h = jnp.dot(x_ref[...].astype(jnp.bfloat16), w1_ref[...],
                preferred_element_type=jnp.float32)
    h = jnp.maximum(h + b1_ref[...], 0.0)
    # fc2 + ReLU
    h = jnp.dot(h.astype(jnp.bfloat16), w2_ref[...],
                preferred_element_type=jnp.float32)
    h = jnp.maximum(h + b2_ref[...], 0.0)
    # fc3 + ReLU
    h = jnp.dot(h.astype(jnp.bfloat16), w3_ref[...],
                preferred_element_type=jnp.float32)
    h = jnp.maximum(h + b3_ref[...], 0.0)
    # fc4 (no activation); output lanes padded to 128 for unmasked stores
    h = jnp.dot(h.astype(jnp.bfloat16), w4_ref[...],
                preferred_element_type=jnp.float32)
    o_ref[...] = (h + b4_ref[...]).astype(o_ref.dtype)


def chess_model_forward(x, params, *, bm=256, vmem_limit_bytes=64 * 1024 * 1024):
    """x: [B, 1024] float32 -> [B, 12] float32.

    bm=256 targets v6e/v7x (2x256x256 MXU); use bm=128 on v5e. On v7x, pick
    bm <= B/2 for large B so the "parallel" grid axis spans both TensorCores.
    """
    (w1, b1), (w2, b2), (w3, b3), (w4, b4) = params
    B, K = x.shape
    assert K == 1024, K
    n_out = w4.shape[1]           # 12
    n_pad = 128                   # lane-dense output width

    # Zero-pad fc4 to a 128-wide output (unmasked vst), cast weights to bf16.
    w4p = jnp.zeros((w4.shape[0], n_pad), w4.dtype).at[:, :n_out].set(w4)
    b4p = jnp.zeros((1, n_pad), b4.dtype).at[:, :n_out].set(b4)
    w1b = w1.astype(jnp.bfloat16)
    w2b = w2.astype(jnp.bfloat16)
    w3b = w3.astype(jnp.bfloat16)
    w4b = w4p.astype(jnp.bfloat16)

    # Pad batch to a multiple of bm (keeps the fast aligned path for any B).
    n_tiles = pl.cdiv(B, bm)
    Bp = n_tiles * bm
    xp = x if Bp == B else jnp.pad(x, ((0, Bp - B), (0, 0)))

    full = lambda arr: pl.BlockSpec(arr.shape, lambda i: (0, 0))

    out = pl.pallas_call(
        mlp_kernel,
        out_shape=jax.ShapeDtypeStruct((Bp, n_pad), jnp.float32),
        grid_spec=pltpu.PrefetchScalarGridSpec(
            num_scalar_prefetch=0,
            grid=(n_tiles,),
            in_specs=[
                pl.BlockSpec((bm, 1024), lambda i: (i, 0)),   # x batch tile
                full(w1b), full(b1),
                full(w2b), full(b2),
                full(w3b), full(b3),
                full(w4b), full(b4p),
            ],
            out_specs=pl.BlockSpec((bm, n_pad), lambda i: (i, 0)),
        ),
        compiler_params=pltpu.CompilerParams(
            dimension_semantics=("parallel",),
            vmem_limit_bytes=vmem_limit_bytes,
        ),
    )(xp, w1b, b1, w2b, b2, w3b, b3, w4b, b4p)

    return out[:B, :n_out]


def init_linear(key, fan_in, fan_out):
    """Deterministic init mimicking nn.Linear's U(-1/sqrt(fan_in), 1/sqrt(fan_in)).
    Weight stored already transposed as [fan_in, fan_out]."""
    kw, kb = jax.random.split(key)
    bound = 1.0 / jnp.sqrt(float(fan_in))
    w = jax.random.uniform(kw, (fan_in, fan_out), jnp.float32, -bound, bound)
    b = jax.random.uniform(kb, (1, fan_out), jnp.float32, -bound, bound)
    return w, b


def reference_forward(x, params):
    """Reference matching the kernel's numerics: bf16 matmul inputs, f32 accum."""
    (w1, b1), (w2, b2), (w3, b3), (w4, b4) = params

    def lin(h, w, b):
        return jnp.dot(h.astype(jnp.bfloat16), w.astype(jnp.bfloat16),
                       preferred_element_type=jnp.float32) + b

    h = jnp.maximum(lin(x, w1, b1), 0.0)
    h = jnp.maximum(lin(h, w2, b2), 0.0)
    h = jnp.maximum(lin(h, w3, b3), 0.0)
    return lin(h, w4, b4)


if __name__ == "__main__":
    key = jax.random.PRNGKey(0)
    k_x, k1, k2, k3, k4 = jax.random.split(key, 5)

    B = 8  # small test batch; wrapper pads to the 256-row tile internally
    x = jax.random.normal(k_x, (B, 1024), jnp.float32)

    params = (
        init_linear(k1, 1024, 512),
        init_linear(k2, 512, 128),
        init_linear(k3, 128, 64),
        init_linear(k4, 64, 12),
    )

    out = chess_model_forward(x, params)
    out = jax.block_until_ready(out)

    ref = reference_forward(x, params)
    assert out.shape == (B, 12), out.shape
    assert jnp.allclose(out, ref, atol=5e-3, rtol=5e-3), \
        float(jnp.max(jnp.abs(out - ref)))

    print("KERNEL_OK")
</pallas_src>

<mosaic_0001>
module attributes {stable_mosaic.version = 11 : i64} {
  func.func @mlp_kernel(%arg0: i32, %arg1: memref<256x1024xf32, #tpu.memory_space<vmem>>, %arg2: memref<1024x512xbf16, #tpu.memory_space<vmem>>, %arg3: memref<1x512xf32, #tpu.memory_space<vmem>>, %arg4: memref<512x128xbf16, #tpu.memory_space<vmem>>, %arg5: memref<1x128xf32, #tpu.memory_space<vmem>>, %arg6: memref<128x64xbf16, #tpu.memory_space<vmem>>, %arg7: memref<1x64xf32, #tpu.memory_space<vmem>>, %arg8: memref<64x128xbf16, #tpu.memory_space<vmem>>, %arg9: memref<1x128xf32, #tpu.memory_space<vmem>>, %arg10: memref<256x128xf32, #tpu.memory_space<vmem>>) attributes {dimension_semantics = [#tpu.dimension_semantics<parallel>], iteration_bounds = array<i64: 1>, scalar_prefetch = 0 : i64, scratch_operands = 0 : i64, tpu.core_type = #tpu.core_type<tc>, window_params = [{transform_indices = @transform_0, window_bounds = array<i64: 256, 1024>}, {pipeline_mode = #tpu.pipeline_mode<synchronous>, transform_indices = @transform_1, window_bounds = array<i64: 1024, 512>}, {pipeline_mode = #tpu.pipeline_mode<synchronous>, transform_indices = @transform_2, window_bounds = array<i64: 1, 512>}, {pipeline_mode = #tpu.pipeline_mode<synchronous>, transform_indices = @transform_3, window_bounds = array<i64: 512, 128>}, {pipeline_mode = #tpu.pipeline_mode<synchronous>, transform_indices = @transform_4, window_bounds = array<i64: 1, 128>}, {pipeline_mode = #tpu.pipeline_mode<synchronous>, transform_indices = @transform_5, window_bounds = array<i64: 128, 64>}, {pipeline_mode = #tpu.pipeline_mode<synchronous>, transform_indices = @transform_6, window_bounds = array<i64: 1, 64>}, {pipeline_mode = #tpu.pipeline_mode<synchronous>, transform_indices = @transform_7, window_bounds = array<i64: 64, 128>}, {pipeline_mode = #tpu.pipeline_mode<synchronous>, transform_indices = @transform_8, window_bounds = array<i64: 1, 128>}, {transform_indices = @transform_9, window_bounds = array<i64: 256, 128>}]} {
    %c0 = arith.constant 0 : index
    %c0_0 = arith.constant 0 : index
    %0 = vector.load %arg1[%c0, %c0_0] : memref<256x1024xf32, #tpu.memory_space<vmem>>, vector<256x1024xf32>
    %1 = arith.truncf %0 : vector<256x1024xf32> to vector<256x1024xbf16>
    %c0_1 = arith.constant 0 : index
    %c0_2 = arith.constant 0 : index
    %2 = vector.load %arg2[%c0_1, %c0_2] : memref<1024x512xbf16, #tpu.memory_space<vmem>>, vector<1024x512xbf16>
    %cst = arith.constant dense<0.000000e+00> : vector<256x512xf32>
    %3 = tpu.matmul %1, %2, %cst {dimension_numbers = #tpu.dot_dimension_numbers<[1], [0], [0], [1], [0, 0, 1, 1], [], []>} : vector<256x1024xbf16>, vector<1024x512xbf16>, vector<256x512xf32> -> vector<256x512xf32>
    %c0_3 = arith.constant 0 : index
    %c0_4 = arith.constant 0 : index
    %4 = vector.load %arg3[%c0_3, %c0_4] : memref<1x512xf32, #tpu.memory_space<vmem>>, vector<1x512xf32>
    %5 = vector.broadcast %4 : vector<1x512xf32> to vector<256x512xf32>
    %6 = arith.addf %3, %5 : vector<256x512xf32>
    %cst_5 = arith.constant 0.000000e+00 : f32
    %7 = vector.broadcast %cst_5 : f32 to vector<256x512xf32>
    %8 = arith.maximumf %6, %7 : vector<256x512xf32>
    %9 = arith.truncf %8 : vector<256x512xf32> to vector<256x512xbf16>
    %c0_6 = arith.constant 0 : index
    %c0_7 = arith.constant 0 : index
    %10 = vector.load %arg4[%c0_6, %c0_7] : memref<512x128xbf16, #tpu.memory_space<vmem>>, vector<512x128xbf16>
    %cst_8 = arith.constant dense<0.000000e+00> : vector<256x128xf32>
    %11 = tpu.matmul %9, %10, %cst_8 {dimension_numbers = #tpu.dot_dimension_numbers<[1], [0], [0], [1], [0, 0, 1, 1], [], []>} : vector<256x512xbf16>, vector<512x128xbf16>, vector<256x128xf32> -> vector<256x128xf32>
    %c0_9 = arith.constant 0 : index
    %c0_10 = arith.constant 0 : index
    %12 = vector.load %arg5[%c0_9, %c0_10] : memref<1x128xf32, #tpu.memory_space<vmem>>, vector<1x128xf32>
    %13 = vector.broadcast %12 : vector<1x128xf32> to vector<256x128xf32>
    %14 = arith.addf %11, %13 : vector<256x128xf32>
    %cst_11 = arith.constant 0.000000e+00 : f32
    %15 = vector.broadcast %cst_11 : f32 to vector<256x128xf32>
    %16 = arith.maximumf %14, %15 : vector<256x128xf32>
    %17 = arith.truncf %16 : vector<256x128xf32> to vector<256x128xbf16>
    %c0_12 = arith.constant 0 : index
    %c0_13 = arith.constant 0 : index
    %18 = vector.load %arg6[%c0_12, %c0_13] : memref<128x64xbf16, #tpu.memory_space<vmem>>, vector<128x64xbf16>
    %cst_14 = arith.constant dense<0.000000e+00> : vector<256x64xf32>
    %19 = tpu.matmul %17, %18, %cst_14 {dimension_numbers = #tpu.dot_dimension_numbers<[1], [0], [0], [1], [0, 0, 1, 1], [], []>} : vector<256x128xbf16>, vector<128x64xbf16>, vector<256x64xf32> -> vector<256x64xf32>
    %c0_15 = arith.constant 0 : index
    %c0_16 = arith.constant 0 : index
    %20 = vector.load %arg7[%c0_15, %c0_16] : memref<1x64xf32, #tpu.memory_space<vmem>>, vector<1x64xf32>
    %21 = vector.broadcast %20 : vector<1x64xf32> to vector<256x64xf32>
    %22 = arith.addf %19, %21 : vector<256x64xf32>
    %cst_17 = arith.constant 0.000000e+00 : f32
    %23 = vector.broadcast %cst_17 : f32 to vector<256x64xf32>
    %24 = arith.maximumf %22, %23 : vector<256x64xf32>
    %25 = arith.truncf %24 : vector<256x64xf32> to vector<256x64xbf16>
    %c0_18 = arith.constant 0 : index
    %c0_19 = arith.constant 0 : index
    %26 = vector.load %arg8[%c0_18, %c0_19] : memref<64x128xbf16, #tpu.memory_space<vmem>>, vector<64x128xbf16>
    %cst_20 = arith.constant dense<0.000000e+00> : vector<256x128xf32>
    %27 = tpu.matmul %25, %26, %cst_20 {dimension_numbers = #tpu.dot_dimension_numbers<[1], [0], [0], [1], [0, 0, 1, 1], [], []>} : vector<256x64xbf16>, vector<64x128xbf16>, vector<256x128xf32> -> vector<256x128xf32>
    %c0_21 = arith.constant 0 : index
    %c0_22 = arith.constant 0 : index
    %28 = vector.load %arg9[%c0_21, %c0_22] : memref<1x128xf32, #tpu.memory_space<vmem>>, vector<1x128xf32>
    %29 = vector.broadcast %28 : vector<1x128xf32> to vector<256x128xf32>
    %30 = arith.addf %27, %29 : vector<256x128xf32>
    %c0_23 = arith.constant 0 : index
    %c0_24 = arith.constant 0 : index
    %31 = vector.load %arg10[%c0_23, %c0_24] : memref<256x128xf32, #tpu.memory_space<vmem>>, vector<256x128xf32>
    tpu.vector_store %arg10[%c0_23, %c0_24], %30 {strides = array<i32>} : memref<256x128xf32, #tpu.memory_space<vmem>>, vector<256x128xf32>,
    return
  }
  func.func @transform_0(%arg0: i32) -> (i32, i32) {
    %c0_i32 = arith.constant 0 : i32
    %c0_i32_0 = arith.constant 0 : i32
    return %arg0, %c0_i32 : i32, i32
  }
  func.func @transform_1(%arg0: i32) -> (i32, i32) {
    %c0_i32 = arith.constant 0 : i32
    %c0_i32_0 = arith.constant 0 : i32
    %c0_i32_1 = arith.constant 0 : i32
    return %c0_i32, %c0_i32_0 : i32, i32
  }
  func.func @transform_2(%arg0: i32) -> (i32, i32) {
    %c0_i32 = arith.constant 0 : i32
    %c0_i32_0 = arith.constant 0 : i32
    %c0_i32_1 = arith.constant 0 : i32
    return %c0_i32, %c0_i32_0 : i32, i32
  }
  func.func @transform_3(%arg0: i32) -> (i32, i32) {
    %c0_i32 = arith.constant 0 : i32
    %c0_i32_0 = arith.constant 0 : i32
    %c0_i32_1 = arith.constant 0 : i32
    return %c0_i32, %c0_i32_0 : i32, i32
  }
  func.func @transform_4(%arg0: i32) -> (i32, i32) {
    %c0_i32 = arith.constant 0 : i32
    %c0_i32_0 = arith.constant 0 : i32
    %c0_i32_1 = arith.constant 0 : i32
    return %c0_i32, %c0_i32_0 : i32, i32
  }
  func.func @transform_5(%arg0: i32) -> (i32, i32) {
    %c0_i32 = arith.constant 0 : i32
    %c0_i32_0 = arith.constant 0 : i32
    %c0_i32_1 = arith.constant 0 : i32
    return %c0_i32, %c0_i32_0 : i32, i32
  }
  func.func @transform_6(%arg0: i32) -> (i32, i32) {
    %c0_i32 = arith.constant 0 : i32
    %c0_i32_0 = arith.constant 0 : i32
    %c0_i32_1 = arith.constant 0 : i32
    return %c0_i32, %c0_i32_0 : i32, i32
  }
  func.func @transform_7(%arg0: i32) -> (i32, i32) {
    %c0_i32 = arith.constant 0 : i32
    %c0_i32_0 = arith.constant 0 : i32
    %c0_i32_1 = arith.constant 0 : i32
    return %c0_i32, %c0_i32_0 : i32, i32
  }
  func.func @transform_8(%arg0: i32) -> (i32, i32) {
    %c0_i32 = arith.constant 0 : i32
    %c0_i32_0 = arith.constant 0 : i32
    %c0_i32_1 = arith.constant 0 : i32
    return %c0_i32, %c0_i32_0 : i32, i32
  }
  func.func @transform_9(%arg0: i32) -> (i32, i32) {
    %c0_i32 = arith.constant 0 : i32
    %c0_i32_0 = arith.constant 0 : i32
    return %arg0, %c0_i32 : i32, i32
  }
}

</mosaic_0001>

<llo_original>
// kernel: tpu_custom_call.1
$region0: #{tpu_custom_call.1}
  #allocation0 [shape = 'u32[]', space=smem, size = 0x4, offset = 0x4, fixed_abs, tag = 'smem constant byte address 0x4 - core index']
  #allocation1 [shape = 'u32[144,128]{1,0:T(1,128)}', space=vmem, size = 0x12000, scoped, tag = 'internal scratch']
  %s0 = inlined_call_operand.hbm [shape: f32[256,1024], index: 0, kind: input, shape index: {}]
  %s1 = inlined_call_operand.hbm [shape: bf16[1024,512], index: 1, kind: input, shape index: {}]
  %s2 = inlined_call_operand.hbm [shape: f32[1,512], index: 2, kind: input, shape index: {}]
  %s3 = inlined_call_operand.hbm [shape: bf16[512,128], index: 3, kind: input, shape index: {}]
  %s4 = inlined_call_operand.hbm [shape: f32[1,128], index: 4, kind: input, shape index: {}]
  %s5 = inlined_call_operand.hbm [shape: bf16[128,64], index: 5, kind: input, shape index: {}]
  %s6 = inlined_call_operand.hbm [shape: f32[1,64], index: 6, kind: input, shape index: {}]
  %s7 = inlined_call_operand.hbm [shape: bf16[64,128], index: 7, kind: input, shape index: {}]
  %s8 = inlined_call_operand.hbm [shape: f32[1,128], index: 8, kind: input, shape index: {}]
  %s9 = inlined_call_operand.hbm [shape: f32[256,128], index: 9, kind: output, shape index: {}]
  %s10 = sld [smem:[#allocation0]]
  $region82: #{tpu_custom_call.1} parent=0
    _
  %s12 = ssub.s32 1, %s10
  %s13 = scalar_select 0, %s12, %s10
  $region1: #{tpu_custom_call.1} parent=0
    #allocation2 [shape = 'u8[1048576]{0}', space=vmem, size = 0x100000, scoped, tag = 'input window, operand 0, single buffered']
    #allocation3 [shape = 's32[1]{0}', space=sflag, size = 0x4, scoped, tag = 'scoped memory for tpu_custom_call.1']
    #allocation4 [shape = 's32[1]{0}', space=sflag, size = 0x4, scoped, tag = 'scoped memory for tpu_custom_call.1']
    #allocation5 [shape = 'u8[1048576]{0}', space=vmem, size = 0x100000, scoped, tag = 'input window, operand 1, single buffered']
    #allocation6 [shape = 's32[1]{0}', space=sflag, size = 0x4, scoped, tag = 'scoped memory for tpu_custom_call.1']
    #allocation7 [shape = 'u8[2048]{0}', space=vmem, size = 0x800, scoped, tag = 'input window, operand 2, single buffered']
    #allocation8 [shape = 'u8[131072]{0}', space=vmem, size = 0x20000, scoped, tag = 'input window, operand 3, single buffered']
    #allocation9 [shape = 's32[1]{0}', space=sflag, size = 0x4, scoped, tag = 'scoped memory for tpu_custom_call.1']
    #allocation10 [shape = 'u8[512]{0}', space=vmem, size = 0x400, scoped, tag = 'input window, operand 4, single buffered']
    #allocation11 [shape = 'u8[32768]{0}', space=vmem, size = 0x8000, scoped, tag = 'input window, operand 5, single buffered']
    #allocation12 [shape = 's32[1]{0}', space=sflag, size = 0x4, scoped, tag = 'scoped memory for tpu_custom_call.1']
    #allocation13 [shape = 'u8[512]{0}', space=vmem, size = 0x400, scoped, tag = 'input window, operand 6, single buffered']
    #allocation14 [shape = 'u8[16384]{0}', space=vmem, size = 0x4000, scoped, tag = 'input window, operand 7, single buffered']
    #allocation15 [shape = 's32[1]{0}', space=sflag, size = 0x4, scoped, tag = 'scoped memory for tpu_custom_call.1']
    #allocation16 [shape = 'u8[512]{0}', space=vmem, size = 0x400, scoped, tag = 'input window, operand 8, single buffered']
    #allocation17 [shape = 'u8[131072]{0}', space=vmem, size = 0x20000, scoped, tag = 'output window, operand 0, single buffered']
    %14 = vsyncpa [#allocation3], 0
    %15 = vsyncpa [#allocation6], 0
    %16 = vsyncpa [#allocation9], 0
    %17 = vsyncpa [#allocation12], 0
    %18 = vsyncpa [#allocation15], 0
    %19 = vsyncpa [#allocation4], 0
    // Predicated region
    $region2: #{tpu_custom_call.1} parent=1 // pred_check
      _
    $region3: #{tpu_custom_call.1} parent=1 // pred_check_branch
      %21 = sbr.rel (0) target = $region5
    $region4: #{tpu_custom_call.1} parent=1 // pred_region
      %s23 = ssub.s32 32768, 32768
      %24 = vsyncadd [#allocation3], %s23
      %s25 = sshll.u32 [#allocation2], 4
      %s26 = int_to_ptr.vmem [resolvable:$true] %s25
      %31 = dma.hbm_to_vmem [thread:$0]  %s0, 32768, %s26, [#allocation3], 1024, 1024, 64
    $region5: #{tpu_custom_call.1} parent=1 // pred_fallthru
      _
    // Predicated region
    $region6: #{tpu_custom_call.1} parent=1 // pred_check
      _
    $region7: #{tpu_custom_call.1} parent=1 // pred_check_branch
      %33 = sbr.rel (0) target = $region9
    $region8: #{tpu_custom_call.1} parent=1 // pred_region
      %s35 = ssub.s32 32768, 32768
      %36 = vsyncadd [#allocation6], %s35
      %s37 = sshll.u32 [#allocation5], 4
      %s38 = int_to_ptr.vmem [resolvable:$true] %s37
      %43 = dma.hbm_to_vmem [thread:$0]  %s1, 32768, %s38, [#allocation6], 256, 256, 16
    $region9: #{tpu_custom_call.1} parent=1 // pred_fallthru
      _
    // Predicated region
    $region10: #{tpu_custom_call.1} parent=1 // pred_check
      _
    $region11: #{tpu_custom_call.1} parent=1 // pred_check_branch
      %45 = sbr.rel (0) target = $region13
    $region12: #{tpu_custom_call.1} parent=1 // pred_region
      %s47 = ssub.s32 64, 64
      %48 = vsyncadd [#allocation6], %s47
      %s50 = sshll.u32 [#allocation7], 4
      %s51 = int_to_ptr.vmem [resolvable:$true] %s50
      %53 = dma.hbm_to_vmem [thread:$0]  %s2, 64, %s51, [#allocation6]
    $region13: #{tpu_custom_call.1} parent=1 // pred_fallthru
      _
    // Predicated region
    $region14: #{tpu_custom_call.1} parent=1 // pred_check
      _
    $region15: #{tpu_custom_call.1} parent=1 // pred_check_branch
      %55 = sbr.rel (0) target = $region17
    $region16: #{tpu_custom_call.1} parent=1 // pred_region
      %s57 = ssub.s32 4096, 4096
      %58 = vsyncadd [#allocation9], %s57
      %s59 = sshll.u32 [#allocation8], 4
      %s60 = int_to_ptr.vmem [resolvable:$true] %s59
      %65 = dma.hbm_to_vmem [thread:$0]  %s3, 4096, %s60, [#allocation9], 64, 64, 4
    $region17: #{tpu_custom_call.1} parent=1 // pred_fallthru
      _
    // Predicated region
    $region18: #{tpu_custom_call.1} parent=1 // pred_check
      _
    $region19: #{tpu_custom_call.1} parent=1 // pred_check_branch
      %67 = sbr.rel (0) target = $region21
    $region20: #{tpu_custom_call.1} parent=1 // pred_region
      %s69 = ssub.s32 16, 16
      %70 = vsyncadd [#allocation9], %s69
      %s72 = sshll.u32 [#allocation10], 4
      %s73 = int_to_ptr.vmem [resolvable:$true] %s72
      %75 = dma.hbm_to_vmem [thread:$0]  %s4, 16, %s73, [#allocation9]
    $region21: #{tpu_custom_call.1} parent=1 // pred_fallthru
      _
    // Predicated region
    $region22: #{tpu_custom_call.1} parent=1 // pred_check
      _
    $region23: #{tpu_custom_call.1} parent=1 // pred_check_branch
      %77 = sbr.rel (0) target = $region25
    $region24: #{tpu_custom_call.1} parent=1 // pred_region
      %s79 = ssub.s32 1024, 1024
      %80 = vsyncadd [#allocation12], %s79
      %s81 = sshll.u32 [#allocation11], 4
      %s82 = int_to_ptr.vmem [resolvable:$true] %s81
      %87 = dma.hbm_to_vmem [thread:$0]  %s5, 1024, %s82, [#allocation12], 64, 64, 4
    $region25: #{tpu_custom_call.1} parent=1 // pred_fallthru
      _
    // Predicated region
    $region26: #{tpu_custom_call.1} parent=1 // pred_check
      _
    $region27: #{tpu_custom_call.1} parent=1 // pred_check_branch
      %89 = sbr.rel (0) target = $region29
    $region28: #{tpu_custom_call.1} parent=1 // pred_region
      %s91 = ssub.s32 16, 16
      %92 = vsyncadd [#allocation12], %s91
      %s94 = sshll.u32 [#allocation13], 4
      %s95 = int_to_ptr.vmem [resolvable:$true] %s94
      %97 = dma.hbm_to_vmem [thread:$0]  %s6, 16, %s95, [#allocation12]
    $region29: #{tpu_custom_call.1} parent=1 // pred_fallthru
      _
    // Predicated region
    $region30: #{tpu_custom_call.1} parent=1 // pred_check
      _
    $region31: #{tpu_custom_call.1} parent=1 // pred_check_branch
      %99 = sbr.rel (0) target = $region33
    $region32: #{tpu_custom_call.1} parent=1 // pred_region
      %s101 = ssub.s32 512, 512
      %102 = vsyncadd [#allocation15], %s101
      %s103 = sshll.u32 [#allocation14], 4
      %s104 = int_to_ptr.vmem [resolvable:$true] %s103
      %109 = dma.hbm_to_vmem [thread:$0]  %s7, 512, %s104, [#allocation15], 64, 64, 4
    $region33: #{tpu_custom_call.1} parent=1 // pred_fallthru
      _
    // Predicated region
    $region34: #{tpu_custom_call.1} parent=1 // pred_check
      _
    $region35: #{tpu_custom_call.1} parent=1 // pred_check_branch
      %111 = sbr.rel (0) target = $region37
    $region36: #{tpu_custom_call.1} parent=1 // pred_region
      %s113 = ssub.s32 16, 16
      %114 = vsyncadd [#allocation15], %s113
      %s116 = sshll.u32 [#allocation16], 4
      %s117 = int_to_ptr.vmem [resolvable:$true] %s116
      %119 = dma.hbm_to_vmem [thread:$0]  %s8, 16, %s117, [#allocation15]
    $region37: #{tpu_custom_call.1} parent=1 // pred_fallthru
      _
    // Predicated region
    $region38: #{tpu_custom_call.1} parent=1 // pred_check
      _
    $region39: #{tpu_custom_call.1} parent=1 // pred_check_branch
      %121 = sbr.rel (0) target = $region41
    $region40: #{tpu_custom_call.1} parent=1 // pred_region
      %122 = dma.done [#allocation3], 32768
    $region41: #{tpu_custom_call.1} parent=1 // pred_fallthru
      _
    // Predicated region
    $region42: #{tpu_custom_call.1} parent=1 // pred_check
      _
    $region43: #{tpu_custom_call.1} parent=1 // pred_check_branch
      %124 = sbr.rel (0) target = $region45
    $region44: #{tpu_custom_call.1} parent=1 // pred_region
      %125 = dma.done [#allocation6], 32768
    $region45: #{tpu_custom_call.1} parent=1 // pred_fallthru
      _
    // Predicated region
    $region46: #{tpu_custom_call.1} parent=1 // pred_check
      _
    $region47: #{tpu_custom_call.1} parent=1 // pred_check_branch
      %127 = sbr.rel (0) target = $region49
    $region48: #{tpu_custom_call.1} parent=1 // pred_region
      %128 = dma.done [#allocation6], 64
    $region49: #{tpu_custom_call.1} parent=1 // pred_fallthru
      _
    // Predicated region
    $region50: #{tpu_custom_call.1} parent=1 // pred_check
      _
    $region51: #{tpu_custom_call.1} parent=1 // pred_check_branch
      %130 = sbr.rel (0) target = $region53
    $region52: #{tpu_custom_call.1} parent=1 // pred_region
      %131 = dma.done [#allocation9], 4096
    $region53: #{tpu_custom_call.1} parent=1 // pred_fallthru
      _
    // Predicated region
    $region54: #{tpu_custom_call.1} parent=1 // pred_check
      _
    $region55: #{tpu_custom_call.1} parent=1 // pred_check_branch
      %133 = sbr.rel (0) target = $region57
    $region56: #{tpu_custom_call.1} parent=1 // pred_region
      %134 = dma.done [#allocation9], 16
    $region57: #{tpu_custom_call.1} parent=1 // pred_fallthru
      _
    // Predicated region
    $region58: #{tpu_custom_call.1} parent=1 // pred_check
      _
    $region59: #{tpu_custom_call.1} parent=1 // pred_check_branch
      %136 = sbr.rel (0) target = $region61
    $region60: #{tpu_custom_call.1} parent=1 // pred_region
      %137 = dma.done [#allocation12], 1024
    $region61: #{tpu_custom_call.1} parent=1 // pred_fallthru
      _
    // Predicated region
    $region62: #{tpu_custom_call.1} parent=1 // pred_check
      _
    $region63: #{tpu_custom_call.1} parent=1 // pred_check_branch
      %139 = sbr.rel (0) target = $region65
    $region64: #{tpu_custom_call.1} parent=1 // pred_region
      %140 = dma.done [#allocation12], 16
    $region65: #{tpu_custom_call.1} parent=1 // pred_fallthru
      _
    // Predicated region
    $region66: #{tpu_custom_call.1} parent=1 // pred_check
      _
    $region67: #{tpu_custom_call.1} parent=1 // pred_check_branch
      %142 = sbr.rel (0) target = $region69
    $region68: #{tpu_custom_call.1} parent=1 // pred_region
      %143 = dma.done [#allocation15], 512
    $region69: #{tpu_custom_call.1} parent=1 // pred_fallthru
      _
    // Predicated region
    $region70: #{tpu_custom_call.1} parent=1 // pred_check
      _
    $region71: #{tpu_custom_call.1} parent=1 // pred_check_branch
      %145 = sbr.rel (0) target = $region73
    $region72: #{tpu_custom_call.1} parent=1 // pred_region
      %146 = dma.done [#allocation15], 16
    $region73: #{tpu_custom_call.1} parent=1 // pred_fallthru
      _
    %v148 = vld [vmem:[#allocation2] sm:$0xff]
    %v149 = vld [vmem:[#allocation2 + $0x8] sm:$0xff]
    %v150 = vld [vmem:[#allocation2 + $0x10] sm:$0xff]
    %v151 = vld [vmem:[#allocation2 + $0x18] sm:$0xff]
    %v152 = vld [vmem:[#allocation2 + $0x20] sm:$0xff]
    %v153 = vld [vmem:[#allocation2 + $0x28] sm:$0xff]
    %v154 = vld [vmem:[#allocation2 + $0x30] sm:$0xff]
    %v155 = vld [vmem:[#allocation2 + $0x38] sm:$0xff]
    %v156 = vld [vmem:[#allocation2 + $0x40] sm:$0xff]
    %v157 = vld [vmem:[#allocation2 + $0x48] sm:$0xff]
    %v158 = vld [vmem:[#allocation2 + $0x50] sm:$0xff]
    %v159 = vld [vmem:[#allocation2 + $0x58] sm:$0xff]
    %v160 = vld [vmem:[#allocation2 + $0x60] sm:$0xff]
    %v161 = vld [vmem:[#allocation2 + $0x68] sm:$0xff]
    %v162 = vld [vmem:[#allocation2 + $0x70] sm:$0xff]
    %v163 = vld [vmem:[#allocation2 + $0x78] sm:$0xff]
    %v164 = vld [vmem:[#allocation2 + $0x80] sm:$0xff]
    %v165 = vld [vmem:[#allocation2 + $0x88] sm:$0xff]
    %v166 = vld [vmem:[#allocation2 + $0x90] sm:$0xff]
    %v167 = vld [vmem:[#allocation2 + $0x98] sm:$0xff]
    %v168 = vld [vmem:[#allocation2 + $0xa0] sm:$0xff]
    %v169 = vld [vmem:[#allocation2 + $0xa8] sm:$0xff]
    %v170 = vld [vmem:[#allocation2 + $0xb0] sm:$0xff]
    %v171 = vld [vmem:[#allocation2 + $0xb8] sm:$0xff]
    %v172 = vld [vmem:[#allocation2 + $0xc0] sm:$0xff]
    %v173 = vld [vmem:[#allocation2 + $0xc8] sm:$0xff]
    %v174 = vld [vmem:[#allocation2 + $0xd0] sm:$0xff]
    %v175 = vld [vmem:[#allocation2 + $0xd8] sm:$0xff]
    %v176 = vld [vmem:[#allocation2 + $0xe0] sm:$0xff]
    %v177 = vld [vmem:[#allocation2 + $0xe8] sm:$0xff]
    %v178 = vld [vmem:[#allocation2 + $0xf0] sm:$0xff]
    %v179 = vld [vmem:[#allocation2 + $0xf8] sm:$0xff]
    %v180 = vld [vmem:[#allocation2 + $0x100] sm:$0xff]
    %v181 = vld [vmem:[#allocation2 + $0x108] sm:$0xff]
    %v182 = vld [vmem:[#allocation2 + $0x110] sm:$0xff]
    %v183 = vld [vmem:[#allocation2 + $0x118] sm:$0xff]
    %v184 = vld [vmem:[#allocation2 + $0x120] sm:$0xff]
    %v185 = vld [vmem:[#allocation2 + $0x128] sm:$0xff]
    %v186 = vld [vmem:[#allocation2 + $0x130] sm:$0xff]
    %v187 = vld [vmem:[#allocation2 + $0x138] sm:$0xff]
    %v188 = vld [vmem:[#allocation2 + $0x140] sm:$0xff]
    %v189 = vld [vmem:[#allocation2 + $0x148] sm:$0xff]
    %v190 = vld [vmem:[#allocation2 + $0x150] sm:$0xff]
    %v191 = vld [vmem:[#allocation2 + $0x158] sm:$0xff]
    %v192 = vld [vmem:[#allocation2 + $0x160] sm:$0xff]
    %v193 = vld [vmem:[#allocation2 + $0x168] sm:$0xff]
    %v194 = vld [vmem:[#allocation2 + $0x170] sm:$0xff]
    %v195 = vld [vmem:[#allocation2 + $0x178] sm:$0xff]
    %v196 = vld [vmem:[#allocation2 + $0x180] sm:$0xff]
    %v197 = vld [vmem:[#allocation2 + $0x188] sm:$0xff]
    %v198 = vld [vmem:[#allocation2 + $0x190] sm:$0xff]
    %v199 = vld [vmem:[#allocation2 + $0x198] sm:$0xff]
    %v200 = vld [vmem:[#allocation2 + $0x1a0] sm:$0xff]
    %v201 = vld [vmem:[#allocation2 + $0x1a8] sm:$0xff]
    %v202 = vld [vmem:[#allocation2 + $0x1b0] sm:$0xff]
    %v203 = vld [vmem:[#allocation2 + $0x1b8] sm:$0xff]
    %v204 = vld [vmem:[#allocation2 + $0x1c0] sm:$0xff]
    %v205 = vld [vmem:[#allocation2 + $0x1c8] sm:$0xff]
    %v206 = vld [vmem:[#allocation2 + $0x1d0] sm:$0xff]
    %v207 = vld [vmem:[#allocation2 + $0x1d8] sm:$0xff]
    %v208 = vld [vmem:[#allocation2 + $0x1e0] sm:$0xff]
    %v209 = vld [vmem:[#allocation2 + $0x1e8] sm:$0xff]
    %v210 = vld [vmem:[#allocation2 + $0x1f0] sm:$0xff]
    %v211 = vld [vmem:[#allocation2 + $0x1f8] sm:$0xff]
    %v212 = vld [vmem:[#allocation2 + $0x200] sm:$0xff]
    %v213 = vld [vmem:[#allocation2 + $0x208] sm:$0xff]
    %v214 = vld [vmem:[#allocation2 + $0x210] sm:$0xff]
    %v215 = vld [vmem:[#allocation2 + $0x218] sm:$0xff]
    %v216 = vld [vmem:[#allocation2 + $0x220] sm:$0xff]
    %v217 = vld [vmem:[#allocation2 + $0x228] sm:$0xff]
    %v218 = vld [vmem:[#allocation2 + $0x230] sm:$0xff]
    %v219 = vld [vmem:[#allocation2 + $0x238] sm:$0xff]
    %v220 = vld [vmem:[#allocation2 + $0x240] sm:$0xff]
    %v221 = vld [vmem:[#allocation2 + $0x248] sm:$0xff]
    %v222 = vld [vmem:[#allocation2 + $0x250] sm:$0xff]
    %v223 = vld [vmem:[#allocation2 + $0x258] sm:$0xff]
    %v224 = vld [vmem:[#allocation2 + $0x260] sm:$0xff]
    %v225 = vld [vmem:[#allocation2 + $0x268] sm:$0xff]
    %v226 = vld [vmem:[#allocation2 + $0x270] sm:$0xff]
    %v227 = vld [vmem:[#allocation2 + $0x278] sm:$0xff]
    %v228 = vld [vmem:[#allocation2 + $0x280] sm:$0xff]
    %v229 = vld [vmem:[#allocation2 + $0x288] sm:$0xff]
    %v230 = vld [vmem:[#allocation2 + $0x290] sm:$0xff]
    %v231 = vld [vmem:[#allocation2 + $0x298] sm:$0xff]
    %v232 = vld [vmem:[#allocation2 + $0x2a0] sm:$0xff]
    %v233 = vld [vmem:[#allocation2 + $0x2a8] sm:$0xff]
    %v234 = vld [vmem:[#allocation2 + $0x2b0] sm:$0xff]
    %v235 = vld [vmem:[#allocation2 + $0x2b8] sm:$0xff]
    %v236 = vld [vmem:[#allocation2 + $0x2c0] sm:$0xff]
    %v237 = vld [vmem:[#allocation2 + $0x2c8] sm:$0xff]
    %v238 = vld [vmem:[#allocation2 + $0x2d0] sm:$0xff]
    %v239 = vld [vmem:[#allocation2 + $0x2d8] sm:$0xff]
    %v240 = vld [vmem:[#allocation2 + $0x2e0] sm:$0xff]
    %v241 = vld [vmem:[#allocation2 + $0x2e8] sm:$0xff]
    %v242 = vld [vmem:[#allocation2 + $0x2f0] sm:$0xff]
    %v243 = vld [vmem:[#allocation2 + $0x2f8] sm:$0xff]
    %v244 = vld [vmem:[#allocation2 + $0x300] sm:$0xff]
    %v245 = vld [vmem:[#allocation2 + $0x308] sm:$0xff]
    %v246 = vld [vmem:[#allocation2 + $0x310] sm:$0xff]
    %v247 = vld [vmem:[#allocation2 + $0x318] sm:$0xff]
    %v248 = vld [vmem:[#allocation2 + $0x320] sm:$0xff]
    %v249 = vld [vmem:[#allocation2 + $0x328] sm:$0xff]
    %v250 = vld [vmem:[#allocation2 + $0x330] sm:$0xff]
    %v251 = vld [vmem:[#allocation2 + $0x338] sm:$0xff]
    %v252 = vld [vmem:[#allocation2 + $0x340] sm:$0xff]
    %v253 = vld [vmem:[#allocation2 + $0x348] sm:$0xff]
    %v254 = vld [vmem:[#allocation2 + $0x350] sm:$0xff]
    %v255 = vld [vmem:[#allocation2 + $0x358] sm:$0xff]
    %v256 = vld [vmem:[#allocation2 + $0x360] sm:$0xff]
    %v257 = vld [vmem:[#allocation2 + $0x368] sm:$0xff]
    %v258 = vld [vmem:[#allocation2 + $0x370] sm:$0xff]
    %v259 = vld [vmem:[#allocation2 + $0x378] sm:$0xff]
    %v260 = vld [vmem:[#allocation2 + $0x380] sm:$0xff]
    %v261 = vld [vmem:[#allocation2 + $0x388] sm:$0xff]
    %v262 = vld [vmem:[#allocation2 + $0x390] sm:$0xff]
    %v263 = vld [vmem:[#allocation2 + $0x398] sm:$0xff]
    %v264 = vld [vmem:[#allocation2 + $0x3a0] sm:$0xff]
    %v265 = vld [vmem:[#allocation2 + $0x3a8] sm:$0xff]
    %v266 = vld [vmem:[#allocation2 + $0x3b0] sm:$0xff]
    %v267 = vld [vmem:[#allocation2 + $0x3b8] sm:$0xff]
    %v268 = vld [vmem:[#allocation2 + $0x3c0] sm:$0xff]
    %v269 = vld [vmem:[#allocation2 + $0x3c8] sm:$0xff]
    %v270 = vld [vmem:[#allocation2 + $0x3d0] sm:$0xff]
    %v271 = vld [vmem:[#allocation2 + $0x3d8] sm:$0xff]
    %v272 = vld [vmem:[#allocation2 + $0x3e0] sm:$0xff]
    %v273 = vld [vmem:[#allocation2 + $0x3e8] sm:$0xff]
    %v274 = vld [vmem:[#allocation2 + $0x3f0] sm:$0xff]
    %v275 = vld [vmem:[#allocation2 + $0x3f8] sm:$0xff]
    %v276 = vld [vmem:[#allocation2 + $0x400] sm:$0xff]
    %v277 = vld [vmem:[#allocation2 + $0x408] sm:$0xff]
    %v278 = vld [vmem:[#allocation2 + $0x410] sm:$0xff]
    %v279 = vld [vmem:[#allocation2 + $0x418] sm:$0xff]
    %v280 = vld [vmem:[#allocation2 + $0x420] sm:$0xff]
    %v281 = vld [vmem:[#allocation2 + $0x428] sm:$0xff]
    %v282 = vld [vmem:[#allocation2 + $0x430] sm:$0xff]
    %v283 = vld [vmem:[#allocation2 + $0x438] sm:$0xff]
    %v284 = vld [vmem:[#allocation2 + $0x440] sm:$0xff]
    %v285 = vld [vmem:[#allocation2 + $0x448] sm:$0xff]
    %v286 = vld [vmem:[#allocation2 + $0x450] sm:$0xff]
    %v287 = vld [vmem:[#allocation2 + $0x458] sm:$0xff]
    %v288 = vld [vmem:[#allocation2 + $0x460] sm:$0xff]
    %v289 = vld [vmem:[#allocation2 + $0x468] sm:$0xff]
    %v290 = vld [vmem:[#allocation2 + $0x470] sm:$0xff]
    %v291 = vld [vmem:[#allocation2 + $0x478] sm:$0xff]
    %v292 = vld [vmem:[#allocation2 + $0x480] sm:$0xff]
    %v293 = vld [vmem:[#allocation2 + $0x488] sm:$0xff]
    %v294 = vld [vmem:[#allocation2 + $0x490] sm:$0xff]
    %v295 = vld [vmem:[#allocation2 + $0x498] sm:$0xff]
    %v296 = vld [vmem:[#allocation2 + $0x4a0] sm:$0xff]
    %v297 = vld [vmem:[#allocation2 + $0x4a8] sm:$0xff]
    %v298 = vld [vmem:[#allocation2 + $0x4b0] sm:$0xff]
    %v299 = vld [vmem:[#allocation2 + $0x4b8] sm:$0xff]
    %v300 = vld [vmem:[#allocation2 + $0x4c0] sm:$0xff]
    %v301 = vld [vmem:[#allocation2 + $0x4c8] sm:$0xff]
    %v302 = vld [vmem:[#allocation2 + $0x4d0] sm:$0xff]
    %v303 = vld [vmem:[#allocation2 + $0x4d8] sm:$0xff]
    %v304 = vld [vmem:[#allocation2 + $0x4e0] sm:$0xff]
    %v305 = vld [vmem:[#allocation2 + $0x4e8] sm:$0xff]
    %v306 = vld [vmem:[#allocation2 + $0x4f0] sm:$0xff]
    %v307 = vld [vmem:[#allocation2 + $0x4f8] sm:$0xff]
    %v308 = vld [vmem:[#allocation2 + $0x500] sm:$0xff]
    %v309 = vld [vmem:[#allocation2 + $0x508] sm:$0xff]
    %v310 = vld [vmem:[#allocation2 + $0x510] sm:$0xff]
    %v311 = vld [vmem:[#allocation2 + $0x518] sm:$0xff]
    %v312 = vld [vmem:[#allocation2 + $0x520] sm:$0xff]
    %v313 = vld [vmem:[#allocation2 + $0x528] sm:$0xff]
    %v314 = vld [vmem:[#allocation2 + $0x530] sm:$0xff]
    %v315 = vld [vmem:[#allocation2 + $0x538] sm:$0xff]
    %v316 = vld [vmem:[#allocation2 + $0x540] sm:$0xff]
    %v317 = vld [vmem:[#allocation2 + $0x548] sm:$0xff]
    %v318 = vld [vmem:[#allocation2 + $0x550] sm:$0xff]
    %v319 = vld [vmem:[#allocation2 + $0x558] sm:$0xff]
    %v320 = vld [vmem:[#allocation2 + $0x560] sm:$0xff]
    %v321 = vld [vmem:[#allocation2 + $0x568] sm:$0xff]
    %v322 = vld [vmem:[#allocation2 + $0x570] sm:$0xff]
    %v323 = vld [vmem:[#allocation2 + $0x578] sm:$0xff]
    %v324 = vld [vmem:[#allocation2 + $0x580] sm:$0xff]
    %v325 = vld [vmem:[#allocation2 + $0x588] sm:$0xff]
    %v326 = vld [vmem:[#allocation2 + $0x590] sm:$0xff]
    %v327 = vld [vmem:[#allocation2 + $0x598] sm:$0xff]
    %v328 = vld [vmem:[#allocation2 + $0x5a0] sm:$0xff]
    %v329 = vld [vmem:[#allocation2 + $0x5a8] sm:$0xff]
    %v330 = vld [vmem:[#allocation2 + $0x5b0] sm:$0xff]
    %v331 = vld [vmem:[#allocation2 + $0x5b8] sm:$0xff]
    %v332 = vld [vmem:[#allocation2 + $0x5c0] sm:$0xff]
    %v333 = vld [vmem:[#allocation2 + $0x5c8] sm:$0xff]
    %v334 = vld [vmem:[#allocation2 + $0x5d0] sm:$0xff]
    %v335 = vld [vmem:[#allocation2 + $0x5d8] sm:$0xff]
    %v336 = vld [vmem:[#allocation2 + $0x5e0] sm:$0xff]
    %v337 = vld [vmem:[#allocation2 + $0x5e8] sm:$0xff]
    %v338 = vld [vmem:[#allocation2 + $0x5f0] sm:$0xff]
    %v339 = vld [vmem:[#allocation2 + $0x5f8] sm:$0xff]
    %v340 = vld [vmem:[#allocation2 + $0x600] sm:$0xff]
    %v341 = vld [vmem:[#allocation2 + $0x608] sm:$0xff]
    %v342 = vld [vmem:[#allocation2 + $0x610] sm:$0xff]
    %v343 = vld [vmem:[#allocation2 + $0x618] sm:$0xff]
    %v344 = vld [vmem:[#allocation2 + $0x620] sm:$0xff]
    %v345 = vld [vmem:[#allocation2 + $0x628] sm:$0xff]
    %v346 = vld [vmem:[#allocation2 + $0x630] sm:$0xff]
    %v347 = vld [vmem:[#allocation2 + $0x638] sm:$0xff]
    %v348 = vld [vmem:[#allocation2 + $0x640] sm:$0xff]
    %v349 = vld [vmem:[#allocation2 + $0x648] sm:$0xff]
    %v350 = vld [vmem:[#allocation2 + $0x650] sm:$0xff]
    %v351 = vld [vmem:[#allocation2 + $0x658] sm:$0xff]
    %v352 = vld [vmem:[#allocation2 + $0x660] sm:$0xff]
    %v353 = vld [vmem:[#allocation2 + $0x668] sm:$0xff]
    %v354 = vld [vmem:[#allocation2 + $0x670] sm:$0xff]
    %v355 = vld [vmem:[#allocation2 + $0x678] sm:$0xff]
    %v356 = vld [vmem:[#allocation2 + $0x680] sm:$0xff]
    %v357 = vld [vmem:[#allocation2 + $0x688] sm:$0xff]
    %v358 = vld [vmem:[#allocation2 + $0x690] sm:$0xff]
    %v359 = vld [vmem:[#allocation2 + $0x698] sm:$0xff]
    %v360 = vld [vmem:[#allocation2 + $0x6a0] sm:$0xff]
    %v361 = vld [vmem:[#allocation2 + $0x6a8] sm:$0xff]
    %v362 = vld [vmem:[#allocation2 + $0x6b0] sm:$0xff]
    %v363 = vld [vmem:[#allocation2 + $0x6b8] sm:$0xff]
    %v364 = vld [vmem:[#allocation2 + $0x6c0] sm:$0xff]
    %v365 = vld [vmem:[#allocation2 + $0x6c8] sm:$0xff]
    %v366 = vld [vmem:[#allocation2 + $0x6d0] sm:$0xff]
    %v367 = vld [vmem:[#allocation2 + $0x6d8] sm:$0xff]
    %v368 = vld [vmem:[#allocation2 + $0x6e0] sm:$0xff]
    %v369 = vld [vmem:[#allocation2 + $0x6e8] sm:$0xff]
    %v370 = vld [vmem:[#allocation2 + $0x6f0] sm:$0xff]
    %v371 = vld [vmem:[#allocation2 + $0x6f8] sm:$0xff]
    %v372 = vld [vmem:[#allocation2 + $0x700] sm:$0xff]
    %v373 = vld [vmem:[#allocation2 + $0x708] sm:$0xff]
    %v374 = vld [vmem:[#allocation2 + $0x710] sm:$0xff]
    %v375 = vld [vmem:[#allocation2 + $0x718] sm:$0xff]
    %v376 = vld [vmem:[#allocation2 + $0x720] sm:$0xff]
    %v377 = vld [vmem:[#allocation2 + $0x728] sm:$0xff]
    %v378 = vld [vmem:[#allocation2 + $0x730] sm:$0xff]
    %v379 = vld [vmem:[#allocation2 + $0x738] sm:$0xff]
    %v380 = vld [vmem:[#allocation2 + $0x740] sm:$0xff]
    %v381 = vld [vmem:[#allocation2 + $0x748] sm:$0xff]
    %v382 = vld [vmem:[#allocation2 + $0x750] sm:$0xff]
    %v383 = vld [vmem:[#allocation2 + $0x758] sm:$0xff]
    %v384 = vld [vmem:[#allocation2 + $0x760] sm:$0xff]
    %v385 = vld [vmem:[#allocation2 + $0x768] sm:$0xff]
    %v386 = vld [vmem:[#allocation2 + $0x770] sm:$0xff]
    %v387 = vld [vmem:[#allocation2 + $0x778] sm:$0xff]
    %v388 = vld [vmem:[#allocation2 + $0x780] sm:$0xff]
    %v389 = vld [vmem:[#allocation2 + $0x788] sm:$0xff]
    %v390 = vld [vmem:[#allocation2 + $0x790] sm:$0xff]
    %v391 = vld [vmem:[#allocation2 + $0x798] sm:$0xff]
    %v392 = vld [vmem:[#allocation2 + $0x7a0] sm:$0xff]
    %v393 = vld [vmem:[#allocation2 + $0x7a8] sm:$0xff]
    %v394 = vld [vmem:[#allocation2 + $0x7b0] sm:$0xff]
    %v395 = vld [vmem:[#allocation2 + $0x7b8] sm:$0xff]
    %v396 = vld [vmem:[#allocation2 + $0x7c0] sm:$0xff]
    %v397 = vld [vmem:[#allocation2 + $0x7c8] sm:$0xff]
    %v398 = vld [vmem:[#allocation2 + $0x7d0] sm:$0xff]
    %v399 = vld [vmem:[#allocation2 + $0x7d8] sm:$0xff]
    %v400 = vld [vmem:[#allocation2 + $0x7e0] sm:$0xff]
    %v401 = vld [vmem:[#allocation2 + $0x7e8] sm:$0xff]
    %v402 = vld [vmem:[#allocation2 + $0x7f0] sm:$0xff]
    %v403 = vld [vmem:[#allocation2 + $0x7f8] sm:$0xff]
    %v404 = vpack.c.bf16 %v156, %v148
    %v405 = vpack.c.bf16 %v157, %v149
    %v406 = vpack.c.bf16 %v158, %v150
    %v407 = vpack.c.bf16 %v159, %v151
    %v408 = vpack.c.bf16 %v160, %v152
    %v409 = vpack.c.bf16 %v161, %v153
    %v410 = vpack.c.bf16 %v162, %v154
    %v411 = vpack.c.bf16 %v163, %v155
    %v412 = vpack.c.bf16 %v172, %v164
    %v413 = vpack.c.bf16 %v173, %v165
    %v414 = vpack.c.bf16 %v174, %v166
    %v415 = vpack.c.bf16 %v175, %v167
    %v416 = vpack.c.bf16 %v176, %v168
    %v417 = vpack.c.bf16 %v177, %v169
    %v418 = vpack.c.bf16 %v178, %v170
    %v419 = vpack.c.bf16 %v179, %v171
    %v420 = vpack.c.bf16 %v188, %v180
    %v421 = vpack.c.bf16 %v189, %v181
    %v422 = vpack.c.bf16 %v190, %v182
    %v423 = vpack.c.bf16 %v191, %v183
    %v424 = vpack.c.bf16 %v192, %v184
    %v425 = vpack.c.bf16 %v193, %v185
    %v426 = vpack.c.bf16 %v194, %v186
    %v427 = vpack.c.bf16 %v195, %v187
    %v428 = vpack.c.bf16 %v204, %v196
    %v429 = vpack.c.bf16 %v205, %v197
    %v430 = vpack.c.bf16 %v206, %v198
    %v431 = vpack.c.bf16 %v207, %v199
    %v432 = vpack.c.bf16 %v208, %v200
    %v433 = vpack.c.bf16 %v209, %v201
    %v434 = vpack.c.bf16 %v210, %v202
    %v435 = vpack.c.bf16 %v211, %v203
    %v436 = vpack.c.bf16 %v220, %v212
    %v437 = vpack.c.bf16 %v221, %v213
    %v438 = vpack.c.bf16 %v222, %v214
    %v439 = vpack.c.bf16 %v223, %v215
    %v440 = vpack.c.bf16 %v224, %v216
    %v441 = vpack.c.bf16 %v225, %v217
    %v442 = vpack.c.bf16 %v226, %v218
    %v443 = vpack.c.bf16 %v227, %v219
    %v444 = vpack.c.bf16 %v236, %v228
    %v445 = vpack.c.bf16 %v237, %v229
    %v446 = vpack.c.bf16 %v238, %v230
    %v447 = vpack.c.bf16 %v239, %v231
    %v448 = vpack.c.bf16 %v240, %v232
    %v449 = vpack.c.bf16 %v241, %v233
    %v450 = vpack.c.bf16 %v242, %v234
    %v451 = vpack.c.bf16 %v243, %v235
    %v452 = vpack.c.bf16 %v252, %v244
    %v453 = vpack.c.bf16 %v253, %v245
    %v454 = vpack.c.bf16 %v254, %v246
    %v455 = vpack.c.bf16 %v255, %v247
    %v456 = vpack.c.bf16 %v256, %v248
    %v457 = vpack.c.bf16 %v257, %v249
    %v458 = vpack.c.bf16 %v258, %v250
    %v459 = vpack.c.bf16 %v259, %v251
    %v460 = vpack.c.bf16 %v268, %v260
    %v461 = vpack.c.bf16 %v269, %v261
    %v462 = vpack.c.bf16 %v270, %v262
    %v463 = vpack.c.bf16 %v271, %v263
    %v464 = vpack.c.bf16 %v272, %v264
    %v465 = vpack.c.bf16 %v273, %v265
    %v466 = vpack.c.bf16 %v274, %v266
    %v467 = vpack.c.bf16 %v275, %v267
    %v468 = vpack.c.bf16 %v284, %v276
    %v469 = vpack.c.bf16 %v285, %v277
    %v470 = vpack.c.bf16 %v286, %v278
    %v471 = vpack.c.bf16 %v287, %v279
    %v472 = vpack.c.bf16 %v288, %v280
    %v473 = vpack.c.bf16 %v289, %v281
    %v474 = vpack.c.bf16 %v290, %v282
    %v475 = vpack.c.bf16 %v291, %v283
    %v476 = vpack.c.bf16 %v300, %v292
    %v477 = vpack.c.bf16 %v301, %v293
    %v478 = vpack.c.bf16 %v302, %v294
    %v479 = vpack.c.bf16 %v303, %v295
    %v480 = vpack.c.bf16 %v304, %v296
    %v481 = vpack.c.bf16 %v305, %v297
    %v482 = vpack.c.bf16 %v306, %v298
    %v483 = vpack.c.bf16 %v307, %v299
    %v484 = vpack.c.bf16 %v316, %v308
    %v485 = vpack.c.bf16 %v317, %v309
    %v486 = vpack.c.bf16 %v318, %v310
    %v487 = vpack.c.bf16 %v319, %v311
    %v488 = vpack.c.bf16 %v320, %v312
    %v489 = vpack.c.bf16 %v321, %v313
    %v490 = vpack.c.bf16 %v322, %v314
    %v491 = vpack.c.bf16 %v323, %v315
    %v492 = vpack.c.bf16 %v332, %v324
    %v493 = vpack.c.bf16 %v333, %v325
    %v494 = vpack.c.bf16 %v334, %v326
    %v495 = vpack.c.bf16 %v335, %v327
    %v496 = vpack.c.bf16 %v336, %v328
    %v497 = vpack.c.bf16 %v337, %v329
    %v498 = vpack.c.bf16 %v338, %v330
    %v499 = vpack.c.bf16 %v339, %v331
    %v500 = vpack.c.bf16 %v348, %v340
    %v501 = vpack.c.bf16 %v349, %v341
    %v502 = vpack.c.bf16 %v350, %v342
    %v503 = vpack.c.bf16 %v351, %v343
    %v504 = vpack.c.bf16 %v352, %v344
    %v505 = vpack.c.bf16 %v353, %v345
    %v506 = vpack.c.bf16 %v354, %v346
    %v507 = vpack.c.bf16 %v355, %v347
    %v508 = vpack.c.bf16 %v364, %v356
    %v509 = vpack.c.bf16 %v365, %v357
    %v510 = vpack.c.bf16 %v366, %v358
    %v511 = vpack.c.bf16 %v367, %v359
    %v512 = vpack.c.bf16 %v368, %v360
    %v513 = vpack.c.bf16 %v369, %v361
    %v514 = vpack.c.bf16 %v370, %v362
    %v515 = vpack.c.bf16 %v371, %v363
    %v516 = vpack.c.bf16 %v380, %v372
    %v517 = vpack.c.bf16 %v381, %v373
    %v518 = vpack.c.bf16 %v382, %v374
    %v519 = vpack.c.bf16 %v383, %v375
    %v520 = vpack.c.bf16 %v384, %v376
    %v521 = vpack.c.bf16 %v385, %v377
    %v522 = vpack.c.bf16 %v386, %v378
    %v523 = vpack.c.bf16 %v387, %v379
    %v524 = vpack.c.bf16 %v396, %v388
    %v525 = vpack.c.bf16 %v397, %v389
    %v526 = vpack.c.bf16 %v398, %v390
    %v527 = vpack.c.bf16 %v399, %v391
    %v528 = vpack.c.bf16 %v400, %v392
    %v529 = vpack.c.bf16 %v401, %v393
    %v530 = vpack.c.bf16 %v402, %v394
    %v531 = vpack.c.bf16 %v403, %v395
    %v532 = vld [vmem:[#allocation5] sm:$0xff]
    %v533 = vld [vmem:[#allocation5 + $0x8] sm:$0xff]
    %v534 = vld [vmem:[#allocation5 + $0x10] sm:$0xff]
    %v535 = vld [vmem:[#allocation5 + $0x18] sm:$0xff]
    %v536 = vld [vmem:[#allocation5 + $0x20] sm:$0xff]
    %v537 = vld [vmem:[#allocation5 + $0x28] sm:$0xff]
    %v538 = vld [vmem:[#allocation5 + $0x30] sm:$0xff]
    %v539 = vld [vmem:[#allocation5 + $0x38] sm:$0xff]
    %v540 = vld [vmem:[#allocation5 + $0x40] sm:$0xff]
    %v541 = vld [vmem:[#allocation5 + $0x48] sm:$0xff]
    %v542 = vld [vmem:[#allocation5 + $0x50] sm:$0xff]
    %v543 = vld [vmem:[#allocation5 + $0x58] sm:$0xff]
    %v544 = vld [vmem:[#allocation5 + $0x60] sm:$0xff]
    %v545 = vld [vmem:[#allocation5 + $0x68] sm:$0xff]
    %v546 = vld [vmem:[#allocation5 + $0x70] sm:$0xff]
    %v547 = vld [vmem:[#allocation5 + $0x78] sm:$0xff]
    %v548 = vld [vmem:[#allocation5 + $0x80] sm:$0xff]
    %v549 = vld [vmem:[#allocation5 + $0x88] sm:$0xff]
    %v550 = vld [vmem:[#allocation5 + $0x90] sm:$0xff]
    %v551 = vld [vmem:[#allocation5 + $0x98] sm:$0xff]
    %v552 = vld [vmem:[#allocation5 + $0xa0] sm:$0xff]
    %v553 = vld [vmem:[#allocation5 + $0xa8] sm:$0xff]
    %v554 = vld [vmem:[#allocation5 + $0xb0] sm:$0xff]
    %v555 = vld [vmem:[#allocation5 + $0xb8] sm:$0xff]
    %v556 = vld [vmem:[#allocation5 + $0xc0] sm:$0xff]
    %v557 = vld [vmem:[#allocation5 + $0xc8] sm:$0xff]
    %v558 = vld [vmem:[#allocation5 + $0xd0] sm:$0xff]
    %v559 = vld [vmem:[#allocation5 + $0xd8] sm:$0xff]
    %v560 = vld [vmem:[#allocation5 + $0xe0] sm:$0xff]
    %v561 = vld [vmem:[#allocation5 + $0xe8] sm:$0xff]
    %v562 = vld [vmem:[#allocation5 + $0xf0] sm:$0xff]
    %v563 = vld [vmem:[#allocation5 + $0xf8] sm:$0xff]
    %v564 = vld [vmem:[#allocation5 + $0x100] sm:$0xff]
    %v565 = vld [vmem:[#allocation5 + $0x108] sm:$0xff]
    %v566 = vld [vmem:[#allocation5 + $0x110] sm:$0xff]
    %v567 = vld [vmem:[#allocation5 + $0x118] sm:$0xff]
    %v568 = vld [vmem:[#allocation5 + $0x120] sm:$0xff]
    %v569 = vld [vmem:[#allocation5 + $0x128] sm:$0xff]
    %v570 = vld [vmem:[#allocation5 + $0x130] sm:$0xff]
    %v571 = vld [vmem:[#allocation5 + $0x138] sm:$0xff]
    %v572 = vld [vmem:[#allocation5 + $0x140] sm:$0xff]
    %v573 = vld [vmem:[#allocation5 + $0x148] sm:$0xff]
    %v574 = vld [vmem:[#allocation5 + $0x150] sm:$0xff]
    %v575 = vld [vmem:[#allocation5 + $0x158] sm:$0xff]
    %v576 = vld [vmem:[#allocation5 + $0x160] sm:$0xff]
    %v577 = vld [vmem:[#allocation5 + $0x168] sm:$0xff]
    %v578 = vld [vmem:[#allocation5 + $0x170] sm:$0xff]
    %v579 = vld [vmem:[#allocation5 + $0x178] sm:$0xff]
    %v580 = vld [vmem:[#allocation5 + $0x180] sm:$0xff]
    %v581 = vld [vmem:[#allocation5 + $0x188] sm:$0xff]
    %v582 = vld [vmem:[#allocation5 + $0x190] sm:$0xff]
    %v583 = vld [vmem:[#allocation5 + $0x198] sm:$0xff]
    %v584 = vld [vmem:[#allocation5 + $0x1a0] sm:$0xff]
    %v585 = vld [vmem:[#allocation5 + $0x1a8] sm:$0xff]
    %v586 = vld [vmem:[#allocation5 + $0x1b0] sm:$0xff]
    %v587 = vld [vmem:[#allocation5 + $0x1b8] sm:$0xff]
    %v588 = vld [vmem:[#allocation5 + $0x1c0] sm:$0xff]
    %v589 = vld [vmem:[#allocation5 + $0x1c8] sm:$0xff]
    %v590 = vld [vmem:[#allocation5 + $0x1d0] sm:$0xff]
    %v591 = vld [vmem:[#allocation5 + $0x1d8] sm:$0xff]
    %v592 = vld [vmem:[#allocation5 + $0x1e0] sm:$0xff]
    %v593 = vld [vmem:[#allocation5 + $0x1e8] sm:$0xff]
    %v594 = vld [vmem:[#allocation5 + $0x1f0] sm:$0xff]
    %v595 = vld [vmem:[#allocation5 + $0x1f8] sm:$0xff]
    %v596 = vld [vmem:[#allocation5 + $0x200] sm:$0xff]
    %v597 = vld [vmem:[#allocation5 + $0x208] sm:$0xff]
    %v598 = vld [vmem:[#allocation5 + $0x210] sm:$0xff]
    %v599 = vld [vmem:[#allocation5 + $0x218] sm:$0xff]
    %v600 = vld [vmem:[#allocation5 + $0x220] sm:$0xff]
    %v601 = vld [vmem:[#allocation5 + $0x228] sm:$0xff]
    %v602 = vld [vmem:[#allocation5 + $0x230] sm:$0xff]
    %v603 = vld [vmem:[#allocation5 + $0x238] sm:$0xff]
    %v604 = vld [vmem:[#allocation5 + $0x240] sm:$0xff]
    %v605 = vld [vmem:[#allocation5 + $0x248] sm:$0xff]
    %v606 = vld [vmem:[#allocation5 + $0x250] sm:$0xff]
    %v607 = vld [vmem:[#allocation5 + $0x258] sm:$0xff]
    %v608 = vld [vmem:[#allocation5 + $0x260] sm:$0xff]
    %v609 = vld [vmem:[#allocation5 + $0x268] sm:$0xff]
    %v610 = vld [vmem:[#allocation5 + $0x270] sm:$0xff]
    %v611 = vld [vmem:[#allocation5 + $0x278] sm:$0xff]
    %v612 = vld [vmem:[#allocation5 + $0x280] sm:$0xff]
    %v613 = vld [vmem:[#allocation5 + $0x288] sm:$0xff]
    %v614 = vld [vmem:[#allocation5 + $0x290] sm:$0xff]
    %v615 = vld [vmem:[#allocation5 + $0x298] sm:$0xff]
    %v616 = vld [vmem:[#allocation5 + $0x2a0] sm:$0xff]
    %v617 = vld [vmem:[#allocation5 + $0x2a8] sm:$0xff]
    %v618 = vld [vmem:[#allocation5 + $0x2b0] sm:$0xff]
    %v619 = vld [vmem:[#allocation5 + $0x2b8] sm:$0xff]
    %v620 = vld [vmem:[#allocation5 + $0x2c0] sm:$0xff]
    %v621 = vld [vmem:[#allocation5 + $0x2c8] sm:$0xff]
    %v622 = vld [vmem:[#allocation5 + $0x2d0] sm:$0xff]
    %v623 = vld [vmem:[#allocation5 + $0x2d8] sm:$0xff]
    %v624 = vld [vmem:[#allocation5 + $0x2e0] sm:$0xff]
    %v625 = vld [vmem:[#allocation5 + $0x2e8] sm:$0xff]
    %v626 = vld [vmem:[#allocation5 + $0x2f0] sm:$0xff]
    %v627 = vld [vmem:[#allocation5 + $0x2f8] sm:$0xff]
    %v628 = vld [vmem:[#allocation5 + $0x300] sm:$0xff]
    %v629 = vld [vmem:[#allocation5 + $0x308] sm:$0xff]
    %v630 = vld [vmem:[#allocation5 + $0x310] sm:$0xff]
    %v631 = vld [vmem:[#allocation5 + $0x318] sm:$0xff]
    %v632 = vld [vmem:[#allocation5 + $0x320] sm:$0xff]
    %v633 = vld [vmem:[#allocation5 + $0x328] sm:$0xff]
    %v634 = vld [vmem:[#allocation5 + $0x330] sm:$0xff]
    %v635 = vld [vmem:[#allocation5 + $0x338] sm:$0xff]
    %v636 = vld [vmem:[#allocation5 + $0x340] sm:$0xff]
    %v637 = vld [vmem:[#allocation5 + $0x348] sm:$0xff]
    %v638 = vld [vmem:[#allocation5 + $0x350] sm:$0xff]
    %v639 = vld [vmem:[#allocation5 + $0x358] sm:$0xff]
    %v640 = vld [vmem:[#allocation5 + $0x360] sm:$0xff]
    %v641 = vld [vmem:[#allocation5 + $0x368] sm:$0xff]
    %v642 = vld [vmem:[#allocation5 + $0x370] sm:$0xff]
    %v643 = vld [vmem:[#allocation5 + $0x378] sm:$0xff]
    %v644 = vld [vmem:[#allocation5 + $0x380] sm:$0xff]
    %v645 = vld [vmem:[#allocation5 + $0x388] sm:$0xff]
    %v646 = vld [vmem:[#allocation5 + $0x390] sm:$0xff]
    %v647 = vld [vmem:[#allocation5 + $0x398] sm:$0xff]
    %v648 = vld [vmem:[#allocation5 + $0x3a0] sm:$0xff]
    %v649 = vld [vmem:[#allocation5 + $0x3a8] sm:$0xff]
    %v650 = vld [vmem:[#allocation5 + $0x3b0] sm:$0xff]
    %v651 = vld [vmem:[#allocation5 + $0x3b8] sm:$0xff]
    %v652 = vld [vmem:[#allocation5 + $0x3c0] sm:$0xff]
    %v653 = vld [vmem:[#allocation5 + $0x3c8] sm:$0xff]
    %v654 = vld [vmem:[#allocation5 + $0x3d0] sm:$0xff]
    %v655 = vld [vmem:[#allocation5 + $0x3d8] sm:$0xff]
    %v656 = vld [vmem:[#allocation5 + $0x3e0] sm:$0xff]
    %v657 = vld [vmem:[#allocation5 + $0x3e8] sm:$0xff]
    %v658 = vld [vmem:[#allocation5 + $0x3f0] sm:$0xff]
    %v659 = vld [vmem:[#allocation5 + $0x3f8] sm:$0xff]
    %v660 = vld [vmem:[#allocation5 + $0x400] sm:$0xff]
    %v661 = vld [vmem:[#allocation5 + $0x408] sm:$0xff]
    %v662 = vld [vmem:[#allocation5 + $0x410] sm:$0xff]
    %v663 = vld [vmem:[#allocation5 + $0x418] sm:$0xff]
    %v664 = vld [vmem:[#allocation5 + $0x420] sm:$0xff]
    %v665 = vld [vmem:[#allocation5 + $0x428] sm:$0xff]
    %v666 = vld [vmem:[#allocation5 + $0x430] sm:$0xff]
    %v667 = vld [vmem:[#allocation5 + $0x438] sm:$0xff]
    %v668 = vld [vmem:[#allocation5 + $0x440] sm:$0xff]
    %v669 = vld [vmem:[#allocation5 + $0x448] sm:$0xff]
    %v670 = vld [vmem:[#allocation5 + $0x450] sm:$0xff]
    %v671 = vld [vmem:[#allocation5 + $0x458] sm:$0xff]
    %v672 = vld [vmem:[#allocation5 + $0x460] sm:$0xff]
    %v673 = vld [vmem:[#allocation5 + $0x468] sm:$0xff]
    %v674 = vld [vmem:[#allocation5 + $0x470] sm:$0xff]
    %v675 = vld [vmem:[#allocation5 + $0x478] sm:$0xff]
    %v676 = vld [vmem:[#allocation5 + $0x480] sm:$0xff]
    %v677 = vld [vmem:[#allocation5 + $0x488] sm:$0xff]
    %v678 = vld [vmem:[#allocation5 + $0x490] sm:$0xff]
    %v679 = vld [vmem:[#allocation5 + $0x498] sm:$0xff]
    %v680 = vld [vmem:[#allocation5 + $0x4a0] sm:$0xff]
    %v681 = vld [vmem:[#allocation5 + $0x4a8] sm:$0xff]
    %v682 = vld [vmem:[#allocation5 + $0x4b0] sm:$0xff]
    %v683 = vld [vmem:[#allocation5 + $0x4b8] sm:$0xff]
    %v684 = vld [vmem:[#allocation5 + $0x4c0] sm:$0xff]
    %v685 = vld [vmem:[#allocation5 + $0x4c8] sm:$0xff]
    %v686 = vld [vmem:[#allocation5 + $0x4d0] sm:$0xff]
    %v687 = vld [vmem:[#allocation5 + $0x4d8] sm:$0xff]
    %v688 = vld [vmem:[#allocation5 + $0x4e0] sm:$0xff]
    %v689 = vld [vmem:[#allocation5 + $0x4e8] sm:$0xff]
    %v690 = vld [vmem:[#allocation5 + $0x4f0] sm:$0xff]
    %v691 = vld [vmem:[#allocation5 + $0x4f8] sm:$0xff]
    %v692 = vld [vmem:[#allocation5 + $0x500] sm:$0xff]
    %v693 = vld [vmem:[#allocation5 + $0x508] sm:$0xff]
    %v694 = vld [vmem:[#allocation5 + $0x510] sm:$0xff]
    %v695 = vld [vmem:[#allocation5 + $0x518] sm:$0xff]
    %v696 = vld [vmem:[#allocation5 + $0x520] sm:$0xff]
    %v697 = vld [vmem:[#allocation5 + $0x528] sm:$0xff]
    %v698 = vld [vmem:[#allocation5 + $0x530] sm:$0xff]
    %v699 = vld [vmem:[#allocation5 + $0x538] sm:$0xff]
    %v700 = vld [vmem:[#allocation5 + $0x540] sm:$0xff]
    %v701 = vld [vmem:[#allocation5 + $0x548] sm:$0xff]
    %v702 = vld [vmem:[#allocation5 + $0x550] sm:$0xff]
    %v703 = vld [vmem:[#allocation5 + $0x558] sm:$0xff]
    %v704 = vld [vmem:[#allocation5 + $0x560] sm:$0xff]
    %v705 = vld [vmem:[#allocation5 + $0x568] sm:$0xff]
    %v706 = vld [vmem:[#allocation5 + $0x570] sm:$0xff]
    %v707 = vld [vmem:[#allocation5 + $0x578] sm:$0xff]
    %v708 = vld [vmem:[#allocation5 + $0x580] sm:$0xff]
    %v709 = vld [vmem:[#allocation5 + $0x588] sm:$0xff]
    %v710 = vld [vmem:[#allocation5 + $0x590] sm:$0xff]
    %v711 = vld [vmem:[#allocation5 + $0x598] sm:$0xff]
    %v712 = vld [vmem:[#allocation5 + $0x5a0] sm:$0xff]
    %v713 = vld [vmem:[#allocation5 + $0x5a8] sm:$0xff]
    %v714 = vld [vmem:[#allocation5 + $0x5b0] sm:$0xff]
    %v715 = vld [vmem:[#allocation5 + $0x5b8] sm:$0xff]
    %v716 = vld [vmem:[#allocation5 + $0x5c0] sm:$0xff]
    %v717 = vld [vmem:[#allocation5 + $0x5c8] sm:$0xff]
    %v718 = vld [vmem:[#allocation5 + $0x5d0] sm:$0xff]
    %v719 = vld [vmem:[#allocation5 + $0x5d8] sm:$0xff]
    %v720 = vld [vmem:[#allocation5 + $0x5e0] sm:$0xff]
    %v721 = vld [vmem:[#allocation5 + $0x5e8] sm:$0xff]
    %v722 = vld [vmem:[#allocation5 + $0x5f0] sm:$0xff]
    %v723 = vld [vmem:[#allocation5 + $0x5f8] sm:$0xff]
    %v724 = vld [vmem:[#allocation5 + $0x600] sm:$0xff]
    %v725 = vld [vmem:[#allocation5 + $0x608] sm:$0xff]
    %v726 = vld [vmem:[#allocation5 + $0x610] sm:$0xff]
    %v727 = vld [vmem:[#allocation5 + $0x618] sm:$0xff]
    %v728 = vld [vmem:[#allocation5 + $0x620] sm:$0xff]
    %v729 = vld [vmem:[#allocation5 + $0x628] sm:$0xff]
    %v730 = vld [vmem:[#allocation5 + $0x630] sm:$0xff]
    %v731 = vld [vmem:[#allocation5 + $0x638] sm:$0xff]
    %v732 = vld [vmem:[#allocation5 + $0x640] sm:$0xff]
    %v733 = vld [vmem:[#allocation5 + $0x648] sm:$0xff]
    %v734 = vld [vmem:[#allocation5 + $0x650] sm:$0xff]
    %v735 = vld [vmem:[#allocation5 + $0x658] sm:$0xff]
    %v736 = vld [vmem:[#allocation5 + $0x660] sm:$0xff]
    %v737 = vld [vmem:[#allocation5 + $0x668] sm:$0xff]
    %v738 = vld [vmem:[#allocation5 + $0x670] sm:$0xff]
    %v739 = vld [vmem:[#allocation5 + $0x678] sm:$0xff]
    %v740 = vld [vmem:[#allocation5 + $0x680] sm:$0xff]
    %v741 = vld [vmem:[#allocation5 + $0x688] sm:$0xff]
    %v742 = vld [vmem:[#allocation5 + $0x690] sm:$0xff]
    %v743 = vld [vmem:[#allocation5 + $0x698] sm:$0xff]
    %v744 = vld [vmem:[#allocation5 + $0x6a0] sm:$0xff]
    %v745 = vld [vmem:[#allocation5 + $0x6a8] sm:$0xff]
    %v746 = vld [vmem:[#allocation5 + $0x6b0] sm:$0xff]
    %v747 = vld [vmem:[#allocation5 + $0x6b8] sm:$0xff]
    %v748 = vld [vmem:[#allocation5 + $0x6c0] sm:$0xff]
    %v749 = vld [vmem:[#allocation5 + $0x6c8] sm:$0xff]
    %v750 = vld [vmem:[#allocation5 + $0x6d0] sm:$0xff]
    %v751 = vld [vmem:[#allocation5 + $0x6d8] sm:$0xff]
    %v752 = vld [vmem:[#allocation5 + $0x6e0] sm:$0xff]
    %v753 = vld [vmem:[#allocation5 + $0x6e8] sm:$0xff]
    %v754 = vld [vmem:[#allocation5 + $0x6f0] sm:$0xff]
    %v755 = vld [vmem:[#allocation5 + $0x6f8] sm:$0xff]
    %v756 = vld [vmem:[#allocation5 + $0x700] sm:$0xff]
    %v757 = vld [vmem:[#allocation5 + $0x708] sm:$0xff]
    %v758 = vld [vmem:[#allocation5 + $0x710] sm:$0xff]
    %v759 = vld [vmem:[#allocation5 + $0x718] sm:$0xff]
    %v760 = vld [vmem:[#allocation5 + $0x720] sm:$0xff]
    %v761 = vld [vmem:[#allocation5 + $0x728] sm:$0xff]
    %v762 = vld [vmem:[#allocation5 + $0x730] sm:$0xff]
    %v763 = vld [vmem:[#allocation5 + $0x738] sm:$0xff]
    %v764 = vld [vmem:[#allocation5 + $0x740] sm:$0xff]
    %v765 = vld [vmem:[#allocation5 + $0x748] sm:$0xff]
    %v766 = vld [vmem:[#allocation5 + $0x750] sm:$0xff]
    %v767 = vld [vmem:[#allocation5 + $0x758] sm:$0xff]
    %v768 = vld [vmem:[#allocation5 + $0x760] sm:$0xff]
    %v769 = vld [vmem:[#allocation5 + $0x768] sm:$0xff]
    %v770 = vld [vmem:[#allocation5 + $0x770] sm:$0xff]
    %v771 = vld [vmem:[#allocation5 + $0x778] sm:$0xff]
    %v772 = vld [vmem:[#allocation5 + $0x780] sm:$0xff]
    %v773 = vld [vmem:[#allocation5 + $0x788] sm:$0xff]
    %v774 = vld [vmem:[#allocation5 + $0x790] sm:$0xff]
    %v775 = vld [vmem:[#allocation5 + $0x798] sm:$0xff]
    %v776 = vld [vmem:[#allocation5 + $0x7a0] sm:$0xff]
    %v777 = vld [vmem:[#allocation5 + $0x7a8] sm:$0xff]
    %v778 = vld [vmem:[#allocation5 + $0x7b0] sm:$0xff]
    %v779 = vld [vmem:[#allocation5 + $0x7b8] sm:$0xff]
    %v780 = vld [vmem:[#allocation5 + $0x7c0] sm:$0xff]
    %v781 = vld [vmem:[#allocation5 + $0x7c8] sm:$0xff]
    %v782 = vld [vmem:[#allocation5 + $0x7d0] sm:$0xff]
    %v783 = vld [vmem:[#allocation5 + $0x7d8] sm:$0xff]
    %v784 = vld [vmem:[#allocation5 + $0x7e0] sm:$0xff]
    %v785 = vld [vmem:[#allocation5 + $0x7e8] sm:$0xff]
    %v786 = vld [vmem:[#allocation5 + $0x7f0] sm:$0xff]
    %v787 = vld [vmem:[#allocation5 + $0x7f8] sm:$0xff]
    %v788 = vld [vmem:[#allocation7] sm:$0xf]
    %v790 = vlaneseq
    %v791 = vshrl.u32 %v790, 7
    %v792 = vsub.s32 0, %v791
    %v793 = vrot.slane %v788, %v792
    %v794 = vlaneseq
    %v795 = vshrl.u32 %v794, 7
    %v796 = vsub.s32 1, %v795
    %v797 = vrot.slane %v788, %v796
    %v798 = vlaneseq
    %v799 = vshrl.u32 %v798, 7
    %v800 = vsub.s32 2, %v799
    %v801 = vrot.slane %v788, %v800
    %v802 = vlaneseq
    %v803 = vshrl.u32 %v802, 7
    %v804 = vsub.s32 3, %v803
    %v805 = vrot.slane %v788, %v804
    %v1066 = vunpack.c.l.b16 %v532
    %v1067 = vunpack.c.h.b16 %v532
    %v1068 = vunpack.c.l.b16 %v533
    %v1069 = vunpack.c.h.b16 %v533
    %v1070 = vunpack.c.l.b16 %v534
    %v1071 = vunpack.c.h.b16 %v534
    %v1072 = vunpack.c.l.b16 %v535
    %v1073 = vunpack.c.h.b16 %v535
    %v1074 = vunpack.c.l.b16 %v536
    %v1075 = vunpack.c.h.b16 %v536
    %v1076 = vunpack.c.l.b16 %v537
    %v1077 = vunpack.c.h.b16 %v537
    %v1078 = vunpack.c.l.b16 %v538
    %v1079 = vunpack.c.h.b16 %v538
    %v1080 = vunpack.c.l.b16 %v539
    %v1081 = vunpack.c.h.b16 %v539
    %v1082 = vunpack.c.l.b16 %v540
    %v1083 = vunpack.c.h.b16 %v540
    %v1084 = vunpack.c.l.b16 %v541
    %v1085 = vunpack.c.h.b16 %v541
    %v1086 = vunpack.c.l.b16 %v542
    %v1087 = vunpack.c.h.b16 %v542
    %v1088 = vunpack.c.l.b16 %v543
    %v1089 = vunpack.c.h.b16 %v543
    %v1090 = vunpack.c.l.b16 %v544
    %v1091 = vunpack.c.h.b16 %v544
    %v1092 = vunpack.c.l.b16 %v545
    %v1093 = vunpack.c.h.b16 %v545
    %v1094 = vunpack.c.l.b16 %v546
    %v1095 = vunpack.c.h.b16 %v546
    %v1096 = vunpack.c.l.b16 %v547
    %v1097 = vunpack.c.h.b16 %v547
    %v1098 = vunpack.c.l.b16 %v548
    %v1099 = vunpack.c.h.b16 %v548
    %v1100 = vunpack.c.l.b16 %v549
    %v1101 = vunpack.c.h.b16 %v549
    %v1102 = vunpack.c.l.b16 %v550
    %v1103 = vunpack.c.h.b16 %v550
    %v1104 = vunpack.c.l.b16 %v551
    %v1105 = vunpack.c.h.b16 %v551
    %v1106 = vunpack.c.l.b16 %v552
    %v1107 = vunpack.c.h.b16 %v552
    %v1108 = vunpack.c.l.b16 %v553
    %v1109 = vunpack.c.h.b16 %v553
    %v1110 = vunpack.c.l.b16 %v554
    %v1111 = vunpack.c.h.b16 %v554
    %v1112 = vunpack.c.l.b16 %v555
    %v1113 = vunpack.c.h.b16 %v555
    %v1114 = vunpack.c.l.b16 %v556
    %v1115 = vunpack.c.h.b16 %v556
    %v1116 = vunpack.c.l.b16 %v557
    %v1117 = vunpack.c.h.b16 %v557
    %v1118 = vunpack.c.l.b16 %v558
    %v1119 = vunpack.c.h.b16 %v558
    %v1120 = vunpack.c.l.b16 %v559
    %v1121 = vunpack.c.h.b16 %v559
    %v1122 = vunpack.c.l.b16 %v560
    %v1123 = vunpack.c.h.b16 %v560
    %v1124 = vunpack.c.l.b16 %v561
    %v1125 = vunpack.c.h.b16 %v561
    %v1126 = vunpack.c.l.b16 %v562
    %v1127 = vunpack.c.h.b16 %v562
    %v1128 = vunpack.c.l.b16 %v563
    %v1129 = vunpack.c.h.b16 %v563
    %v1130 = vunpack.c.l.b16 %v564
    %v1131 = vunpack.c.h.b16 %v564
    %v1132 = vunpack.c.l.b16 %v565
    %v1133 = vunpack.c.h.b16 %v565
    %v1134 = vunpack.c.l.b16 %v566
    %v1135 = vunpack.c.h.b16 %v566
    %v1136 = vunpack.c.l.b16 %v567
    %v1137 = vunpack.c.h.b16 %v567
    %v1138 = vunpack.c.l.b16 %v568
    %v1139 = vunpack.c.h.b16 %v568
    %v1140 = vunpack.c.l.b16 %v569
    %v1141 = vunpack.c.h.b16 %v569
    %v1142 = vunpack.c.l.b16 %v570
    %v1143 = vunpack.c.h.b16 %v570
    %v1144 = vunpack.c.l.b16 %v571
    %v1145 = vunpack.c.h.b16 %v571
    %v1146 = vunpack.c.l.b16 %v572
    %v1147 = vunpack.c.h.b16 %v572
    %v1148 = vunpack.c.l.b16 %v573
    %v1149 = vunpack.c.h.b16 %v573
    %v1150 = vunpack.c.l.b16 %v574
    %v1151 = vunpack.c.h.b16 %v574
    %v1152 = vunpack.c.l.b16 %v575
    %v1153 = vunpack.c.h.b16 %v575
    %v1154 = vunpack.c.l.b16 %v576
    %v1155 = vunpack.c.h.b16 %v576
    %v1156 = vunpack.c.l.b16 %v577
    %v1157 = vunpack.c.h.b16 %v577
    %v1158 = vunpack.c.l.b16 %v578
    %v1159 = vunpack.c.h.b16 %v578
    %v1160 = vunpack.c.l.b16 %v579
    %v1161 = vunpack.c.h.b16 %v579
    %v1162 = vunpack.c.l.b16 %v580
    %v1163 = vunpack.c.h.b16 %v580
    %v1164 = vunpack.c.l.b16 %v581
    %v1165 = vunpack.c.h.b16 %v581
    %v1166 = vunpack.c.l.b16 %v582
    %v1167 = vunpack.c.h.b16 %v582
    %v1168 = vunpack.c.l.b16 %v583
    %v1169 = vunpack.c.h.b16 %v583
    %v1170 = vunpack.c.l.b16 %v584
    %v1171 = vunpack.c.h.b16 %v584
    %v1172 = vunpack.c.l.b16 %v585
    %v1173 = vunpack.c.h.b16 %v585
    %v1174 = vunpack.c.l.b16 %v586
    %v1175 = vunpack.c.h.b16 %v586
    %v1176 = vunpack.c.l.b16 %v587
    %v1177 = vunpack.c.h.b16 %v587
    %v1178 = vunpack.c.l.b16 %v588
    %v1179 = vunpack.c.h.b16 %v588
    %v1180 = vunpack.c.l.b16 %v589
    %v1181 = vunpack.c.h.b16 %v589
    %v1182 = vunpack.c.l.b16 %v590
    %v1183 = vunpack.c.h.b16 %v590
    %v1184 = vunpack.c.l.b16 %v591
    %v1185 = vunpack.c.h.b16 %v591
    %v1186 = vunpack.c.l.b16 %v592
    %v1187 = vunpack.c.h.b16 %v592
    %v1188 = vunpack.c.l.b16 %v593
    %v1189 = vunpack.c.h.b16 %v593
    %v1190 = vunpack.c.l.b16 %v594
    %v1191 = vunpack.c.h.b16 %v594
    %v1192 = vunpack.c.l.b16 %v595
    %v1193 = vunpack.c.h.b16 %v595
    %v1194 = vunpack.c.l.b16 %v596
    %v1195 = vunpack.c.h.b16 %v596
    %v1196 = vunpack.c.l.b16 %v597
    %v1197 = vunpack.c.h.b16 %v597
    %v1198 = vunpack.c.l.b16 %v598
    %v1199 = vunpack.c.h.b16 %v598
    %v1200 = vunpack.c.l.b16 %v599
    %v1201 = vunpack.c.h.b16 %v599
    %v1202 = vunpack.c.l.b16 %v600
    %v1203 = vunpack.c.h.b16 %v600
    %v1204 = vunpack.c.l.b16 %v601
    %v1205 = vunpack.c.h.b16 %v601
    %v1206 = vunpack.c.l.b16 %v602
    %v1207 = vunpack.c.h.b16 %v602
    %v1208 = vunpack.c.l.b16 %v603
    %v1209 = vunpack.c.h.b16 %v603
    %v1210 = vunpack.c.l.b16 %v604
    %v1211 = vunpack.c.h.b16 %v604
    %v1212 = vunpack.c.l.b16 %v605
    %v1213 = vunpack.c.h.b16 %v605
    %v1214 = vunpack.c.l.b16 %v606
    %v1215 = vunpack.c.h.b16 %v606
    %v1216 = vunpack.c.l.b16 %v607
    %v1217 = vunpack.c.h.b16 %v607
    %v1218 = vunpack.c.l.b16 %v608
    %v1219 = vunpack.c.h.b16 %v608
    %v1220 = vunpack.c.l.b16 %v609
    %v1221 = vunpack.c.h.b16 %v609
    %v1222 = vunpack.c.l.b16 %v610
    %v1223 = vunpack.c.h.b16 %v610
    %v1224 = vunpack.c.l.b16 %v611
    %v1225 = vunpack.c.h.b16 %v611
    %v1226 = vunpack.c.l.b16 %v612
    %v1227 = vunpack.c.h.b16 %v612
    %v1228 = vunpack.c.l.b16 %v613
    %v1229 = vunpack.c.h.b16 %v613
    %v1230 = vunpack.c.l.b16 %v614
    %v1231 = vunpack.c.h.b16 %v614
    %v1232 = vunpack.c.l.b16 %v615
    %v1233 = vunpack.c.h.b16 %v615
    %v1234 = vunpack.c.l.b16 %v616
    %v1235 = vunpack.c.h.b16 %v616
    %v1236 = vunpack.c.l.b16 %v617
    %v1237 = vunpack.c.h.b16 %v617
    %v1238 = vunpack.c.l.b16 %v618
    %v1239 = vunpack.c.h.b16 %v618
    %v1240 = vunpack.c.l.b16 %v619
    %v1241 = vunpack.c.h.b16 %v619
    %v1242 = vunpack.c.l.b16 %v620
    %v1243 = vunpack.c.h.b16 %v620
    %v1244 = vunpack.c.l.b16 %v621
    %v1245 = vunpack.c.h.b16 %v621
    %v1246 = vunpack.c.l.b16 %v622
    %v1247 = vunpack.c.h.b16 %v622
    %v1248 = vunpack.c.l.b16 %v623
    %v1249 = vunpack.c.h.b16 %v623
    %v1250 = vunpack.c.l.b16 %v624
    %v1251 = vunpack.c.h.b16 %v624
    %v1252 = vunpack.c.l.b16 %v625
    %v1253 = vunpack.c.h.b16 %v625
    %v1254 = vunpack.c.l.b16 %v626
    %v1255 = vunpack.c.h.b16 %v626
    %v1256 = vunpack.c.l.b16 %v627
    %v1257 = vunpack.c.h.b16 %v627
    %v1258 = vunpack.c.l.b16 %v628
    %v1259 = vunpack.c.h.b16 %v628
    %v1260 = vunpack.c.l.b16 %v629
    %v1261 = vunpack.c.h.b16 %v629
    %v1262 = vunpack.c.l.b16 %v630
    %v1263 = vunpack.c.h.b16 %v630
    %v1264 = vunpack.c.l.b16 %v631
    %v1265 = vunpack.c.h.b16 %v631
    %v1266 = vunpack.c.l.b16 %v632
    %v1267 = vunpack.c.h.b16 %v632
    %v1268 = vunpack.c.l.b16 %v633
    %v1269 = vunpack.c.h.b16 %v633
    %v1270 = vunpack.c.l.b16 %v634
    %v1271 = vunpack.c.h.b16 %v634
    %v1272 = vunpack.c.l.b16 %v635
    %v1273 = vunpack.c.h.b16 %v635
    %v1274 = vunpack.c.l.b16 %v636
    %v1275 = vunpack.c.h.b16 %v636
    %v1276 = vunpack.c.l.b16 %v637
    %v1277 = vunpack.c.h.b16 %v637
    %v1278 = vunpack.c.l.b16 %v638
    %v1279 = vunpack.c.h.b16 %v638
    %v1280 = vunpack.c.l.b16 %v639
    %v1281 = vunpack.c.h.b16 %v639
    %v1282 = vunpack.c.l.b16 %v640
    %v1283 = vunpack.c.h.b16 %v640
    %v1284 = vunpack.c.l.b16 %v641
    %v1285 = vunpack.c.h.b16 %v641
    %v1286 = vunpack.c.l.b16 %v642
    %v1287 = vunpack.c.h.b16 %v642
    %v1288 = vunpack.c.l.b16 %v643
    %v1289 = vunpack.c.h.b16 %v643
    %v1290 = vunpack.c.l.b16 %v644
    %v1291 = vunpack.c.h.b16 %v644
    %v1292 = vunpack.c.l.b16 %v645
    %v1293 = vunpack.c.h.b16 %v645
    %v1294 = vunpack.c.l.b16 %v646
    %v1295 = vunpack.c.h.b16 %v646
    %v1296 = vunpack.c.l.b16 %v647
    %v1297 = vunpack.c.h.b16 %v647
    %v1298 = vunpack.c.l.b16 %v648
    %v1299 = vunpack.c.h.b16 %v648
    %v1300 = vunpack.c.l.b16 %v649
    %v1301 = vunpack.c.h.b16 %v649
    %v1302 = vunpack.c.l.b16 %v650
    %v1303 = vunpack.c.h.b16 %v650
    %v1304 = vunpack.c.l.b16 %v651
    %v1305 = vunpack.c.h.b16 %v651
    %v1306 = vunpack.c.l.b16 %v652
    %v1307 = vunpack.c.h.b16 %v652
    %v1308 = vunpack.c.l.b16 %v653
    %v1309 = vunpack.c.h.b16 %v653
    %v1310 = vunpack.c.l.b16 %v654
    %v1311 = vunpack.c.h.b16 %v654
    %v1312 = vunpack.c.l.b16 %v655
    %v1313 = vunpack.c.h.b16 %v655
    %v1314 = vunpack.c.l.b16 %v656
    %v1315 = vunpack.c.h.b16 %v656
    %v1316 = vunpack.c.l.b16 %v657
    %v1317 = vunpack.c.h.b16 %v657
    %v1318 = vunpack.c.l.b16 %v658
    %v1319 = vunpack.c.h.b16 %v658
    %v1320 = vunpack.c.l.b16 %v659
    %v1321 = vunpack.c.h.b16 %v659
    %v1322 = vunpack.c.l.b16 %v660
    %v1323 = vunpack.c.h.b16 %v660
    %v1324 = vunpack.c.l.b16 %v661
    %v1325 = vunpack.c.h.b16 %v661
    %v1326 = vunpack.c.l.b16 %v662
    %v1327 = vunpack.c.h.b16 %v662
    %v1328 = vunpack.c.l.b16 %v663
    %v1329 = vunpack.c.h.b16 %v663
    %v1330 = vunpack.c.l.b16 %v664
    %v1331 = vunpack.c.h.b16 %v664
    %v1332 = vunpack.c.l.b16 %v665
    %v1333 = vunpack.c.h.b16 %v665
    %v1334 = vunpack.c.l.b16 %v666
    %v1335 = vunpack.c.h.b16 %v666
    %v1336 = vunpack.c.l.b16 %v667
    %v1337 = vunpack.c.h.b16 %v667
    %v1338 = vunpack.c.l.b16 %v668
    %v1339 = vunpack.c.h.b16 %v668
    %v1340 = vunpack.c.l.b16 %v669
    %v1341 = vunpack.c.h.b16 %v669
    %v1342 = vunpack.c.l.b16 %v670
    %v1343 = vunpack.c.h.b16 %v670
    %v1344 = vunpack.c.l.b16 %v671
    %v1345 = vunpack.c.h.b16 %v671
    %v1346 = vunpack.c.l.b16 %v672
    %v1347 = vunpack.c.h.b16 %v672
    %v1348 = vunpack.c.l.b16 %v673
    %v1349 = vunpack.c.h.b16 %v673
    %v1350 = vunpack.c.l.b16 %v674
    %v1351 = vunpack.c.h.b16 %v674
    %v1352 = vunpack.c.l.b16 %v675
    %v1353 = vunpack.c.h.b16 %v675
    %v1354 = vunpack.c.l.b16 %v676
    %v1355 = vunpack.c.h.b16 %v676
    %v1356 = vunpack.c.l.b16 %v677
    %v1357 = vunpack.c.h.b16 %v677
    %v1358 = vunpack.c.l.b16 %v678
    %v1359 = vunpack.c.h.b16 %v678
    %v1360 = vunpack.c.l.b16 %v679
    %v1361 = vunpack.c.h.b16 %v679
    %v1362 = vunpack.c.l.b16 %v680
    %v1363 = vunpack.c.h.b16 %v680
    %v1364 = vunpack.c.l.b16 %v681
    %v1365 = vunpack.c.h.b16 %v681
    %v1366 = vunpack.c.l.b16 %v682
    %v1367 = vunpack.c.h.b16 %v682
    %v1368 = vunpack.c.l.b16 %v683
    %v1369 = vunpack.c.h.b16 %v683
    %v1370 = vunpack.c.l.b16 %v684
    %v1371 = vunpack.c.h.b16 %v684
    %v1372 = vunpack.c.l.b16 %v685
    %v1373 = vunpack.c.h.b16 %v685
    %v1374 = vunpack.c.l.b16 %v686
    %v1375 = vunpack.c.h.b16 %v686
    %v1376 = vunpack.c.l.b16 %v687
    %v1377 = vunpack.c.h.b16 %v687
    %v1378 = vunpack.c.l.b16 %v688
    %v1379 = vunpack.c.h.b16 %v688
    %v1380 = vunpack.c.l.b16 %v689
    %v1381 = vunpack.c.h.b16 %v689
    %v1382 = vunpack.c.l.b16 %v690
    %v1383 = vunpack.c.h.b16 %v690
    %v1384 = vunpack.c.l.b16 %v691
    %v1385 = vunpack.c.h.b16 %v691
    %v1386 = vunpack.c.l.b16 %v692
    %v1387 = vunpack.c.h.b16 %v692
    %v1388 = vunpack.c.l.b16 %v693
    %v1389 = vunpack.c.h.b16 %v693
    %v1390 = vunpack.c.l.b16 %v694
    %v1391 = vunpack.c.h.b16 %v694
    %v1392 = vunpack.c.l.b16 %v695
    %v1393 = vunpack.c.h.b16 %v695
    %v1394 = vunpack.c.l.b16 %v696
    %v1395 = vunpack.c.h.b16 %v696
    %v1396 = vunpack.c.l.b16 %v697
    %v1397 = vunpack.c.h.b16 %v697
    %v1398 = vunpack.c.l.b16 %v698
    %v1399 = vunpack.c.h.b16 %v698
    %v1400 = vunpack.c.l.b16 %v699
    %v1401 = vunpack.c.h.b16 %v699
    %v1402 = vunpack.c.l.b16 %v700
    %v1403 = vunpack.c.h.b16 %v700
    %v1404 = vunpack.c.l.b16 %v701
    %v1405 = vunpack.c.h.b16 %v701
    %v1406 = vunpack.c.l.b16 %v702
    %v1407 = vunpack.c.h.b16 %v702
    %v1408 = vunpack.c.l.b16 %v703
    %v1409 = vunpack.c.h.b16 %v703
    %v1410 = vunpack.c.l.b16 %v704
    %v1411 = vunpack.c.h.b16 %v704
    %v1412 = vunpack.c.l.b16 %v705
    %v1413 = vunpack.c.h.b16 %v705
    %v1414 = vunpack.c.l.b16 %v706
    %v1415 = vunpack.c.h.b16 %v706
    %v1416 = vunpack.c.l.b16 %v707
    %v1417 = vunpack.c.h.b16 %v707
    %v1418 = vunpack.c.l.b16 %v708
    %v1419 = vunpack.c.h.b16 %v708
    %v1420 = vunpack.c.l.b16 %v709
    %v1421 = vunpack.c.h.b16 %v709
    %v1422 = vunpack.c.l.b16 %v710
    %v1423 = vunpack.c.h.b16 %v710
    %v1424 = vunpack.c.l.b16 %v711
    %v1425 = vunpack.c.h.b16 %v711
    %v1426 = vunpack.c.l.b16 %v712
    %v1427 = vunpack.c.h.b16 %v712
    %v1428 = vunpack.c.l.b16 %v713
    %v1429 = vunpack.c.h.b16 %v713
    %v1430 = vunpack.c.l.b16 %v714
    %v1431 = vunpack.c.h.b16 %v714
    %v1432 = vunpack.c.l.b16 %v715
    %v1433 = vunpack.c.h.b16 %v715
    %v1434 = vunpack.c.l.b16 %v716
    %v1435 = vunpack.c.h.b16 %v716
    %v1436 = vunpack.c.l.b16 %v717
    %v1437 = vunpack.c.h.b16 %v717
    %v1438 = vunpack.c.l.b16 %v718
    %v1439 = vunpack.c.h.b16 %v718
    %v1440 = vunpack.c.l.b16 %v719
    %v1441 = vunpack.c.h.b16 %v719
    %v1442 = vunpack.c.l.b16 %v720
    %v1443 = vunpack.c.h.b16 %v720
    %v1444 = vunpack.c.l.b16 %v721
    %v1445 = vunpack.c.h.b16 %v721
    %v1446 = vunpack.c.l.b16 %v722
    %v1447 = vunpack.c.h.b16 %v722
    %v1448 = vunpack.c.l.b16 %v723
    %v1449 = vunpack.c.h.b16 %v723
    %v1450 = vunpack.c.l.b16 %v724
    %v1451 = vunpack.c.h.b16 %v724
    %v1452 = vunpack.c.l.b16 %v725
    %v1453 = vunpack.c.h.b16 %v725
    %v1454 = vunpack.c.l.b16 %v726
    %v1455 = vunpack.c.h.b16 %v726
    %v1456 = vunpack.c.l.b16 %v727
    %v1457 = vunpack.c.h.b16 %v727
    %v1458 = vunpack.c.l.b16 %v728
    %v1459 = vunpack.c.h.b16 %v728
    %v1460 = vunpack.c.l.b16 %v729
    %v1461 = vunpack.c.h.b16 %v729
    %v1462 = vunpack.c.l.b16 %v730
    %v1463 = vunpack.c.h.b16 %v730
    %v1464 = vunpack.c.l.b16 %v731
    %v1465 = vunpack.c.h.b16 %v731
    %v1466 = vunpack.c.l.b16 %v732
    %v1467 = vunpack.c.h.b16 %v732
    %v1468 = vunpack.c.l.b16 %v733
    %v1469 = vunpack.c.h.b16 %v733
    %v1470 = vunpack.c.l.b16 %v734
    %v1471 = vunpack.c.h.b16 %v734
    %v1472 = vunpack.c.l.b16 %v735
    %v1473 = vunpack.c.h.b16 %v735
    %v1474 = vunpack.c.l.b16 %v736
    %v1475 = vunpack.c.h.b16 %v736
    %v1476 = vunpack.c.l.b16 %v737
    %v1477 = vunpack.c.h.b16 %v737
    %v1478 = vunpack.c.l.b16 %v738
    %v1479 = vunpack.c.h.b16 %v738
    %v1480 = vunpack.c.l.b16 %v739
    %v1481 = vunpack.c.h.b16 %v739
    %v1482 = vunpack.c.l.b16 %v740
    %v1483 = vunpack.c.h.b16 %v740
    %v1484 = vunpack.c.l.b16 %v741
    %v1485 = vunpack.c.h.b16 %v741
    %v1486 = vunpack.c.l.b16 %v742
    %v1487 = vunpack.c.h.b16 %v742
    %v1488 = vunpack.c.l.b16 %v743
    %v1489 = vunpack.c.h.b16 %v743
    %v1490 = vunpack.c.l.b16 %v744
    %v1491 = vunpack.c.h.b16 %v744
    %v1492 = vunpack.c.l.b16 %v745
    %v1493 = vunpack.c.h.b16 %v745
    %v1494 = vunpack.c.l.b16 %v746
    %v1495 = vunpack.c.h.b16 %v746
    %v1496 = vunpack.c.l.b16 %v747
    %v1497 = vunpack.c.h.b16 %v747
    %v1498 = vunpack.c.l.b16 %v748
    %v1499 = vunpack.c.h.b16 %v748
    %v1500 = vunpack.c.l.b16 %v749
    %v1501 = vunpack.c.h.b16 %v749
    %v1502 = vunpack.c.l.b16 %v750
    %v1503 = vunpack.c.h.b16 %v750
    %v1504 = vunpack.c.l.b16 %v751
    %v1505 = vunpack.c.h.b16 %v751
    %v1506 = vunpack.c.l.b16 %v752
    %v1507 = vunpack.c.h.b16 %v752
    %v1508 = vunpack.c.l.b16 %v753
    %v1509 = vunpack.c.h.b16 %v753
    %v1510 = vunpack.c.l.b16 %v754
    %v1511 = vunpack.c.h.b16 %v754
    %v1512 = vunpack.c.l.b16 %v755
    %v1513 = vunpack.c.h.b16 %v755
    %v1514 = vunpack.c.l.b16 %v756
    %v1515 = vunpack.c.h.b16 %v756
    %v1516 = vunpack.c.l.b16 %v757
    %v1517 = vunpack.c.h.b16 %v757
    %v1518 = vunpack.c.l.b16 %v758
    %v1519 = vunpack.c.h.b16 %v758
    %v1520 = vunpack.c.l.b16 %v759
    %v1521 = vunpack.c.h.b16 %v759
    %v1522 = vunpack.c.l.b16 %v760
    %v1523 = vunpack.c.h.b16 %v760
    %v1524 = vunpack.c.l.b16 %v761
    %v1525 = vunpack.c.h.b16 %v761
    %v1526 = vunpack.c.l.b16 %v762
    %v1527 = vunpack.c.h.b16 %v762
    %v1528 = vunpack.c.l.b16 %v763
    %v1529 = vunpack.c.h.b16 %v763
    %v1530 = vunpack.c.l.b16 %v764
    %v1531 = vunpack.c.h.b16 %v764
    %v1532 = vunpack.c.l.b16 %v765
    %v1533 = vunpack.c.h.b16 %v765
    %v1534 = vunpack.c.l.b16 %v766
    %v1535 = vunpack.c.h.b16 %v766
    %v1536 = vunpack.c.l.b16 %v767
    %v1537 = vunpack.c.h.b16 %v767
    %v1538 = vunpack.c.l.b16 %v768
    %v1539 = vunpack.c.h.b16 %v768
    %v1540 = vunpack.c.l.b16 %v769
    %v1541 = vunpack.c.h.b16 %v769
    %v1542 = vunpack.c.l.b16 %v770
    %v1543 = vunpack.c.h.b16 %v770
    %v1544 = vunpack.c.l.b16 %v771
    %v1545 = vunpack.c.h.b16 %v771
    %v1546 = vunpack.c.l.b16 %v772
    %v1547 = vunpack.c.h.b16 %v772
    %v1548 = vunpack.c.l.b16 %v773
    %v1549 = vunpack.c.h.b16 %v773
    %v1550 = vunpack.c.l.b16 %v774
    %v1551 = vunpack.c.h.b16 %v774
    %v1552 = vunpack.c.l.b16 %v775
    %v1553 = vunpack.c.h.b16 %v775
    %v1554 = vunpack.c.l.b16 %v776
    %v1555 = vunpack.c.h.b16 %v776
    %v1556 = vunpack.c.l.b16 %v777
    %v1557 = vunpack.c.h.b16 %v777
    %v1558 = vunpack.c.l.b16 %v778
    %v1559 = vunpack.c.h.b16 %v778
    %v1560 = vunpack.c.l.b16 %v779
    %v1561 = vunpack.c.h.b16 %v779
    %v1562 = vunpack.c.l.b16 %v780
    %v1563 = vunpack.c.h.b16 %v780
    %v1564 = vunpack.c.l.b16 %v781
    %v1565 = vunpack.c.h.b16 %v781
    %v1566 = vunpack.c.l.b16 %v782
    %v1567 = vunpack.c.h.b16 %v782
    %v1568 = vunpack.c.l.b16 %v783
    %v1569 = vunpack.c.h.b16 %v783
    %v1570 = vunpack.c.l.b16 %v784
    %v1571 = vunpack.c.h.b16 %v784
    %v1572 = vunpack.c.l.b16 %v785
    %v1573 = vunpack.c.h.b16 %v785
    %v1574 = vunpack.c.l.b16 %v786
    %v1575 = vunpack.c.h.b16 %v786
    %v1576 = vunpack.c.l.b16 %v787
    %v1577 = vunpack.c.h.b16 %v787
    %v1578 = vpack.c.b16 %v1070, %v1066
    %v1579 = vpack.c.b16 %v1071, %v1067
    %v1580 = vpack.c.b16 %v1072, %v1068
    %v1581 = vpack.c.b16 %v1073, %v1069
    %v1582 = vpack.c.b16 %v1078, %v1074
    %v1583 = vpack.c.b16 %v1079, %v1075
    %v1584 = vpack.c.b16 %v1080, %v1076
    %v1585 = vpack.c.b16 %v1081, %v1077
    %v1586 = vpack.c.b16 %v1086, %v1082
    %v1587 = vpack.c.b16 %v1087, %v1083
    %v1588 = vpack.c.b16 %v1088, %v1084
    %v1589 = vpack.c.b16 %v1089, %v1085
    %v1590 = vpack.c.b16 %v1094, %v1090
    %v1591 = vpack.c.b16 %v1095, %v1091
    %v1592 = vpack.c.b16 %v1096, %v1092
    %v1593 = vpack.c.b16 %v1097, %v1093
    %v1594 = vpack.c.b16 %v1102, %v1098
    %v1595 = vpack.c.b16 %v1103, %v1099
    %v1596 = vpack.c.b16 %v1104, %v1100
    %v1597 = vpack.c.b16 %v1105, %v1101
    %v1598 = vpack.c.b16 %v1110, %v1106
    %v1599 = vpack.c.b16 %v1111, %v1107
    %v1600 = vpack.c.b16 %v1112, %v1108
    %v1601 = vpack.c.b16 %v1113, %v1109
    %v1602 = vpack.c.b16 %v1118, %v1114
    %v1603 = vpack.c.b16 %v1119, %v1115
    %v1604 = vpack.c.b16 %v1120, %v1116
    %v1605 = vpack.c.b16 %v1121, %v1117
    %v1606 = vpack.c.b16 %v1126, %v1122
    %v1607 = vpack.c.b16 %v1127, %v1123
    %v1608 = vpack.c.b16 %v1128, %v1124
    %v1609 = vpack.c.b16 %v1129, %v1125
    %v1610 = vpack.c.b16 %v1134, %v1130
    %v1611 = vpack.c.b16 %v1135, %v1131
    %v1612 = vpack.c.b16 %v1136, %v1132
    %v1613 = vpack.c.b16 %v1137, %v1133
    %v1614 = vpack.c.b16 %v1142, %v1138
    %v1615 = vpack.c.b16 %v1143, %v1139
    %v1616 = vpack.c.b16 %v1144, %v1140
    %v1617 = vpack.c.b16 %v1145, %v1141
    %v1618 = vpack.c.b16 %v1150, %v1146
    %v1619 = vpack.c.b16 %v1151, %v1147
    %v1620 = vpack.c.b16 %v1152, %v1148
    %v1621 = vpack.c.b16 %v1153, %v1149
    %v1622 = vpack.c.b16 %v1158, %v1154
    %v1623 = vpack.c.b16 %v1159, %v1155
    %v1624 = vpack.c.b16 %v1160, %v1156
    %v1625 = vpack.c.b16 %v1161, %v1157
    %v1626 = vpack.c.b16 %v1166, %v1162
    %v1627 = vpack.c.b16 %v1167, %v1163
    %v1628 = vpack.c.b16 %v1168, %v1164
    %v1629 = vpack.c.b16 %v1169, %v1165
    %v1630 = vpack.c.b16 %v1174, %v1170
    %v1631 = vpack.c.b16 %v1175, %v1171
    %v1632 = vpack.c.b16 %v1176, %v1172
    %v1633 = vpack.c.b16 %v1177, %v1173
    %v1634 = vpack.c.b16 %v1182, %v1178
    %v1635 = vpack.c.b16 %v1183, %v1179
    %v1636 = vpack.c.b16 %v1184, %v1180
    %v1637 = vpack.c.b16 %v1185, %v1181
    %v1638 = vpack.c.b16 %v1190, %v1186
    %v1639 = vpack.c.b16 %v1191, %v1187
    %v1640 = vpack.c.b16 %v1192, %v1188
    %v1641 = vpack.c.b16 %v1193, %v1189
    %v1642 = vpack.c.b16 %v1198, %v1194
    %v1643 = vpack.c.b16 %v1199, %v1195
    %v1644 = vpack.c.b16 %v1200, %v1196
    %v1645 = vpack.c.b16 %v1201, %v1197
    %v1646 = vpack.c.b16 %v1206, %v1202
    %v1647 = vpack.c.b16 %v1207, %v1203
    %v1648 = vpack.c.b16 %v1208, %v1204
    %v1649 = vpack.c.b16 %v1209, %v1205
    %v1650 = vpack.c.b16 %v1214, %v1210
    %v1651 = vpack.c.b16 %v1215, %v1211
    %v1652 = vpack.c.b16 %v1216, %v1212
    %v1653 = vpack.c.b16 %v1217, %v1213
    %v1654 = vpack.c.b16 %v1222, %v1218
    %v1655 = vpack.c.b16 %v1223, %v1219
    %v1656 = vpack.c.b16 %v1224, %v1220
    %v1657 = vpack.c.b16 %v1225, %v1221
    %v1658 = vpack.c.b16 %v1230, %v1226
    %v1659 = vpack.c.b16 %v1231, %v1227
    %v1660 = vpack.c.b16 %v1232, %v1228
    %v1661 = vpack.c.b16 %v1233, %v1229
    %v1662 = vpack.c.b16 %v1238, %v1234
    %v1663 = vpack.c.b16 %v1239, %v1235
    %v1664 = vpack.c.b16 %v1240, %v1236
    %v1665 = vpack.c.b16 %v1241, %v1237
    %v1666 = vpack.c.b16 %v1246, %v1242
    %v1667 = vpack.c.b16 %v1247, %v1243
    %v1668 = vpack.c.b16 %v1248, %v1244
    %v1669 = vpack.c.b16 %v1249, %v1245
    %v1670 = vpack.c.b16 %v1254, %v1250
    %v1671 = vpack.c.b16 %v1255, %v1251
    %v1672 = vpack.c.b16 %v1256, %v1252
    %v1673 = vpack.c.b16 %v1257, %v1253
    %v1674 = vpack.c.b16 %v1262, %v1258
    %v1675 = vpack.c.b16 %v1263, %v1259
    %v1676 = vpack.c.b16 %v1264, %v1260
    %v1677 = vpack.c.b16 %v1265, %v1261
    %v1678 = vpack.c.b16 %v1270, %v1266
    %v1679 = vpack.c.b16 %v1271, %v1267
    %v1680 = vpack.c.b16 %v1272, %v1268
    %v1681 = vpack.c.b16 %v1273, %v1269
    %v1682 = vpack.c.b16 %v1278, %v1274
    %v1683 = vpack.c.b16 %v1279, %v1275
    %v1684 = vpack.c.b16 %v1280, %v1276
    %v1685 = vpack.c.b16 %v1281, %v1277
    %v1686 = vpack.c.b16 %v1286, %v1282
    %v1687 = vpack.c.b16 %v1287, %v1283
    %v1688 = vpack.c.b16 %v1288, %v1284
    %v1689 = vpack.c.b16 %v1289, %v1285
    %v1690 = vpack.c.b16 %v1294, %v1290
    %v1691 = vpack.c.b16 %v1295, %v1291
    %v1692 = vpack.c.b16 %v1296, %v1292
    %v1693 = vpack.c.b16 %v1297, %v1293
    %v1694 = vpack.c.b16 %v1302, %v1298
    %v1695 = vpack.c.b16 %v1303, %v1299
    %v1696 = vpack.c.b16 %v1304, %v1300
    %v1697 = vpack.c.b16 %v1305, %v1301
    %v1698 = vpack.c.b16 %v1310, %v1306
    %v1699 = vpack.c.b16 %v1311, %v1307
    %v1700 = vpack.c.b16 %v1312, %v1308
    %v1701 = vpack.c.b16 %v1313, %v1309
    %v1702 = vpack.c.b16 %v1318, %v1314
    %v1703 = vpack.c.b16 %v1319, %v1315
    %v1704 = vpack.c.b16 %v1320, %v1316
    %v1705 = vpack.c.b16 %v1321, %v1317
    %v1706 = vpack.c.b16 %v1326, %v1322
    %v1707 = vpack.c.b16 %v1327, %v1323
    %v1708 = vpack.c.b16 %v1328, %v1324
    %v1709 = vpack.c.b16 %v1329, %v1325
    %v1710 = vpack.c.b16 %v1334, %v1330
    %v1711 = vpack.c.b16 %v1335, %v1331
    %v1712 = vpack.c.b16 %v1336, %v1332
    %v1713 = vpack.c.b16 %v1337, %v1333
    %v1714 = vpack.c.b16 %v1342, %v1338
    %v1715 = vpack.c.b16 %v1343, %v1339
    %v1716 = vpack.c.b16 %v1344, %v1340
    %v1717 = vpack.c.b16 %v1345, %v1341
    %v1718 = vpack.c.b16 %v1350, %v1346
    %v1719 = vpack.c.b16 %v1351, %v1347
    %v1720 = vpack.c.b16 %v1352, %v1348
    %v1721 = vpack.c.b16 %v1353, %v1349
    %v1722 = vpack.c.b16 %v1358, %v1354
    %v1723 = vpack.c.b16 %v1359, %v1355
    %v1724 = vpack.c.b16 %v1360, %v1356
    %v1725 = vpack.c.b16 %v1361, %v1357
    %v1726 = vpack.c.b16 %v1366, %v1362
    %v1727 = vpack.c.b16 %v1367, %v1363
    %v1728 = vpack.c.b16 %v1368, %v1364
    %v1729 = vpack.c.b16 %v1369, %v1365
    %v1730 = vpack.c.b16 %v1374, %v1370
    %v1731 = vpack.c.b16 %v1375, %v1371
    %v1732 = vpack.c.b16 %v1376, %v1372
    %v1733 = vpack.c.b16 %v1377, %v1373
    %v1734 = vpack.c.b16 %v1382, %v1378
    %v1735 = vpack.c.b16 %v1383, %v1379
    %v1736 = vpack.c.b16 %v1384, %v1380
    %v1737 = vpack.c.b16 %v1385, %v1381
    %v1738 = vpack.c.b16 %v1390, %v1386
    %v1739 = vpack.c.b16 %v1391, %v1387
    %v1740 = vpack.c.b16 %v1392, %v1388
    %v1741 = vpack.c.b16 %v1393, %v1389
    %v1742 = vpack.c.b16 %v1398, %v1394
    %v1743 = vpack.c.b16 %v1399, %v1395
    %v1744 = vpack.c.b16 %v1400, %v1396
    %v1745 = vpack.c.b16 %v1401, %v1397
    %v1746 = vpack.c.b16 %v1406, %v1402
    %v1747 = vpack.c.b16 %v1407, %v1403
    %v1748 = vpack.c.b16 %v1408, %v1404
    %v1749 = vpack.c.b16 %v1409, %v1405
    %v1750 = vpack.c.b16 %v1414, %v1410
    %v1751 = vpack.c.b16 %v1415, %v1411
    %v1752 = vpack.c.b16 %v1416, %v1412
    %v1753 = vpack.c.b16 %v1417, %v1413
    %v1754 = vpack.c.b16 %v1422, %v1418
    %v1755 = vpack.c.b16 %v1423, %v1419
    %v1756 = vpack.c.b16 %v1424, %v1420
    %v1757 = vpack.c.b16 %v1425, %v1421
    %v1758 = vpack.c.b16 %v1430, %v1426
    %v1759 = vpack.c.b16 %v1431, %v1427
    %v1760 = vpack.c.b16 %v1432, %v1428
    %v1761 = vpack.c.b16 %v1433, %v1429
    %v1762 = vpack.c.b16 %v1438, %v1434
    %v1763 = vpack.c.b16 %v1439, %v1435
    %v1764 = vpack.c.b16 %v1440, %v1436
    %v1765 = vpack.c.b16 %v1441, %v1437
    %v1766 = vpack.c.b16 %v1446, %v1442
    %v1767 = vpack.c.b16 %v1447, %v1443
    %v1768 = vpack.c.b16 %v1448, %v1444
    %v1769 = vpack.c.b16 %v1449, %v1445
    %v1770 = vpack.c.b16 %v1454, %v1450
    %v1771 = vpack.c.b16 %v1455, %v1451
    %v1772 = vpack.c.b16 %v1456, %v1452
    %v1773 = vpack.c.b16 %v1457, %v1453
    %v1774 = vpack.c.b16 %v1462, %v1458
    %v1775 = vpack.c.b16 %v1463, %v1459
    %v1776 = vpack.c.b16 %v1464, %v1460
    %v1777 = vpack.c.b16 %v1465, %v1461
    %v1778 = vpack.c.b16 %v1470, %v1466
    %v1779 = vpack.c.b16 %v1471, %v1467
    %v1780 = vpack.c.b16 %v1472, %v1468
    %v1781 = vpack.c.b16 %v1473, %v1469
    %v1782 = vpack.c.b16 %v1478, %v1474
    %v1783 = vpack.c.b16 %v1479, %v1475
    %v1784 = vpack.c.b16 %v1480, %v1476
    %v1785 = vpack.c.b16 %v1481, %v1477
    %v1786 = vpack.c.b16 %v1486, %v1482
    %v1787 = vpack.c.b16 %v1487, %v1483
    %v1788 = vpack.c.b16 %v1488, %v1484
    %v1789 = vpack.c.b16 %v1489, %v1485
    %v1790 = vpack.c.b16 %v1494, %v1490
    %v1791 = vpack.c.b16 %v1495, %v1491
    %v1792 = vpack.c.b16 %v1496, %v1492
    %v1793 = vpack.c.b16 %v1497, %v1493
    %v1794 = vpack.c.b16 %v1502, %v1498
    %v1795 = vpack.c.b16 %v1503, %v1499
    %v1796 = vpack.c.b16 %v1504, %v1500
    %v1797 = vpack.c.b16 %v1505, %v1501
    %v1798 = vpack.c.b16 %v1510, %v1506
    %v1799 = vpack.c.b16 %v1511, %v1507
    %v1800 = vpack.c.b16 %v1512, %v1508
    %v1801 = vpack.c.b16 %v1513, %v1509
    %v1802 = vpack.c.b16 %v1518, %v1514
    %v1803 = vpack.c.b16 %v1519, %v1515
    %v1804 = vpack.c.b16 %v1520, %v1516
    %v1805 = vpack.c.b16 %v1521, %v1517
    %v1806 = vpack.c.b16 %v1526, %v1522
    %v1807 = vpack.c.b16 %v1527, %v1523
    %v1808 = vpack.c.b16 %v1528, %v1524
    %v1809 = vpack.c.b16 %v1529, %v1525
    %v1810 = vpack.c.b16 %v1534, %v1530
    %v1811 = vpack.c.b16 %v1535, %v1531
    %v1812 = vpack.c.b16 %v1536, %v1532
    %v1813 = vpack.c.b16 %v1537, %v1533
    %v1814 = vpack.c.b16 %v1542, %v1538
    %v1815 = vpack.c.b16 %v1543, %v1539
    %v1816 = vpack.c.b16 %v1544, %v1540
    %v1817 = vpack.c.b16 %v1545, %v1541
    %v1818 = vpack.c.b16 %v1550, %v1546
    %v1819 = vpack.c.b16 %v1551, %v1547
    %v1820 = vpack.c.b16 %v1552, %v1548
    %v1821 = vpack.c.b16 %v1553, %v1549
    %v1822 = vpack.c.b16 %v1558, %v1554
    %v1823 = vpack.c.b16 %v1559, %v1555
    %v1824 = vpack.c.b16 %v1560, %v1556
    %v1825 = vpack.c.b16 %v1561, %v1557
    %v1826 = vpack.c.b16 %v1566, %v1562
    %v1827 = vpack.c.b16 %v1567, %v1563
    %v1828 = vpack.c.b16 %v1568, %v1564
    %v1829 = vpack.c.b16 %v1569, %v1565
    %v1830 = vpack.c.b16 %v1574, %v1570
    %v1831 = vpack.c.b16 %v1575, %v1571
    %v1832 = vpack.c.b16 %v1576, %v1572
    %v1833 = vpack.c.b16 %v1577, %v1573
    %2090 = vmatprep.subr.bf16.mxu0 %v1579
    %2091 = vmatpush1.bf16.msra.mxu0 %v1578
    %2092 = vmatprep.subr.bf16.mxu0 %v1583
    %2093 = vmatpush1.bf16.msra.mxu0 %v1582
    %2094 = vmatprep.subr.bf16.mxu0 %v1587
    %2095 = vmatpush1.bf16.msra.mxu0 %v1586
    %2096 = vmatprep.subr.bf16.mxu0 %v1591
    %2097 = vmatpush1.bf16.msra.mxu0 %v1590
    %2098 = vmatprep.subr.bf16.mxu0 %v1595
    %2099 = vmatpush1.bf16.msra.mxu0 %v1594
    %2100 = vmatprep.subr.bf16.mxu0 %v1599
    %2101 = vmatpush1.bf16.msra.mxu0 %v1598
    %2102 = vmatprep.subr.bf16.mxu0 %v1603
    %2103 = vmatpush1.bf16.msra.mxu0 %v1602
    %2104 = vmatprep.subr.bf16.mxu0 %v1607
    %2105 = vmatpush1.bf16.msra.mxu0 %v1606
    %2106 = vmatprep.subr.bf16.mxu0 %v1611
    %2107 = vmatpush1.bf16.msra.mxu0 %v1610
    %2108 = vmatprep.subr.bf16.mxu0 %v1615
    %2109 = vmatpush1.bf16.msra.mxu0 %v1614
    %2110 = vmatprep.subr.bf16.mxu0 %v1619
    %2111 = vmatpush1.bf16.msra.mxu0 %v1618
    %2112 = vmatprep.subr.bf16.mxu0 %v1623
    %2113 = vmatpush1.bf16.msra.mxu0 %v1622
    %2114 = vmatprep.subr.bf16.mxu0 %v1627
    %2115 = vmatpush1.bf16.msra.mxu0 %v1626
    %2116 = vmatprep.subr.bf16.mxu0 %v1631
    %2117 = vmatpush1.bf16.msra.mxu0 %v1630
    %2118 = vmatprep.subr.bf16.mxu0 %v1635
    %2119 = vmatpush1.bf16.msra.mxu0 %v1634
    %2120 = vmatprep.subr.bf16.mxu0 %v1639
    %2121 = vmatpush1.bf16.msra.mxu0 %v1638
    %2122 = vmatprep.mubr.bf16.mxu0 %v405
    %2123 = vmatmul.mubr.bf16.gmra.mrb[0].mxu0 %v404
    %v2124 = vpop.f32.mrb[0].mxu0
    %v2125 = vadd.f32 %v793, %v2124
    %v2126 = vpop.f32.mrb[0].mxu0
    %v2127 = vadd.f32 %v797, %v2126
    %v2128 = vpop.f32.mrb[0].mxu0
    %v2129 = vadd.f32 %v793, %v2128
    %v2130 = vpop.f32.mrb[0].mxu0
    %v2131 = vadd.f32 %v797, %v2130
    %2132 = vmatprep.mubr.bf16.mxu0 %v413
    %2133 = vmatmul.mubr.bf16.gmra.mrb[0].mxu0 %v412
    %v2134 = vpop.f32.mrb[0].mxu0
    %v2135 = vadd.f32 %v793, %v2134
    %v2136 = vpop.f32.mrb[0].mxu0
    %v2137 = vadd.f32 %v797, %v2136
    %v2138 = vpop.f32.mrb[0].mxu0
    %v2139 = vadd.f32 %v793, %v2138
    %v2140 = vpop.f32.mrb[0].mxu0
    %v2141 = vadd.f32 %v797, %v2140
    %2142 = vmatprep.mubr.bf16.mxu0 %v421
    %2143 = vmatmul.mubr.bf16.gmra.mrb[0].mxu0 %v420
    %v2144 = vpop.f32.mrb[0].mxu0
    %v2145 = vadd.f32 %v793, %v2144
    %v2146 = vpop.f32.mrb[0].mxu0
    %v2147 = vadd.f32 %v797, %v2146
    %v2148 = vpop.f32.mrb[0].mxu0
    %v2149 = vadd.f32 %v793, %v2148
    %v2150 = vpop.f32.mrb[0].mxu0
    %v2151 = vadd.f32 %v797, %v2150
    %2152 = vmatprep.mubr.bf16.mxu0 %v429
    %2153 = vmatmul.mubr.bf16.gmra.mrb[0].mxu0 %v428
    %v2154 = vpop.f32.mrb[0].mxu0
    %v2155 = vadd.f32 %v793, %v2154
    %v2156 = vpop.f32.mrb[0].mxu0
    %v2157 = vadd.f32 %v797, %v2156
    %v2158 = vpop.f32.mrb[0].mxu0
    %v2159 = vadd.f32 %v793, %v2158
    %v2160 = vpop.f32.mrb[0].mxu0
    %v2161 = vadd.f32 %v797, %v2160
    %2162 = vmatprep.mubr.bf16.mxu0 %v437
    %2163 = vmatmul.mubr.bf16.gmra.mrb[0].mxu0 %v436
    %v2164 = vpop.f32.mrb[0].mxu0
    %v2165 = vadd.f32 %v793, %v2164
    %v2166 = vpop.f32.mrb[0].mxu0
    %v2167 = vadd.f32 %v797, %v2166
    %v2168 = vpop.f32.mrb[0].mxu0
    %v2169 = vadd.f32 %v793, %v2168
    %v2170 = vpop.f32.mrb[0].mxu0
    %v2171 = vadd.f32 %v797, %v2170
    %2172 = vmatprep.mubr.bf16.mxu0 %v445
    %2173 = vmatmul.mubr.bf16.gmra.mrb[0].mxu0 %v444
    %v2174 = vpop.f32.mrb[0].mxu0
    %v2175 = vadd.f32 %v793, %v2174
    %v2176 = vpop.f32.mrb[0].mxu0
    %v2177 = vadd.f32 %v797, %v2176
    %v2178 = vpop.f32.mrb[0].mxu0
    %v2179 = vadd.f32 %v793, %v2178
    %v2180 = vpop.f32.mrb[0].mxu0
    %v2181 = vadd.f32 %v797, %v2180
    %2182 = vmatprep.mubr.bf16.mxu0 %v453
    %2183 = vmatmul.mubr.bf16.gmra.mrb[0].mxu0 %v452
    %v2184 = vpop.f32.mrb[0].mxu0
    %v2185 = vadd.f32 %v793, %v2184
    %v2186 = vpop.f32.mrb[0].mxu0
    %v2187 = vadd.f32 %v797, %v2186
    %v2188 = vpop.f32.mrb[0].mxu0
    %v2189 = vadd.f32 %v793, %v2188
    %v2190 = vpop.f32.mrb[0].mxu0
    %v2191 = vadd.f32 %v797, %v2190
    %2192 = vmatprep.mubr.bf16.mxu0 %v461
    %2193 = vmatmul.mubr.bf16.gmra.mrb[0].mxu0 %v460
    %v2194 = vpop.f32.mrb[0].mxu0
    %v2195 = vadd.f32 %v793, %v2194
    %v2196 = vpop.f32.mrb[0].mxu0
    %v2197 = vadd.f32 %v797, %v2196
    %v2198 = vpop.f32.mrb[0].mxu0
    %v2199 = vadd.f32 %v793, %v2198
    %v2200 = vpop.f32.mrb[0].mxu0
    %v2201 = vadd.f32 %v797, %v2200
    %2202 = vmatprep.mubr.bf16.mxu0 %v469
    %2203 = vmatmul.mubr.bf16.gmra.mrb[0].mxu0 %v468
    %v2204 = vpop.f32.mrb[0].mxu0
    %v2205 = vadd.f32 %v793, %v2204
    %v2206 = vpop.f32.mrb[0].mxu0
    %v2207 = vadd.f32 %v797, %v2206
    %v2208 = vpop.f32.mrb[0].mxu0
    %v2209 = vadd.f32 %v793, %v2208
    %v2210 = vpop.f32.mrb[0].mxu0
    %v2211 = vadd.f32 %v797, %v2210
    %2212 = vmatprep.mubr.bf16.mxu0 %v477
    %2213 = vmatmul.mubr.bf16.gmra.mrb[0].mxu0 %v476
    %v2214 = vpop.f32.mrb[0].mxu0
    %v2215 = vadd.f32 %v793, %v2214
    %v2216 = vpop.f32.mrb[0].mxu0
    %v2217 = vadd.f32 %v797, %v2216
    %v2218 = vpop.f32.mrb[0].mxu0
    %v2219 = vadd.f32 %v793, %v2218
    %v2220 = vpop.f32.mrb[0].mxu0
    %v2221 = vadd.f32 %v797, %v2220
    %2222 = vmatprep.mubr.bf16.mxu0 %v485
    %2223 = vmatmul.mubr.bf16.gmra.mrb[0].mxu0 %v484
    %v2224 = vpop.f32.mrb[0].mxu0
    %v2225 = vadd.f32 %v793, %v2224
    %v2226 = vpop.f32.mrb[0].mxu0
    %v2227 = vadd.f32 %v797, %v2226
    %v2228 = vpop.f32.mrb[0].mxu0
    %v2229 = vadd.f32 %v793, %v2228
    %v2230 = vpop.f32.mrb[0].mxu0
    %v2231 = vadd.f32 %v797, %v2230
    %2232 = vmatprep.mubr.bf16.mxu0 %v493
    %2233 = vmatmul.mubr.bf16.gmra.mrb[0].mxu0 %v492
    %v2234 = vpop.f32.mrb[0].mxu0
    %v2235 = vadd.f32 %v793, %v2234
    %v2236 = vpop.f32.mrb[0].mxu0
    %v2237 = vadd.f32 %v797, %v2236
    %v2238 = vpop.f32.mrb[0].mxu0
    %v2239 = vadd.f32 %v793, %v2238
    %v2240 = vpop.f32.mrb[0].mxu0
    %v2241 = vadd.f32 %v797, %v2240
    %2242 = vmatprep.mubr.bf16.mxu0 %v501
    %2243 = vmatmul.mubr.bf16.gmra.mrb[0].mxu0 %v500
    %v2244 = vpop.f32.mrb[0].mxu0
    %v2245 = vadd.f32 %v793, %v2244
    %v2246 = vpop.f32.mrb[0].mxu0
    %v2247 = vadd.f32 %v797, %v2246
    %v2248 = vpop.f32.mrb[0].mxu0
    %v2249 = vadd.f32 %v793, %v2248
    %v2250 = vpop.f32.mrb[0].mxu0
    %v2251 = vadd.f32 %v797, %v2250
    %2252 = vmatprep.mubr.bf16.mxu0 %v509
    %2253 = vmatmul.mubr.bf16.gmra.mrb[0].mxu0 %v508
    %v2254 = vpop.f32.mrb[0].mxu0
    %v2255 = vadd.f32 %v793, %v2254
    %v2256 = vpop.f32.mrb[0].mxu0
    %v2257 = vadd.f32 %v797, %v2256
    %v2258 = vpop.f32.mrb[0].mxu0
    %v2259 = vadd.f32 %v793, %v2258
    %v2260 = vpop.f32.mrb[0].mxu0
    %v2261 = vadd.f32 %v797, %v2260
    %2262 = vmatprep.mubr.bf16.mxu0 %v517
    %2263 = vmatmul.mubr.bf16.gmra.mrb[0].mxu0 %v516
    %v2264 = vpop.f32.mrb[0].mxu0
    %v2265 = vadd.f32 %v793, %v2264
    %v2266 = vpop.f32.mrb[0].mxu0
    %v2267 = vadd.f32 %v797, %v2266
    %v2268 = vpop.f32.mrb[0].mxu0
    %v2269 = vadd.f32 %v793, %v2268
    %v2270 = vpop.f32.mrb[0].mxu0
    %v2271 = vadd.f32 %v797, %v2270
    %2272 = vmatprep.mubr.bf16.mxu0 %v525
    %2273 = vmatmul.mubr.bf16.gmra.mrb[0].mxu0 %v524
    %v2274 = vpop.f32.mrb[0].mxu0
    %v2275 = vadd.f32 %v793, %v2274
    %v2276 = vpop.f32.mrb[0].mxu0
    %v2277 = vadd.f32 %v797, %v2276
    %v2278 = vpop.f32.mrb[0].mxu0
    %v2279 = vadd.f32 %v793, %v2278
    %v2280 = vpop.f32.mrb[0].mxu0
    %v2281 = vadd.f32 %v797, %v2280
    %2282 = vdwg.mxu0
    %2283 = vmatprep.subr.bf16.mxu0 %v1643
    %2284 = vmatpush1.bf16.msra.mxu0 %v1642
    %2285 = vmatprep.subr.bf16.mxu0 %v1647
    %2286 = vmatpush1.bf16.msra.mxu0 %v1646
    %2287 = vmatprep.subr.bf16.mxu0 %v1651
    %2288 = vmatpush1.bf16.msra.mxu0 %v1650
    %2289 = vmatprep.subr.bf16.mxu0 %v1655
    %2290 = vmatpush1.bf16.msra.mxu0 %v1654
    %2291 = vmatprep.subr.bf16.mxu0 %v1659
    %2292 = vmatpush1.bf16.msra.mxu0 %v1658
    %2293 = vmatprep.subr.bf16.mxu0 %v1663
    %2294 = vmatpush1.bf16.msra.mxu0 %v1662
    %2295 = vmatprep.subr.bf16.mxu0 %v1667
    %2296 = vmatpush1.bf16.msra.mxu0 %v1666
    %2297 = vmatprep.subr.bf16.mxu0 %v1671
    %2298 = vmatpush1.bf16.msra.mxu0 %v1670
    %2299 = vmatprep.subr.bf16.mxu0 %v1675
    %2300 = vmatpush1.bf16.msra.mxu0 %v1674
    %2301 = vmatprep.subr.bf16.mxu0 %v1679
    %2302 = vmatpush1.bf16.msra.mxu0 %v1678
    %2303 = vmatprep.subr.bf16.mxu0 %v1683
    %2304 = vmatpush1.bf16.msra.mxu0 %v1682
    %2305 = vmatprep.subr.bf16.mxu0 %v1687
    %2306 = vmatpush1.bf16.msra.mxu0 %v1686
    %2307 = vmatprep.subr.bf16.mxu0 %v1691
    %2308 = vmatpush1.bf16.msra.mxu0 %v1690
    %2309 = vmatprep.subr.bf16.mxu0 %v1695
    %2310 = vmatpush1.bf16.msra.mxu0 %v1694
    %2311 = vmatprep.subr.bf16.mxu0 %v1699
    %2312 = vmatpush1.bf16.msra.mxu0 %v1698
    %2313 = vmatprep.subr.bf16.mxu0 %v1703
    %2314 = vmatpush1.bf16.msra.mxu0 %v1702
    %2315 = vmatprep.mubr.bf16.mxu0 %v407
    %2316 = vmatmul.mubr.bf16.gmra.mrb[0].mxu0 %v406
    %v2317 = vpop.f32.mrb[0].mxu0
    %v2318 = vadd.f32 %v2125, %v2317
    %v2319 = vpop.f32.mrb[0].mxu0
    %v2320 = vadd.f32 %v2127, %v2319
    %v2321 = vpop.f32.mrb[0].mxu0
    %v2322 = vadd.f32 %v2129, %v2321
    %v2323 = vpop.f32.mrb[0].mxu0
    %v2324 = vadd.f32 %v2131, %v2323
    %2325 = vmatprep.mubr.bf16.mxu0 %v415
    %2326 = vmatmul.mubr.bf16.gmra.mrb[0].mxu0 %v414
    %v2327 = vpop.f32.mrb[0].mxu0
    %v2328 = vadd.f32 %v2135, %v2327
    %v2329 = vpop.f32.mrb[0].mxu0
    %v2330 = vadd.f32 %v2137, %v2329
    %v2331 = vpop.f32.mrb[0].mxu0
    %v2332 = vadd.f32 %v2139, %v2331
    %v2333 = vpop.f32.mrb[0].mxu0
    %v2334 = vadd.f32 %v2141, %v2333
    %2335 = vmatprep.mubr.bf16.mxu0 %v423
    %2336 = vmatmul.mubr.bf16.gmra.mrb[0].mxu0 %v422
    %v2337 = vpop.f32.mrb[0].mxu0
    %v2338 = vadd.f32 %v2145, %v2337
    %v2339 = vpop.f32.mrb[0].mxu0
    %v2340 = vadd.f32 %v2147, %v2339
    %v2341 = vpop.f32.mrb[0].mxu0
    %v2342 = vadd.f32 %v2149, %v2341
    %v2343 = vpop.f32.mrb[0].mxu0
    %v2344 = vadd.f32 %v2151, %v2343
    %2345 = vmatprep.mubr.bf16.mxu0 %v431
    %2346 = vmatmul.mubr.bf16.gmra.mrb[0].mxu0 %v430
    %v2347 = vpop.f32.mrb[0].mxu0
    %v2348 = vadd.f32 %v2155, %v2347
    %v2349 = vpop.f32.mrb[0].mxu0
    %v2350 = vadd.f32 %v2157, %v2349
    %v2351 = vpop.f32.mrb[0].mxu0
    %v2352 = vadd.f32 %v2159, %v2351
    %v2353 = vpop.f32.mrb[0].mxu0
    %v2354 = vadd.f32 %v2161, %v2353
    %2355 = vmatprep.mubr.bf16.mxu0 %v439
    %2356 = vmatmul.mubr.bf16.gmra.mrb[0].mxu0 %v438
    %v2357 = vpop.f32.mrb[0].mxu0
    %v2358 = vadd.f32 %v2165, %v2357
    %v2359 = vpop.f32.mrb[0].mxu0
    %v2360 = vadd.f32 %v2167, %v2359
    %v2361 = vpop.f32.mrb[0].mxu0
    %v2362 = vadd.f32 %v2169, %v2361
    %v2363 = vpop.f32.mrb[0].mxu0
    %v2364 = vadd.f32 %v2171, %v2363
    %2365 = vmatprep.mubr.bf16.mxu0 %v447
    %2366 = vmatmul.mubr.bf16.gmra.mrb[0].mxu0 %v446
    %v2367 = vpop.f32.mrb[0].mxu0
    %v2368 = vadd.f32 %v2175, %v2367
    %v2369 = vpop.f32.mrb[0].mxu0
    %v2370 = vadd.f32 %v2177, %v2369
    %v2371 = vpop.f32.mrb[0].mxu0
    %v2372 = vadd.f32 %v2179, %v2371
    %v2373 = vpop.f32.mrb[0].mxu0
    %v2374 = vadd.f32 %v2181, %v2373
    %2375 = vmatprep.mubr.bf16.mxu0 %v455
    %2376 = vmatmul.mubr.bf16.gmra.mrb[0].mxu0 %v454
    %v2377 = vpop.f32.mrb[0].mxu0
    %v2378 = vadd.f32 %v2185, %v2377
    %v2379 = vpop.f32.mrb[0].mxu0
    %v2380 = vadd.f32 %v2187, %v2379
    %v2381 = vpop.f32.mrb[0].mxu0
    %v2382 = vadd.f32 %v2189, %v2381
    %v2383 = vpop.f32.mrb[0].mxu0
    %v2384 = vadd.f32 %v2191, %v2383
    %2385 = vmatprep.mubr.bf16.mxu0 %v463
    %2386 = vmatmul.mubr.bf16.gmra.mrb[0].mxu0 %v462
    %v2387 = vpop.f32.mrb[0].mxu0
    %v2388 = vadd.f32 %v2195, %v2387
    %v2389 = vpop.f32.mrb[0].mxu0
    %v2390 = vadd.f32 %v2197, %v2389
    %v2391 = vpop.f32.mrb[0].mxu0
    %v2392 = vadd.f32 %v2199, %v2391
    %v2393 = vpop.f32.mrb[0].mxu0
    %v2394 = vadd.f32 %v2201, %v2393
    %2395 = vmatprep.mubr.bf16.mxu0 %v471
    %2396 = vmatmul.mubr.bf16.gmra.mrb[0].mxu0 %v470
    %v2397 = vpop.f32.mrb[0].mxu0
    %v2398 = vadd.f32 %v2205, %v2397
    %v2399 = vpop.f32.mrb[0].mxu0
    %v2400 = vadd.f32 %v2207, %v2399
    %v2401 = vpop.f32.mrb[0].mxu0
    %v2402 = vadd.f32 %v2209, %v2401
    %v2403 = vpop.f32.mrb[0].mxu0
    %v2404 = vadd.f32 %v2211, %v2403
    %2405 = vmatprep.mubr.bf16.mxu0 %v479
    %2406 = vmatmul.mubr.bf16.gmra.mrb[0].mxu0 %v478
    %v2407 = vpop.f32.mrb[0].mxu0
    %v2408 = vadd.f32 %v2215, %v2407
    %v2409 = vpop.f32.mrb[0].mxu0
    %v2410 = vadd.f32 %v2217, %v2409
    %v2411 = vpop.f32.mrb[0].mxu0
    %v2412 = vadd.f32 %v2219, %v2411
    %v2413 = vpop.f32.mrb[0].mxu0
    %v2414 = vadd.f32 %v2221, %v2413
    %2415 = vmatprep.mubr.bf16.mxu0 %v487
    %2416 = vmatmul.mubr.bf16.gmra.mrb[0].mxu0 %v486
    %v2417 = vpop.f32.mrb[0].mxu0
    %v2418 = vadd.f32 %v2225, %v2417
    %v2419 = vpop.f32.mrb[0].mxu0
    %v2420 = vadd.f32 %v2227, %v2419
    %v2421 = vpop.f32.mrb[0].mxu0
    %v2422 = vadd.f32 %v2229, %v2421
    %v2423 = vpop.f32.mrb[0].mxu0
    %v2424 = vadd.f32 %v2231, %v2423
    %2425 = vmatprep.mubr.bf16.mxu0 %v495
    %2426 = vmatmul.mubr.bf16.gmra.mrb[0].mxu0 %v494
    %v2427 = vpop.f32.mrb[0].mxu0
    %v2428 = vadd.f32 %v2235, %v2427
    %v2429 = vpop.f32.mrb[0].mxu0
    %v2430 = vadd.f32 %v2237, %v2429
    %v2431 = vpop.f32.mrb[0].mxu0
    %v2432 = vadd.f32 %v2239, %v2431
    %v2433 = vpop.f32.mrb[0].mxu0
    %v2434 = vadd.f32 %v2241, %v2433
    %2435 = vmatprep.mubr.bf16.mxu0 %v503
    %2436 = vmatmul.mubr.bf16.gmra.mrb[0].mxu0 %v502
    %v2437 = vpop.f32.mrb[0].mxu0
    %v2438 = vadd.f32 %v2245, %v2437
    %v2439 = vpop.f32.mrb[0].mxu0
    %v2440 = vadd.f32 %v2247, %v2439
    %v2441 = vpop.f32.mrb[0].mxu0
    %v2442 = vadd.f32 %v2249, %v2441
    %v2443 = vpop.f32.mrb[0].mxu0
    %v2444 = vadd.f32 %v2251, %v2443
    %2445 = vmatprep.mubr.bf16.mxu0 %v511
    %2446 = vmatmul.mubr.bf16.gmra.mrb[0].mxu0 %v510
    %v2447 = vpop.f32.mrb[0].mxu0
    %v2448 = vadd.f32 %v2255, %v2447
    %v2449 = vpop.f32.mrb[0].mxu0
    %v2450 = vadd.f32 %v2257, %v2449
    %v2451 = vpop.f32.mrb[0].mxu0
    %v2452 = vadd.f32 %v2259, %v2451
    %v2453 = vpop.f32.mrb[0].mxu0
    %v2454 = vadd.f32 %v2261, %v2453
    %2455 = vmatprep.mubr.bf16.mxu0 %v519
    %2456 = vmatmul.mubr.bf16.gmra.mrb[0].mxu0 %v518
    %v2457 = vpop.f32.mrb[0].mxu0
    %v2458 = vadd.f32 %v2265, %v2457
    %v2459 = vpop.f32.mrb[0].mxu0
    %v2460 = vadd.f32 %v2267, %v2459
    %v2461 = vpop.f32.mrb[0].mxu0
    %v2462 = vadd.f32 %v2269, %v2461
    %v2463 = vpop.f32.mrb[0].mxu0
    %v2464 = vadd.f32 %v2271, %v2463
    %2465 = vmatprep.mubr.bf16.mxu0 %v527
    %2466 = vmatmul.mubr.bf16.gmra.mrb[0].mxu0 %v526
    %v2467 = vpop.f32.mrb[0].mxu0
    %v2468 = vadd.f32 %v2275, %v2467
    %v2469 = vpop.f32.mrb[0].mxu0
    %v2470 = vadd.f32 %v2277, %v2469
    %v2471 = vpop.f32.mrb[0].mxu0
    %v2472 = vadd.f32 %v2279, %v2471
    %v2473 = vpop.f32.mrb[0].mxu0
    %v2474 = vadd.f32 %v2281, %v2473
    %2475 = vdwg.mxu0
    %2476 = vmatprep.subr.bf16.mxu0 %v1707
    %2477 = vmatpush1.bf16.msra.mxu0 %v1706
    %2478 = vmatprep.subr.bf16.mxu0 %v1711
    %2479 = vmatpush1.bf16.msra.mxu0 %v1710
    %2480 = vmatprep.subr.bf16.mxu0 %v1715
    %2481 = vmatpush1.bf16.msra.mxu0 %v1714
    %2482 = vmatprep.subr.bf16.mxu0 %v1719
    %2483 = vmatpush1.bf16.msra.mxu0 %v1718
    %2484 = vmatprep.subr.bf16.mxu0 %v1723
    %2485 = vmatpush1.bf16.msra.mxu0 %v1722
    %2486 = vmatprep.subr.bf16.mxu0 %v1727
    %2487 = vmatpush1.bf16.msra.mxu0 %v1726
    %2488 = vmatprep.subr.bf16.mxu0 %v1731
    %2489 = vmatpush1.bf16.msra.mxu0 %v1730
    %2490 = vmatprep.subr.bf16.mxu0 %v1735
    %2491 = vmatpush1.bf16.msra.mxu0 %v1734
    %2492 = vmatprep.subr.bf16.mxu0 %v1739
    %2493 = vmatpush1.bf16.msra.mxu0 %v1738
    %2494 = vmatprep.subr.bf16.mxu0 %v1743
    %2495 = vmatpush1.bf16.msra.mxu0 %v1742
    %2496 = vmatprep.subr.bf16.mxu0 %v1747
    %2497 = vmatpush1.bf16.msra.mxu0 %v1746
    %2498 = vmatprep.subr.bf16.mxu0 %v1751
    %2499 = vmatpush1.bf16.msra.mxu0 %v1750
    %2500 = vmatprep.subr.bf16.mxu0 %v1755
    %2501 = vmatpush1.bf16.msra.mxu0 %v1754
    %2502 = vmatprep.subr.bf16.mxu0 %v1759
    %2503 = vmatpush1.bf16.msra.mxu0 %v1758
    %2504 = vmatprep.subr.bf16.mxu0 %v1763
    %2505 = vmatpush1.bf16.msra.mxu0 %v1762
    %2506 = vmatprep.subr.bf16.mxu0 %v1767
    %2507 = vmatpush1.bf16.msra.mxu0 %v1766
    %2508 = vmatprep.mubr.bf16.mxu0 %v409
    %2509 = vmatmul.mubr.bf16.gmra.mrb[0].mxu0 %v408
    %v2510 = vpop.f32.mrb[0].mxu0
    %v2511 = vadd.f32 %v2318, %v2510
    %v2512 = vpop.f32.mrb[0].mxu0
    %v2513 = vadd.f32 %v2320, %v2512
    %v2514 = vpop.f32.mrb[0].mxu0
    %v2515 = vadd.f32 %v2322, %v2514
    %v2516 = vpop.f32.mrb[0].mxu0
    %v2517 = vadd.f32 %v2324, %v2516
    %2518 = vmatprep.mubr.bf16.mxu0 %v417
    %2519 = vmatmul.mubr.bf16.gmra.mrb[0].mxu0 %v416
    %v2520 = vpop.f32.mrb[0].mxu0
    %v2521 = vadd.f32 %v2328, %v2520
    %v2522 = vpop.f32.mrb[0].mxu0
    %v2523 = vadd.f32 %v2330, %v2522
    %v2524 = vpop.f32.mrb[0].mxu0
    %v2525 = vadd.f32 %v2332, %v2524
    %v2526 = vpop.f32.mrb[0].mxu0
    %v2527 = vadd.f32 %v2334, %v2526
    %2528 = vmatprep.mubr.bf16.mxu0 %v425
    %2529 = vmatmul.mubr.bf16.gmra.mrb[0].mxu0 %v424
    %v2530 = vpop.f32.mrb[0].mxu0
    %v2531 = vadd.f32 %v2338, %v2530
    %v2532 = vpop.f32.mrb[0].mxu0
    %v2533 = vadd.f32 %v2340, %v2532
    %v2534 = vpop.f32.mrb[0].mxu0
    %v2535 = vadd.f32 %v2342, %v2534
    %v2536 = vpop.f32.mrb[0].mxu0
    %v2537 = vadd.f32 %v2344, %v2536
    %2538 = vmatprep.mubr.bf16.mxu0 %v433
    %2539 = vmatmul.mubr.bf16.gmra.mrb[0].mxu0 %v432
    %v2540 = vpop.f32.mrb[0].mxu0
    %v2541 = vadd.f32 %v2348, %v2540
    %v2542 = vpop.f32.mrb[0].mxu0
    %v2543 = vadd.f32 %v2350, %v2542
    %v2544 = vpop.f32.mrb[0].mxu0
    %v2545 = vadd.f32 %v2352, %v2544
    %v2546 = vpop.f32.mrb[0].mxu0
    %v2547 = vadd.f32 %v2354, %v2546
    %2548 = vmatprep.mubr.bf16.mxu0 %v441
    %2549 = vmatmul.mubr.bf16.gmra.mrb[0].mxu0 %v440
    %v2550 = vpop.f32.mrb[0].mxu0
    %v2551 = vadd.f32 %v2358, %v2550
    %v2552 = vpop.f32.mrb[0].mxu0
    %v2553 = vadd.f32 %v2360, %v2552
    %v2554 = vpop.f32.mrb[0].mxu0
    %v2555 = vadd.f32 %v2362, %v2554
    %v2556 = vpop.f32.mrb[0].mxu0
    %v2557 = vadd.f32 %v2364, %v2556
    %2558 = vmatprep.mubr.bf16.mxu0 %v449
    %2559 = vmatmul.mubr.bf16.gmra.mrb[0].mxu0 %v448
    %v2560 = vpop.f32.mrb[0].mxu0
    %v2561 = vadd.f32 %v2368, %v2560
    %v2562 = vpop.f32.mrb[0].mxu0
    %v2563 = vadd.f32 %v2370, %v2562
    %v2564 = vpop.f32.mrb[0].mxu0
    %v2565 = vadd.f32 %v2372, %v2564
    %v2566 = vpop.f32.mrb[0].mxu0
    %v2567 = vadd.f32 %v2374, %v2566
    %2568 = vmatprep.mubr.bf16.mxu0 %v457
    %2569 = vmatmul.mubr.bf16.gmra.mrb[0].mxu0 %v456
    %v2570 = vpop.f32.mrb[0].mxu0
    %v2571 = vadd.f32 %v2378, %v2570
    %v2572 = vpop.f32.mrb[0].mxu0
    %v2573 = vadd.f32 %v2380, %v2572
    %v2574 = vpop.f32.mrb[0].mxu0
    %v2575 = vadd.f32 %v2382, %v2574
    %v2576 = vpop.f32.mrb[0].mxu0
    %v2577 = vadd.f32 %v2384, %v2576
    %2578 = vmatprep.mubr.bf16.mxu0 %v465
    %2579 = vmatmul.mubr.bf16.gmra.mrb[0].mxu0 %v464
    %v2580 = vpop.f32.mrb[0].mxu0
    %v2581 = vadd.f32 %v2388, %v2580
    %v2582 = vpop.f32.mrb[0].mxu0
    %v2583 = vadd.f32 %v2390, %v2582
    %v2584 = vpop.f32.mrb[0].mxu0
    %v2585 = vadd.f32 %v2392, %v2584
    %v2586 = vpop.f32.mrb[0].mxu0
    %v2587 = vadd.f32 %v2394, %v2586
    %2588 = vmatprep.mubr.bf16.mxu0 %v473
    %2589 = vmatmul.mubr.bf16.gmra.mrb[0].mxu0 %v472
    %v2590 = vpop.f32.mrb[0].mxu0
    %v2591 = vadd.f32 %v2398, %v2590
    %v2592 = vpop.f32.mrb[0].mxu0
    %v2593 = vadd.f32 %v2400, %v2592
    %v2594 = vpop.f32.mrb[0].mxu0
    %v2595 = vadd.f32 %v2402, %v2594
    %v2596 = vpop.f32.mrb[0].mxu0
    %v2597 = vadd.f32 %v2404, %v2596
    %2598 = vmatprep.mubr.bf16.mxu0 %v481
    %2599 = vmatmul.mubr.bf16.gmra.mrb[0].mxu0 %v480
    %v2600 = vpop.f32.mrb[0].mxu0
    %v2601 = vadd.f32 %v2408, %v2600
    %v2602 = vpop.f32.mrb[0].mxu0
    %v2603 = vadd.f32 %v2410, %v2602
    %v2604 = vpop.f32.mrb[0].mxu0
    %v2605 = vadd.f32 %v2412, %v2604
    %v2606 = vpop.f32.mrb[0].mxu0
    %v2607 = vadd.f32 %v2414, %v2606
    %2608 = vmatprep.mubr.bf16.mxu0 %v489
    %2609 = vmatmul.mubr.bf16.gmra.mrb[0].mxu0 %v488
    %v2610 = vpop.f32.mrb[0].mxu0
    %v2611 = vadd.f32 %v2418, %v2610
    %v2612 = vpop.f32.mrb[0].mxu0
    %v2613 = vadd.f32 %v2420, %v2612
    %v2614 = vpop.f32.mrb[0].mxu0
    %v2615 = vadd.f32 %v2422, %v2614
    %v2616 = vpop.f32.mrb[0].mxu0
    %v2617 = vadd.f32 %v2424, %v2616
    %2618 = vmatprep.mubr.bf16.mxu0 %v497
    %2619 = vmatmul.mubr.bf16.gmra.mrb[0].mxu0 %v496
    %v2620 = vpop.f32.mrb[0].mxu0
    %v2621 = vadd.f32 %v2428, %v2620
    %v2622 = vpop.f32.mrb[0].mxu0
    %v2623 = vadd.f32 %v2430, %v2622
    %v2624 = vpop.f32.mrb[0].mxu0
    %v2625 = vadd.f32 %v2432, %v2624
    %v2626 = vpop.f32.mrb[0].mxu0
    %v2627 = vadd.f32 %v2434, %v2626
    %2628 = vmatprep.mubr.bf16.mxu0 %v505
    %2629 = vmatmul.mubr.bf16.gmra.mrb[0].mxu0 %v504
    %v2630 = vpop.f32.mrb[0].mxu0
    %v2631 = vadd.f32 %v2438, %v2630
    %v2632 = vpop.f32.mrb[0].mxu0
    %v2633 = vadd.f32 %v2440, %v2632
    %v2634 = vpop.f32.mrb[0].mxu0
    %v2635 = vadd.f32 %v2442, %v2634
    %v2636 = vpop.f32.mrb[0].mxu0
    %v2637 = vadd.f32 %v2444, %v2636
    %2638 = vmatprep.mubr.bf16.mxu0 %v513
    %2639 = vmatmul.mubr.bf16.gmra.mrb[0].mxu0 %v512
    %v2640 = vpop.f32.mrb[0].mxu0
    %v2641 = vadd.f32 %v2448, %v2640
    %v2642 = vpop.f32.mrb[0].mxu0
    %v2643 = vadd.f32 %v2450, %v2642
    %v2644 = vpop.f32.mrb[0].mxu0
    %v2645 = vadd.f32 %v2452, %v2644
    %v2646 = vpop.f32.mrb[0].mxu0
    %v2647 = vadd.f32 %v2454, %v2646
    %2648 = vmatprep.mubr.bf16.mxu0 %v521
    %2649 = vmatmul.mubr.bf16.gmra.mrb[0].mxu0 %v520
    %v2650 = vpop.f32.mrb[0].mxu0
    %v2651 = vadd.f32 %v2458, %v2650
    %v2652 = vpop.f32.mrb[0].mxu0
    %v2653 = vadd.f32 %v2460, %v2652
    %v2654 = vpop.f32.mrb[0].mxu0
    %v2655 = vadd.f32 %v2462, %v2654
    %v2656 = vpop.f32.mrb[0].mxu0
    %v2657 = vadd.f32 %v2464, %v2656
    %2658 = vmatprep.mubr.bf16.mxu0 %v529
    %2659 = vmatmul.mubr.bf16.gmra.mrb[0].mxu0 %v528
    %v2660 = vpop.f32.mrb[0].mxu0
    %v2661 = vadd.f32 %v2468, %v2660
    %v2662 = vpop.f32.mrb[0].mxu0
    %v2663 = vadd.f32 %v2470, %v2662
    %v2664 = vpop.f32.mrb[0].mxu0
    %v2665 = vadd.f32 %v2472, %v2664
    %v2666 = vpop.f32.mrb[0].mxu0
    %v2667 = vadd.f32 %v2474, %v2666
    %2668 = vdwg.mxu0
    %2669 = vmatprep.subr.bf16.mxu0 %v1771
    %2670 = vmatpush1.bf16.msra.mxu0 %v1770
    %2671 = vmatprep.subr.bf16.mxu0 %v1775
    %2672 = vmatpush1.bf16.msra.mxu0 %v1774
    %2673 = vmatprep.subr.bf16.mxu0 %v1779
    %2674 = vmatpush1.bf16.msra.mxu0 %v1778
    %2675 = vmatprep.subr.bf16.mxu0 %v1783
    %2676 = vmatpush1.bf16.msra.mxu0 %v1782
    %2677 = vmatprep.subr.bf16.mxu0 %v1787
    %2678 = vmatpush1.bf16.msra.mxu0 %v1786
    %2679 = vmatprep.subr.bf16.mxu0 %v1791
    %2680 = vmatpush1.bf16.msra.mxu0 %v1790
    %2681 = vmatprep.subr.bf16.mxu0 %v1795
    %2682 = vmatpush1.bf16.msra.mxu0 %v1794
    %2683 = vmatprep.subr.bf16.mxu0 %v1799
    %2684 = vmatpush1.bf16.msra.mxu0 %v1798
    %2685 = vmatprep.subr.bf16.mxu0 %v1803
    %2686 = vmatpush1.bf16.msra.mxu0 %v1802
    %2687 = vmatprep.subr.bf16.mxu0 %v1807
    %2688 = vmatpush1.bf16.msra.mxu0 %v1806
    %2689 = vmatprep.subr.bf16.mxu0 %v1811
    %2690 = vmatpush1.bf16.msra.mxu0 %v1810
    %2691 = vmatprep.subr.bf16.mxu0 %v1815
    %2692 = vmatpush1.bf16.msra.mxu0 %v1814
    %2693 = vmatprep.subr.bf16.mxu0 %v1819
    %2694 = vmatpush1.bf16.msra.mxu0 %v1818
    %2695 = vmatprep.subr.bf16.mxu0 %v1823
    %2696 = vmatpush1.bf16.msra.mxu0 %v1822
    %2697 = vmatprep.subr.bf16.mxu0 %v1827
    %2698 = vmatpush1.bf16.msra.mxu0 %v1826
    %2699 = vmatprep.subr.bf16.mxu0 %v1831
    %2700 = vmatpush1.bf16.msra.mxu0 %v1830
    %2701 = vmatprep.mubr.bf16.mxu0 %v411
    %2702 = vmatmul.mubr.bf16.gmra.mrb[0].mxu0 %v410
    %v2703 = vpop.f32.mrb[0].mxu0
    %v2704 = vadd.f32 %v2511, %v2703
    %v2705 = vpop.f32.mrb[0].mxu0
    %v2706 = vadd.f32 %v2513, %v2705
    %v2707 = vpop.f32.mrb[0].mxu0
    %v2708 = vadd.f32 %v2515, %v2707
    %v2709 = vpop.f32.mrb[0].mxu0
    %v2710 = vadd.f32 %v2517, %v2709
    %2711 = vmatprep.mubr.bf16.mxu0 %v419
    %2712 = vmatmul.mubr.bf16.gmra.mrb[0].mxu0 %v418
    %v2713 = vpop.f32.mrb[0].mxu0
    %v2714 = vadd.f32 %v2521, %v2713
    %v2715 = vpop.f32.mrb[0].mxu0
    %v2716 = vadd.f32 %v2523, %v2715
    %v2717 = vpop.f32.mrb[0].mxu0
    %v2718 = vadd.f32 %v2525, %v2717
    %v2719 = vpop.f32.mrb[0].mxu0
    %v2720 = vadd.f32 %v2527, %v2719
    %2721 = vmatprep.mubr.bf16.mxu0 %v427
    %2722 = vmatmul.mubr.bf16.gmra.mrb[0].mxu0 %v426
    %v2723 = vpop.f32.mrb[0].mxu0
    %v2724 = vadd.f32 %v2531, %v2723
    %v2725 = vpop.f32.mrb[0].mxu0
    %v2726 = vadd.f32 %v2533, %v2725
    %v2727 = vpop.f32.mrb[0].mxu0
    %v2728 = vadd.f32 %v2535, %v2727
    %v2729 = vpop.f32.mrb[0].mxu0
    %v2730 = vadd.f32 %v2537, %v2729
    %2731 = vmatprep.mubr.bf16.mxu0 %v435
    %2732 = vmatmul.mubr.bf16.gmra.mrb[0].mxu0 %v434
    %v2733 = vpop.f32.mrb[0].mxu0
    %v2734 = vadd.f32 %v2541, %v2733
    %v2735 = vpop.f32.mrb[0].mxu0
    %v2736 = vadd.f32 %v2543, %v2735
    %v2737 = vpop.f32.mrb[0].mxu0
    %v2738 = vadd.f32 %v2545, %v2737
    %v2739 = vpop.f32.mrb[0].mxu0
    %v2740 = vadd.f32 %v2547, %v2739
    %2741 = vmatprep.mubr.bf16.mxu0 %v443
    %2742 = vmatmul.mubr.bf16.gmra.mrb[0].mxu0 %v442
    %v2743 = vpop.f32.mrb[0].mxu0
    %v2744 = vadd.f32 %v2551, %v2743
    %v2745 = vpop.f32.mrb[0].mxu0
    %v2746 = vadd.f32 %v2553, %v2745
    %v2747 = vpop.f32.mrb[0].mxu0
    %v2748 = vadd.f32 %v2555, %v2747
    %v2749 = vpop.f32.mrb[0].mxu0
    %v2750 = vadd.f32 %v2557, %v2749
    %2751 = vmatprep.mubr.bf16.mxu0 %v451
    %2752 = vmatmul.mubr.bf16.gmra.mrb[0].mxu0 %v450
    %v2753 = vpop.f32.mrb[0].mxu0
    %v2754 = vadd.f32 %v2561, %v2753
    %v2755 = vpop.f32.mrb[0].mxu0
    %v2756 = vadd.f32 %v2563, %v2755
    %v2757 = vpop.f32.mrb[0].mxu0
    %v2758 = vadd.f32 %v2565, %v2757
    %v2759 = vpop.f32.mrb[0].mxu0
    %v2760 = vadd.f32 %v2567, %v2759
    %2761 = vmatprep.mubr.bf16.mxu0 %v459
    %2762 = vmatmul.mubr.bf16.gmra.mrb[0].mxu0 %v458
    %v2763 = vpop.f32.mrb[0].mxu0
    %v2764 = vadd.f32 %v2571, %v2763
    %v2765 = vpop.f32.mrb[0].mxu0
    %v2766 = vadd.f32 %v2573, %v2765
    %v2767 = vpop.f32.mrb[0].mxu0
    %v2768 = vadd.f32 %v2575, %v2767
    %v2769 = vpop.f32.mrb[0].mxu0
    %v2770 = vadd.f32 %v2577, %v2769
    %2771 = vmatprep.mubr.bf16.mxu0 %v467
    %2772 = vmatmul.mubr.bf16.gmra.mrb[0].mxu0 %v466
    %v2773 = vpop.f32.mrb[0].mxu0
    %v2774 = vadd.f32 %v2581, %v2773
    %v2775 = vpop.f32.mrb[0].mxu0
    %v2776 = vadd.f32 %v2583, %v2775
    %v2777 = vpop.f32.mrb[0].mxu0
    %v2778 = vadd.f32 %v2585, %v2777
    %v2779 = vpop.f32.mrb[0].mxu0
    %v2780 = vadd.f32 %v2587, %v2779
    %2781 = vmatprep.mubr.bf16.mxu0 %v475
    %2782 = vmatmul.mubr.bf16.gmra.mrb[0].mxu0 %v474
    %v2783 = vpop.f32.mrb[0].mxu0
    %v2784 = vadd.f32 %v2591, %v2783
    %v2785 = vpop.f32.mrb[0].mxu0
    %v2786 = vadd.f32 %v2593, %v2785
    %v2787 = vpop.f32.mrb[0].mxu0
    %v2788 = vadd.f32 %v2595, %v2787
    %v2789 = vpop.f32.mrb[0].mxu0
    %v2790 = vadd.f32 %v2597, %v2789
    %2791 = vmatprep.mubr.bf16.mxu0 %v483
    %2792 = vmatmul.mubr.bf16.gmra.mrb[0].mxu0 %v482
    %v2793 = vpop.f32.mrb[0].mxu0
    %v2794 = vadd.f32 %v2601, %v2793
    %v2795 = vpop.f32.mrb[0].mxu0
    %v2796 = vadd.f32 %v2603, %v2795
    %v2797 = vpop.f32.mrb[0].mxu0
    %v2798 = vadd.f32 %v2605, %v2797
    %v2799 = vpop.f32.mrb[0].mxu0
    %v2800 = vadd.f32 %v2607, %v2799
    %2801 = vmatprep.mubr.bf16.mxu0 %v491
    %2802 = vmatmul.mubr.bf16.gmra.mrb[0].mxu0 %v490
    %v2803 = vpop.f32.mrb[0].mxu0
    %v2804 = vadd.f32 %v2611, %v2803
    %v2805 = vpop.f32.mrb[0].mxu0
    %v2806 = vadd.f32 %v2613, %v2805
    %v2807 = vpop.f32.mrb[0].mxu0
    %v2808 = vadd.f32 %v2615, %v2807
    %v2809 = vpop.f32.mrb[0].mxu0
    %v2810 = vadd.f32 %v2617, %v2809
    %2811 = vmatprep.mubr.bf16.mxu0 %v499
    %2812 = vmatmul.mubr.bf16.gmra.mrb[0].mxu0 %v498
    %v2813 = vpop.f32.mrb[0].mxu0
    %v2814 = vadd.f32 %v2621, %v2813
    %v2815 = vpop.f32.mrb[0].mxu0
    %v2816 = vadd.f32 %v2623, %v2815
    %v2817 = vpop.f32.mrb[0].mxu0
    %v2818 = vadd.f32 %v2625, %v2817
    %v2819 = vpop.f32.mrb[0].mxu0
    %v2820 = vadd.f32 %v2627, %v2819
    %2821 = vmatprep.mubr.bf16.mxu0 %v507
    %2822 = vmatmul.mubr.bf16.gmra.mrb[0].mxu0 %v506
    %v2823 = vpop.f32.mrb[0].mxu0
    %v2824 = vadd.f32 %v2631, %v2823
    %v2825 = vpop.f32.mrb[0].mxu0
    %v2826 = vadd.f32 %v2633, %v2825
    %v2827 = vpop.f32.mrb[0].mxu0
    %v2828 = vadd.f32 %v2635, %v2827
    %v2829 = vpop.f32.mrb[0].mxu0
    %v2830 = vadd.f32 %v2637, %v2829
    %2831 = vmatprep.mubr.bf16.mxu0 %v515
    %2832 = vmatmul.mubr.bf16.gmra.mrb[0].mxu0 %v514
    %v2833 = vpop.f32.mrb[0].mxu0
    %v2834 = vadd.f32 %v2641, %v2833
    %v2835 = vpop.f32.mrb[0].mxu0
    %v2836 = vadd.f32 %v2643, %v2835
    %v2837 = vpop.f32.mrb[0].mxu0
    %v2838 = vadd.f32 %v2645, %v2837
    %v2839 = vpop.f32.mrb[0].mxu0
    %v2840 = vadd.f32 %v2647, %v2839
    %2841 = vmatprep.mubr.bf16.mxu0 %v523
    %2842 = vmatmul.mubr.bf16.gmra.mrb[0].mxu0 %v522
    %v2843 = vpop.f32.mrb[0].mxu0
    %v2844 = vadd.f32 %v2651, %v2843
    %v2845 = vpop.f32.mrb[0].mxu0
    %v2846 = vadd.f32 %v2653, %v2845
    %v2847 = vpop.f32.mrb[0].mxu0
    %v2848 = vadd.f32 %v2655, %v2847
    %v2849 = vpop.f32.mrb[0].mxu0
    %v2850 = vadd.f32 %v2657, %v2849
    %2851 = vmatprep.mubr.bf16.mxu0 %v531
    %2852 = vmatmul.mubr.bf16.gmra.mrb[0].mxu0 %v530
    %v2853 = vpop.f32.mrb[0].mxu0
    %v2854 = vadd.f32 %v2661, %v2853
    %v2855 = vpop.f32.mrb[0].mxu0
    %v2856 = vadd.f32 %v2663, %v2855
    %v2857 = vpop.f32.mrb[0].mxu0
    %v2858 = vadd.f32 %v2665, %v2857
    %v2859 = vpop.f32.mrb[0].mxu0
    %v2860 = vadd.f32 %v2667, %v2859
    %2861 = vdwg.mxu0
    %2862 = vmatprep.subr.bf16.mxu0 %v1581
    %2863 = vmatpush1.bf16.msra.mxu0 %v1580
    %2864 = vmatprep.subr.bf16.mxu0 %v1585
    %2865 = vmatpush1.bf16.msra.mxu0 %v1584
    %2866 = vmatprep.subr.bf16.mxu0 %v1589
    %2867 = vmatpush1.bf16.msra.mxu0 %v1588
    %2868 = vmatprep.subr.bf16.mxu0 %v1593
    %2869 = vmatpush1.bf16.msra.mxu0 %v1592
    %2870 = vmatprep.subr.bf16.mxu0 %v1597
    %2871 = vmatpush1.bf16.msra.mxu0 %v1596
    %2872 = vmatprep.subr.bf16.mxu0 %v1601
    %2873 = vmatpush1.bf16.msra.mxu0 %v1600
    %2874 = vmatprep.subr.bf16.mxu0 %v1605
    %2875 = vmatpush1.bf16.msra.mxu0 %v1604
    %2876 = vmatprep.subr.bf16.mxu0 %v1609
    %2877 = vmatpush1.bf16.msra.mxu0 %v1608
    %2878 = vmatprep.subr.bf16.mxu0 %v1613
    %2879 = vmatpush1.bf16.msra.mxu0 %v1612
    %2880 = vmatprep.subr.bf16.mxu0 %v1617
    %2881 = vmatpush1.bf16.msra.mxu0 %v1616
    %2882 = vmatprep.subr.bf16.mxu0 %v1621
    %2883 = vmatpush1.bf16.msra.mxu0 %v1620
    %2884 = vmatprep.subr.bf16.mxu0 %v1625
    %2885 = vmatpush1.bf16.msra.mxu0 %v1624
    %2886 = vmatprep.subr.bf16.mxu0 %v1629
    %2887 = vmatpush1.bf16.msra.mxu0 %v1628
    %2888 = vmatprep.subr.bf16.mxu0 %v1633
    %2889 = vmatpush1.bf16.msra.mxu0 %v1632
    %2890 = vmatprep.subr.bf16.mxu0 %v1637
    %2891 = vmatpush1.bf16.msra.mxu0 %v1636
    %2892 = vmatprep.subr.bf16.mxu0 %v1641
    %2893 = vmatpush1.bf16.msra.mxu0 %v1640
    %2894 = vmatprep.mubr.bf16.mxu0 %v405
    %2895 = vmatmul.mubr.bf16.gmra.mrb[0].mxu0 %v404
    %v2896 = vpop.f32.mrb[0].mxu0
    %v2897 = vadd.f32 %v801, %v2896
    %v2898 = vpop.f32.mrb[0].mxu0
    %v2899 = vadd.f32 %v805, %v2898
    %v2900 = vpop.f32.mrb[0].mxu0
    %v2901 = vadd.f32 %v801, %v2900
    %v2902 = vpop.f32.mrb[0].mxu0
    %v2903 = vadd.f32 %v805, %v2902
    %2904 = vmatprep.mubr.bf16.mxu0 %v413
    %2905 = vmatmul.mubr.bf16.gmra.mrb[0].mxu0 %v412
    %v2906 = vpop.f32.mrb[0].mxu0
    %v2907 = vadd.f32 %v801, %v2906
    %v2908 = vpop.f32.mrb[0].mxu0
    %v2909 = vadd.f32 %v805, %v2908
    %v2910 = vpop.f32.mrb[0].mxu0
    %v2911 = vadd.f32 %v801, %v2910
    %v2912 = vpop.f32.mrb[0].mxu0
    %v2913 = vadd.f32 %v805, %v2912
    %2914 = vmatprep.mubr.bf16.mxu0 %v421
    %2915 = vmatmul.mubr.bf16.gmra.mrb[0].mxu0 %v420
    %v2916 = vpop.f32.mrb[0].mxu0
    %v2917 = vadd.f32 %v801, %v2916
    %v2918 = vpop.f32.mrb[0].mxu0
    %v2919 = vadd.f32 %v805, %v2918
    %v2920 = vpop.f32.mrb[0].mxu0
    %v2921 = vadd.f32 %v801, %v2920
    %v2922 = vpop.f32.mrb[0].mxu0
    %v2923 = vadd.f32 %v805, %v2922
    %2924 = vmatprep.mubr.bf16.mxu0 %v429
    %2925 = vmatmul.mubr.bf16.gmra.mrb[0].mxu0 %v428
    %v2926 = vpop.f32.mrb[0].mxu0
    %v2927 = vadd.f32 %v801, %v2926
    %v2928 = vpop.f32.mrb[0].mxu0
    %v2929 = vadd.f32 %v805, %v2928
    %v2930 = vpop.f32.mrb[0].mxu0
    %v2931 = vadd.f32 %v801, %v2930
    %v2932 = vpop.f32.mrb[0].mxu0
    %v2933 = vadd.f32 %v805, %v2932
    %2934 = vmatprep.mubr.bf16.mxu0 %v437
    %2935 = vmatmul.mubr.bf16.gmra.mrb[0].mxu0 %v436
    %v2936 = vpop.f32.mrb[0].mxu0
    %v2937 = vadd.f32 %v801, %v2936
    %v2938 = vpop.f32.mrb[0].mxu0
    %v2939 = vadd.f32 %v805, %v2938
    %v2940 = vpop.f32.mrb[0].mxu0
    %v2941 = vadd.f32 %v801, %v2940
    %v2942 = vpop.f32.mrb[0].mxu0
    %v2943 = vadd.f32 %v805, %v2942
    %2944 = vmatprep.mubr.bf16.mxu0 %v445
    %2945 = vmatmul.mubr.bf16.gmra.mrb[0].mxu0 %v444
    %v2946 = vpop.f32.mrb[0].mxu0
    %v2947 = vadd.f32 %v801, %v2946
    %v2948 = vpop.f32.mrb[0].mxu0
    %v2949 = vadd.f32 %v805, %v2948
    %v2950 = vpop.f32.mrb[0].mxu0
    %v2951 = vadd.f32 %v801, %v2950
    %v2952 = vpop.f32.mrb[0].mxu0
    %v2953 = vadd.f32 %v805, %v2952
    %2954 = vmatprep.mubr.bf16.mxu0 %v453
    %2955 = vmatmul.mubr.bf16.gmra.mrb[0].mxu0 %v452
    %v2956 = vpop.f32.mrb[0].mxu0
    %v2957 = vadd.f32 %v801, %v2956
    %v2958 = vpop.f32.mrb[0].mxu0
    %v2959 = vadd.f32 %v805, %v2958
    %v2960 = vpop.f32.mrb[0].mxu0
    %v2961 = vadd.f32 %v801, %v2960
    %v2962 = vpop.f32.mrb[0].mxu0
    %v2963 = vadd.f32 %v805, %v2962
    %2964 = vmatprep.mubr.bf16.mxu0 %v461
    %2965 = vmatmul.mubr.bf16.gmra.mrb[0].mxu0 %v460
    %v2966 = vpop.f32.mrb[0].mxu0
    %v2967 = vadd.f32 %v801, %v2966
    %v2968 = vpop.f32.mrb[0].mxu0
    %v2969 = vadd.f32 %v805, %v2968
    %v2970 = vpop.f32.mrb[0].mxu0
    %v2971 = vadd.f32 %v801, %v2970
    %v2972 = vpop.f32.mrb[0].mxu0
    %v2973 = vadd.f32 %v805, %v2972
    %2974 = vmatprep.mubr.bf16.mxu0 %v469
    %2975 = vmatmul.mubr.bf16.gmra.mrb[0].mxu0 %v468
    %v2976 = vpop.f32.mrb[0].mxu0
    %v2977 = vadd.f32 %v801, %v2976
    %v2978 = vpop.f32.mrb[0].mxu0
    %v2979 = vadd.f32 %v805, %v2978
    %v2980 = vpop.f32.mrb[0].mxu0
    %v2981 = vadd.f32 %v801, %v2980
    %v2982 = vpop.f32.mrb[0].mxu0
    %v2983 = vadd.f32 %v805, %v2982
    %2984 = vmatprep.mubr.bf16.mxu0 %v477
    %2985 = vmatmul.mubr.bf16.gmra.mrb[0].mxu0 %v476
    %v2986 = vpop.f32.mrb[0].mxu0
    %v2987 = vadd.f32 %v801, %v2986
    %v2988 = vpop.f32.mrb[0].mxu0
    %v2989 = vadd.f32 %v805, %v2988
    %v2990 = vpop.f32.mrb[0].mxu0
    %v2991 = vadd.f32 %v801, %v2990
    %v2992 = vpop.f32.mrb[0].mxu0
    %v2993 = vadd.f32 %v805, %v2992
    %2994 = vmatprep.mubr.bf16.mxu0 %v485
    %2995 = vmatmul.mubr.bf16.gmra.mrb[0].mxu0 %v484
    %v2996 = vpop.f32.mrb[0].mxu0
    %v2997 = vadd.f32 %v801, %v2996
    %v2998 = vpop.f32.mrb[0].mxu0
    %v2999 = vadd.f32 %v805, %v2998
    %v3000 = vpop.f32.mrb[0].mxu0
    %v3001 = vadd.f32 %v801, %v3000
    %v3002 = vpop.f32.mrb[0].mxu0
    %v3003 = vadd.f32 %v805, %v3002
    %3004 = vmatprep.mubr.bf16.mxu0 %v493
    %3005 = vmatmul.mubr.bf16.gmra.mrb[0].mxu0 %v492
    %v3006 = vpop.f32.mrb[0].mxu0
    %v3007 = vadd.f32 %v801, %v3006
    %v3008 = vpop.f32.mrb[0].mxu0
    %v3009 = vadd.f32 %v805, %v3008
    %v3010 = vpop.f32.mrb[0].mxu0
    %v3011 = vadd.f32 %v801, %v3010
    %v3012 = vpop.f32.mrb[0].mxu0
    %v3013 = vadd.f32 %v805, %v3012
    %3014 = vmatprep.mubr.bf16.mxu0 %v501
    %3015 = vmatmul.mubr.bf16.gmra.mrb[0].mxu0 %v500
    %v3016 = vpop.f32.mrb[0].mxu0
    %v3017 = vadd.f32 %v801, %v3016
    %v3018 = vpop.f32.mrb[0].mxu0
    %v3019 = vadd.f32 %v805, %v3018
    %v3020 = vpop.f32.mrb[0].mxu0
    %v3021 = vadd.f32 %v801, %v3020
    %v3022 = vpop.f32.mrb[0].mxu0
    %v3023 = vadd.f32 %v805, %v3022
    %3024 = vmatprep.mubr.bf16.mxu0 %v509
    %3025 = vmatmul.mubr.bf16.gmra.mrb[0].mxu0 %v508
    %v3026 = vpop.f32.mrb[0].mxu0
    %v3027 = vadd.f32 %v801, %v3026
    %v3028 = vpop.f32.mrb[0].mxu0
    %v3029 = vadd.f32 %v805, %v3028
    %v3030 = vpop.f32.mrb[0].mxu0
    %v3031 = vadd.f32 %v801, %v3030
    %v3032 = vpop.f32.mrb[0].mxu0
    %v3033 = vadd.f32 %v805, %v3032
    %3034 = vmatprep.mubr.bf16.mxu0 %v517
    %3035 = vmatmul.mubr.bf16.gmra.mrb[0].mxu0 %v516
    %v3036 = vpop.f32.mrb[0].mxu0
    %v3037 = vadd.f32 %v801, %v3036
    %v3038 = vpop.f32.mrb[0].mxu0
    %v3039 = vadd.f32 %v805, %v3038
    %v3040 = vpop.f32.mrb[0].mxu0
    %v3041 = vadd.f32 %v801, %v3040
    %v3042 = vpop.f32.mrb[0].mxu0
    %v3043 = vadd.f32 %v805, %v3042
    %3044 = vmatprep.mubr.bf16.mxu0 %v525
    %3045 = vmatmul.mubr.bf16.gmra.mrb[0].mxu0 %v524
    %v3046 = vpop.f32.mrb[0].mxu0
    %v3047 = vadd.f32 %v801, %v3046
    %v3048 = vpop.f32.mrb[0].mxu0
    %v3049 = vadd.f32 %v805, %v3048
    %v3050 = vpop.f32.mrb[0].mxu0
    %v3051 = vadd.f32 %v801, %v3050
    %v3052 = vpop.f32.mrb[0].mxu0
    %v3053 = vadd.f32 %v805, %v3052
    %3054 = vdwg.mxu0
    %3055 = vmatprep.subr.bf16.mxu0 %v1645
    %3056 = vmatpush1.bf16.msra.mxu0 %v1644
    %3057 = vmatprep.subr.bf16.mxu0 %v1649
    %3058 = vmatpush1.bf16.msra.mxu0 %v1648
    %3059 = vmatprep.subr.bf16.mxu0 %v1653
    %3060 = vmatpush1.bf16.msra.mxu0 %v1652
    %3061 = vmatprep.subr.bf16.mxu0 %v1657
    %3062 = vmatpush1.bf16.msra.mxu0 %v1656
    %3063 = vmatprep.subr.bf16.mxu0 %v1661
    %3064 = vmatpush1.bf16.msra.mxu0 %v1660
    %3065 = vmatprep.subr.bf16.mxu0 %v1665
    %3066 = vmatpush1.bf16.msra.mxu0 %v1664
    %3067 = vmatprep.subr.bf16.mxu0 %v1669
    %3068 = vmatpush1.bf16.msra.mxu0 %v1668
    %3069 = vmatprep.subr.bf16.mxu0 %v1673
    %3070 = vmatpush1.bf16.msra.mxu0 %v1672
    %3071 = vmatprep.subr.bf16.mxu0 %v1677
    %3072 = vmatpush1.bf16.msra.mxu0 %v1676
    %3073 = vmatprep.subr.bf16.mxu0 %v1681
    %3074 = vmatpush1.bf16.msra.mxu0 %v1680
    %3075 = vmatprep.subr.bf16.mxu0 %v1685
    %3076 = vmatpush1.bf16.msra.mxu0 %v1684
    %3077 = vmatprep.subr.bf16.mxu0 %v1689
    %3078 = vmatpush1.bf16.msra.mxu0 %v1688
    %3079 = vmatprep.subr.bf16.mxu0 %v1693
    %3080 = vmatpush1.bf16.msra.mxu0 %v1692
    %3081 = vmatprep.subr.bf16.mxu0 %v1697
    %3082 = vmatpush1.bf16.msra.mxu0 %v1696
    %3083 = vmatprep.subr.bf16.mxu0 %v1701
    %3084 = vmatpush1.bf16.msra.mxu0 %v1700
    %3085 = vmatprep.subr.bf16.mxu0 %v1705
    %3086 = vmatpush1.bf16.msra.mxu0 %v1704
    %3087 = vmatprep.mubr.bf16.mxu0 %v407
    %3088 = vmatmul.mubr.bf16.gmra.mrb[0].mxu0 %v406
    %v3089 = vpop.f32.mrb[0].mxu0
    %v3090 = vadd.f32 %v2897, %v3089
    %v3091 = vpop.f32.mrb[0].mxu0
    %v3092 = vadd.f32 %v2899, %v3091
    %v3093 = vpop.f32.mrb[0].mxu0
    %v3094 = vadd.f32 %v2901, %v3093
    %v3095 = vpop.f32.mrb[0].mxu0
    %v3096 = vadd.f32 %v2903, %v3095
    %3097 = vmatprep.mubr.bf16.mxu0 %v415
    %3098 = vmatmul.mubr.bf16.gmra.mrb[0].mxu0 %v414
    %v3099 = vpop.f32.mrb[0].mxu0
    %v3100 = vadd.f32 %v2907, %v3099
    %v3101 = vpop.f32.mrb[0].mxu0
    %v3102 = vadd.f32 %v2909, %v3101
    %v3103 = vpop.f32.mrb[0].mxu0
    %v3104 = vadd.f32 %v2911, %v3103
    %v3105 = vpop.f32.mrb[0].mxu0
    %v3106 = vadd.f32 %v2913, %v3105
    %3107 = vmatprep.mubr.bf16.mxu0 %v423
    %3108 = vmatmul.mubr.bf16.gmra.mrb[0].mxu0 %v422
    %v3109 = vpop.f32.mrb[0].mxu0
    %v3110 = vadd.f32 %v2917, %v3109
    %v3111 = vpop.f32.mrb[0].mxu0
    %v3112 = vadd.f32 %v2919, %v3111
    %v3113 = vpop.f32.mrb[0].mxu0
    %v3114 = vadd.f32 %v2921, %v3113
    %v3115 = vpop.f32.mrb[0].mxu0
    %v3116 = vadd.f32 %v2923, %v3115
    %3117 = vmatprep.mubr.bf16.mxu0 %v431
    %3118 = vmatmul.mubr.bf16.gmra.mrb[0].mxu0 %v430
    %v3119 = vpop.f32.mrb[0].mxu0
    %v3120 = vadd.f32 %v2927, %v3119
    %v3121 = vpop.f32.mrb[0].mxu0
    %v3122 = vadd.f32 %v2929, %v3121
    %v3123 = vpop.f32.mrb[0].mxu0
    %v3124 = vadd.f32 %v2931, %v3123
    %v3125 = vpop.f32.mrb[0].mxu0
    %v3126 = vadd.f32 %v2933, %v3125
    %3127 = vmatprep.mubr.bf16.mxu0 %v439
    %3128 = vmatmul.mubr.bf16.gmra.mrb[0].mxu0 %v438
    %v3129 = vpop.f32.mrb[0].mxu0
    %v3130 = vadd.f32 %v2937, %v3129
    %v3131 = vpop.f32.mrb[0].mxu0
    %v3132 = vadd.f32 %v2939, %v3131
    %v3133 = vpop.f32.mrb[0].mxu0
    %v3134 = vadd.f32 %v2941, %v3133
    %v3135 = vpop.f32.mrb[0].mxu0
    %v3136 = vadd.f32 %v2943, %v3135
    %3137 = vmatprep.mubr.bf16.mxu0 %v447
    %3138 = vmatmul.mubr.bf16.gmra.mrb[0].mxu0 %v446
    %v3139 = vpop.f32.mrb[0].mxu0
    %v3140 = vadd.f32 %v2947, %v3139
    %v3141 = vpop.f32.mrb[0].mxu0
    %v3142 = vadd.f32 %v2949, %v3141
    %v3143 = vpop.f32.mrb[0].mxu0
    %v3144 = vadd.f32 %v2951, %v3143
    %v3145 = vpop.f32.mrb[0].mxu0
    %v3146 = vadd.f32 %v2953, %v3145
    %3147 = vmatprep.mubr.bf16.mxu0 %v455
    %3148 = vmatmul.mubr.bf16.gmra.mrb[0].mxu0 %v454
    %v3149 = vpop.f32.mrb[0].mxu0
    %v3150 = vadd.f32 %v2957, %v3149
    %v3151 = vpop.f32.mrb[0].mxu0
    %v3152 = vadd.f32 %v2959, %v3151
    %v3153 = vpop.f32.mrb[0].mxu0
    %v3154 = vadd.f32 %v2961, %v3153
    %v3155 = vpop.f32.mrb[0].mxu0
    %v3156 = vadd.f32 %v2963, %v3155
    %3157 = vmatprep.mubr.bf16.mxu0 %v463
    %3158 = vmatmul.mubr.bf16.gmra.mrb[0].mxu0 %v462
    %v3159 = vpop.f32.mrb[0].mxu0
    %v3160 = vadd.f32 %v2967, %v3159
    %v3161 = vpop.f32.mrb[0].mxu0
    %v3162 = vadd.f32 %v2969, %v3161
    %v3163 = vpop.f32.mrb[0].mxu0
    %v3164 = vadd.f32 %v2971, %v3163
    %v3165 = vpop.f32.mrb[0].mxu0
    %v3166 = vadd.f32 %v2973, %v3165
    %3167 = vmatprep.mubr.bf16.mxu0 %v471
    %3168 = vmatmul.mubr.bf16.gmra.mrb[0].mxu0 %v470
    %v3169 = vpop.f32.mrb[0].mxu0
    %v3170 = vadd.f32 %v2977, %v3169
    %v3171 = vpop.f32.mrb[0].mxu0
    %v3172 = vadd.f32 %v2979, %v3171
    %v3173 = vpop.f32.mrb[0].mxu0
    %v3174 = vadd.f32 %v2981, %v3173
    %v3175 = vpop.f32.mrb[0].mxu0
    %v3176 = vadd.f32 %v2983, %v3175
    %3177 = vmatprep.mubr.bf16.mxu0 %v479
    %3178 = vmatmul.mubr.bf16.gmra.mrb[0].mxu0 %v478
    %v3179 = vpop.f32.mrb[0].mxu0
    %v3180 = vadd.f32 %v2987, %v3179
    %v3181 = vpop.f32.mrb[0].mxu0
    %v3182 = vadd.f32 %v2989, %v3181
    %v3183 = vpop.f32.mrb[0].mxu0
    %v3184 = vadd.f32 %v2991, %v3183
    %v3185 = vpop.f32.mrb[0].mxu0
    %v3186 = vadd.f32 %v2993, %v3185
    %3187 = vmatprep.mubr.bf16.mxu0 %v487
    %3188 = vmatmul.mubr.bf16.gmra.mrb[0].mxu0 %v486
    %v3189 = vpop.f32.mrb[0].mxu0
    %v3190 = vadd.f32 %v2997, %v3189
    %v3191 = vpop.f32.mrb[0].mxu0
    %v3192 = vadd.f32 %v2999, %v3191
    %v3193 = vpop.f32.mrb[0].mxu0
    %v3194 = vadd.f32 %v3001, %v3193
    %v3195 = vpop.f32.mrb[0].mxu0
    %v3196 = vadd.f32 %v3003, %v3195
    %3197 = vmatprep.mubr.bf16.mxu0 %v495
    %3198 = vmatmul.mubr.bf16.gmra.mrb[0].mxu0 %v494
    %v3199 = vpop.f32.mrb[0].mxu0
    %v3200 = vadd.f32 %v3007, %v3199
    %v3201 = vpop.f32.mrb[0].mxu0
    %v3202 = vadd.f32 %v3009, %v3201
    %v3203 = vpop.f32.mrb[0].mxu0
    %v3204 = vadd.f32 %v3011, %v3203
    %v3205 = vpop.f32.mrb[0].mxu0
    %v3206 = vadd.f32 %v3013, %v3205
    %3207 = vmatprep.mubr.bf16.mxu0 %v503
    %3208 = vmatmul.mubr.bf16.gmra.mrb[0].mxu0 %v502
    %v3209 = vpop.f32.mrb[0].mxu0
    %v3210 = vadd.f32 %v3017, %v3209
    %v3211 = vpop.f32.mrb[0].mxu0
    %v3212 = vadd.f32 %v3019, %v3211
    %v3213 = vpop.f32.mrb[0].mxu0
    %v3214 = vadd.f32 %v3021, %v3213
    %v3215 = vpop.f32.mrb[0].mxu0
    %v3216 = vadd.f32 %v3023, %v3215
    %3217 = vmatprep.mubr.bf16.mxu0 %v511
    %3218 = vmatmul.mubr.bf16.gmra.mrb[0].mxu0 %v510
    %v3219 = vpop.f32.mrb[0].mxu0
    %v3220 = vadd.f32 %v3027, %v3219
    %v3221 = vpop.f32.mrb[0].mxu0
    %v3222 = vadd.f32 %v3029, %v3221
    %v3223 = vpop.f32.mrb[0].mxu0
    %v3224 = vadd.f32 %v3031, %v3223
    %v3225 = vpop.f32.mrb[0].mxu0
    %v3226 = vadd.f32 %v3033, %v3225
    %3227 = vmatprep.mubr.bf16.mxu0 %v519
    %3228 = vmatmul.mubr.bf16.gmra.mrb[0].mxu0 %v518
    %v3229 = vpop.f32.mrb[0].mxu0
    %v3230 = vadd.f32 %v3037, %v3229
    %v3231 = vpop.f32.mrb[0].mxu0
    %v3232 = vadd.f32 %v3039, %v3231
    %v3233 = vpop.f32.mrb[0].mxu0
    %v3234 = vadd.f32 %v3041, %v3233
    %v3235 = vpop.f32.mrb[0].mxu0
    %v3236 = vadd.f32 %v3043, %v3235
    %3237 = vmatprep.mubr.bf16.mxu0 %v527
    %3238 = vmatmul.mubr.bf16.gmra.mrb[0].mxu0 %v526
    %v3239 = vpop.f32.mrb[0].mxu0
    %v3240 = vadd.f32 %v3047, %v3239
    %v3241 = vpop.f32.mrb[0].mxu0
    %v3242 = vadd.f32 %v3049, %v3241
    %v3243 = vpop.f32.mrb[0].mxu0
    %v3244 = vadd.f32 %v3051, %v3243
    %v3245 = vpop.f32.mrb[0].mxu0
    %v3246 = vadd.f32 %v3053, %v3245
    %3247 = vdwg.mxu0
    %3248 = vmatprep.subr.bf16.mxu0 %v1709
    %3249 = vmatpush1.bf16.msra.mxu0 %v1708
    %3250 = vmatprep.subr.bf16.mxu0 %v1713
    %3251 = vmatpush1.bf16.msra.mxu0 %v1712
    %3252 = vmatprep.subr.bf16.mxu0 %v1717
    %3253 = vmatpush1.bf16.msra.mxu0 %v1716
    %3254 = vmatprep.subr.bf16.mxu0 %v1721
    %3255 = vmatpush1.bf16.msra.mxu0 %v1720
    %3256 = vmatprep.subr.bf16.mxu0 %v1725
    %3257 = vmatpush1.bf16.msra.mxu0 %v1724
    %3258 = vmatprep.subr.bf16.mxu0 %v1729
    %3259 = vmatpush1.bf16.msra.mxu0 %v1728
    %3260 = vmatprep.subr.bf16.mxu0 %v1733
    %3261 = vmatpush1.bf16.msra.mxu0 %v1732
    %3262 = vmatprep.subr.bf16.mxu0 %v1737
    %3263 = vmatpush1.bf16.msra.mxu0 %v1736
    %3264 = vmatprep.subr.bf16.mxu0 %v1741
    %3265 = vmatpush1.bf16.msra.mxu0 %v1740
    %3266 = vmatprep.subr.bf16.mxu0 %v1745
    %3267 = vmatpush1.bf16.msra.mxu0 %v1744
    %3268 = vmatprep.subr.bf16.mxu0 %v1749
    %3269 = vmatpush1.bf16.msra.mxu0 %v1748
    %3270 = vmatprep.subr.bf16.mxu0 %v1753
    %3271 = vmatpush1.bf16.msra.mxu0 %v1752
    %3272 = vmatprep.subr.bf16.mxu0 %v1757
    %3273 = vmatpush1.bf16.msra.mxu0 %v1756
    %3274 = vmatprep.subr.bf16.mxu0 %v1761
    %3275 = vmatpush1.bf16.msra.mxu0 %v1760
    %3276 = vmatprep.subr.bf16.mxu0 %v1765
    %3277 = vmatpush1.bf16.msra.mxu0 %v1764
    %3278 = vmatprep.subr.bf16.mxu0 %v1769
    %3279 = vmatpush1.bf16.msra.mxu0 %v1768
    %3280 = vmatprep.mubr.bf16.mxu0 %v409
    %3281 = vmatmul.mubr.bf16.gmra.mrb[0].mxu0 %v408
    %v3282 = vpop.f32.mrb[0].mxu0
    %v3283 = vadd.f32 %v3090, %v3282
    %v3284 = vpop.f32.mrb[0].mxu0
    %v3285 = vadd.f32 %v3092, %v3284
    %v3286 = vpop.f32.mrb[0].mxu0
    %v3287 = vadd.f32 %v3094, %v3286
    %v3288 = vpop.f32.mrb[0].mxu0
    %v3289 = vadd.f32 %v3096, %v3288
    %3290 = vmatprep.mubr.bf16.mxu0 %v417
    %3291 = vmatmul.mubr.bf16.gmra.mrb[0].mxu0 %v416
    %v3292 = vpop.f32.mrb[0].mxu0
    %v3293 = vadd.f32 %v3100, %v3292
    %v3294 = vpop.f32.mrb[0].mxu0
    %v3295 = vadd.f32 %v3102, %v3294
    %v3296 = vpop.f32.mrb[0].mxu0
    %v3297 = vadd.f32 %v3104, %v3296
    %v3298 = vpop.f32.mrb[0].mxu0
    %v3299 = vadd.f32 %v3106, %v3298
    %3300 = vmatprep.mubr.bf16.mxu0 %v425
    %3301 = vmatmul.mubr.bf16.gmra.mrb[0].mxu0 %v424
    %v3302 = vpop.f32.mrb[0].mxu0
    %v3303 = vadd.f32 %v3110, %v3302
    %v3304 = vpop.f32.mrb[0].mxu0
    %v3305 = vadd.f32 %v3112, %v3304
    %v3306 = vpop.f32.mrb[0].mxu0
    %v3307 = vadd.f32 %v3114, %v3306
    %v3308 = vpop.f32.mrb[0].mxu0
    %v3309 = vadd.f32 %v3116, %v3308
    %3310 = vmatprep.mubr.bf16.mxu0 %v433
    %3311 = vmatmul.mubr.bf16.gmra.mrb[0].mxu0 %v432
    %v3312 = vpop.f32.mrb[0].mxu0
    %v3313 = vadd.f32 %v3120, %v3312
    %v3314 = vpop.f32.mrb[0].mxu0
    %v3315 = vadd.f32 %v3122, %v3314
    %v3316 = vpop.f32.mrb[0].mxu0
    %v3317 = vadd.f32 %v3124, %v3316
    %v3318 = vpop.f32.mrb[0].mxu0
    %v3319 = vadd.f32 %v3126, %v3318
    %3320 = vmatprep.mubr.bf16.mxu0 %v441
    %3321 = vmatmul.mubr.bf16.gmra.mrb[0].mxu0 %v440
    %v3322 = vpop.f32.mrb[0].mxu0
    %v3323 = vadd.f32 %v3130, %v3322
    %v3324 = vpop.f32.mrb[0].mxu0
    %v3325 = vadd.f32 %v3132, %v3324
    %v3326 = vpop.f32.mrb[0].mxu0
    %v3327 = vadd.f32 %v3134, %v3326
    %v3328 = vpop.f32.mrb[0].mxu0
    %v3329 = vadd.f32 %v3136, %v3328
    %3330 = vmatprep.mubr.bf16.mxu0 %v449
    %3331 = vmatmul.mubr.bf16.gmra.mrb[0].mxu0 %v448
    %v3332 = vpop.f32.mrb[0].mxu0
    %v3333 = vadd.f32 %v3140, %v3332
    %v3334 = vpop.f32.mrb[0].mxu0
    %v3335 = vadd.f32 %v3142, %v3334
    %v3336 = vpop.f32.mrb[0].mxu0
    %v3337 = vadd.f32 %v3144, %v3336
    %v3338 = vpop.f32.mrb[0].mxu0
    %v3339 = vadd.f32 %v3146, %v3338
    %3340 = vmatprep.mubr.bf16.mxu0 %v457
    %3341 = vmatmul.mubr.bf16.gmra.mrb[0].mxu0 %v456
    %v3342 = vpop.f32.mrb[0].mxu0
    %v3343 = vadd.f32 %v3150, %v3342
    %v3344 = vpop.f32.mrb[0].mxu0
    %v3345 = vadd.f32 %v3152, %v3344
    %v3346 = vpop.f32.mrb[0].mxu0
    %v3347 = vadd.f32 %v3154, %v3346
    %v3348 = vpop.f32.mrb[0].mxu0
    %v3349 = vadd.f32 %v3156, %v3348
    %3350 = vmatprep.mubr.bf16.mxu0 %v465
    %3351 = vmatmul.mubr.bf16.gmra.mrb[0].mxu0 %v464
    %v3352 = vpop.f32.mrb[0].mxu0
    %v3353 = vadd.f32 %v3160, %v3352
    %v3354 = vpop.f32.mrb[0].mxu0
    %v3355 = vadd.f32 %v3162, %v3354
    %v3356 = vpop.f32.mrb[0].mxu0
    %v3357 = vadd.f32 %v3164, %v3356
    %v3358 = vpop.f32.mrb[0].mxu0
    %v3359 = vadd.f32 %v3166, %v3358
    %3360 = vmatprep.mubr.bf16.mxu0 %v473
    %3361 = vmatmul.mubr.bf16.gmra.mrb[0].mxu0 %v472
    %v3362 = vpop.f32.mrb[0].mxu0
    %v3363 = vadd.f32 %v3170, %v3362
    %v3364 = vpop.f32.mrb[0].mxu0
    %v3365 = vadd.f32 %v3172, %v3364
    %v3366 = vpop.f32.mrb[0].mxu0
    %v3367 = vadd.f32 %v3174, %v3366
    %v3368 = vpop.f32.mrb[0].mxu0
    %v3369 = vadd.f32 %v3176, %v3368
    %3370 = vmatprep.mubr.bf16.mxu0 %v481
    %3371 = vmatmul.mubr.bf16.gmra.mrb[0].mxu0 %v480
    %v3372 = vpop.f32.mrb[0].mxu0
    %v3373 = vadd.f32 %v3180, %v3372
    %v3374 = vpop.f32.mrb[0].mxu0
    %v3375 = vadd.f32 %v3182, %v3374
    %v3376 = vpop.f32.mrb[0].mxu0
    %v3377 = vadd.f32 %v3184, %v3376
    %v3378 = vpop.f32.mrb[0].mxu0
    %v3379 = vadd.f32 %v3186, %v3378
    %3380 = vmatprep.mubr.bf16.mxu0 %v489
    %3381 = vmatmul.mubr.bf16.gmra.mrb[0].mxu0 %v488
    %v3382 = vpop.f32.mrb[0].mxu0
    %v3383 = vadd.f32 %v3190, %v3382
    %v3384 = vpop.f32.mrb[0].mxu0
    %v3385 = vadd.f32 %v3192, %v3384
    %v3386 = vpop.f32.mrb[0].mxu0
    %v3387 = vadd.f32 %v3194, %v3386
    %v3388 = vpop.f32.mrb[0].mxu0
    %v3389 = vadd.f32 %v3196, %v3388
    %3390 = vmatprep.mubr.bf16.mxu0 %v497
    %3391 = vmatmul.mubr.bf16.gmra.mrb[0].mxu0 %v496
    %v3392 = vpop.f32.mrb[0].mxu0
    %v3393 = vadd.f32 %v3200, %v3392
    %v3394 = vpop.f32.mrb[0].mxu0
    %v3395 = vadd.f32 %v3202, %v3394
    %v3396 = vpop.f32.mrb[0].mxu0
    %v3397 = vadd.f32 %v3204, %v3396
    %v3398 = vpop.f32.mrb[0].mxu0
    %v3399 = vadd.f32 %v3206, %v3398
    %3400 = vmatprep.mubr.bf16.mxu0 %v505
    %3401 = vmatmul.mubr.bf16.gmra.mrb[0].mxu0 %v504
    %v3402 = vpop.f32.mrb[0].mxu0
    %v3403 = vadd.f32 %v3210, %v3402
    %v3404 = vpop.f32.mrb[0].mxu0
    %v3405 = vadd.f32 %v3212, %v3404
    %v3406 = vpop.f32.mrb[0].mxu0
    %v3407 = vadd.f32 %v3214, %v3406
    %v3408 = vpop.f32.mrb[0].mxu0
    %v3409 = vadd.f32 %v3216, %v3408
    %3410 = vmatprep.mubr.bf16.mxu0 %v513
    %3411 = vmatmul.mubr.bf16.gmra.mrb[0].mxu0 %v512
    %v3412 = vpop.f32.mrb[0].mxu0
    %v3413 = vadd.f32 %v3220, %v3412
    %v3414 = vpop.f32.mrb[0].mxu0
    %v3415 = vadd.f32 %v3222, %v3414
    %v3416 = vpop.f32.mrb[0].mxu0
    %v3417 = vadd.f32 %v3224, %v3416
    %v3418 = vpop.f32.mrb[0].mxu0
    %v3419 = vadd.f32 %v3226, %v3418
    %3420 = vmatprep.mubr.bf16.mxu0 %v521
    %3421 = vmatmul.mubr.bf16.gmra.mrb[0].mxu0 %v520
    %v3422 = vpop.f32.mrb[0].mxu0
    %v3423 = vadd.f32 %v3230, %v3422
    %v3424 = vpop.f32.mrb[0].mxu0
    %v3425 = vadd.f32 %v3232, %v3424
    %v3426 = vpop.f32.mrb[0].mxu0
    %v3427 = vadd.f32 %v3234, %v3426
    %v3428 = vpop.f32.mrb[0].mxu0
    %v3429 = vadd.f32 %v3236, %v3428
    %3430 = vmatprep.mubr.bf16.mxu0 %v529
    %3431 = vmatmul.mubr.bf16.gmra.mrb[0].mxu0 %v528
    %v3432 = vpop.f32.mrb[0].mxu0
    %v3433 = vadd.f32 %v3240, %v3432
    %v3434 = vpop.f32.mrb[0].mxu0
    %v3435 = vadd.f32 %v3242, %v3434
    %v3436 = vpop.f32.mrb[0].mxu0
    %v3437 = vadd.f32 %v3244, %v3436
    %v3438 = vpop.f32.mrb[0].mxu0
    %v3439 = vadd.f32 %v3246, %v3438
    %3440 = vdwg.mxu0
    %3441 = vmatprep.subr.bf16.mxu0 %v1773
    %3442 = vmatpush1.bf16.msra.mxu0 %v1772
    %3443 = vmatprep.subr.bf16.mxu0 %v1777
    %3444 = vmatpush1.bf16.msra.mxu0 %v1776
    %3445 = vmatprep.subr.bf16.mxu0 %v1781
    %3446 = vmatpush1.bf16.msra.mxu0 %v1780
    %3447 = vmatprep.subr.bf16.mxu0 %v1785
    %3448 = vmatpush1.bf16.msra.mxu0 %v1784
    %3449 = vmatprep.subr.bf16.mxu0 %v1789
    %3450 = vmatpush1.bf16.msra.mxu0 %v1788
    %3451 = vmatprep.subr.bf16.mxu0 %v1793
    %3452 = vmatpush1.bf16.msra.mxu0 %v1792
    %3453 = vmatprep.subr.bf16.mxu0 %v1797
    %3454 = vmatpush1.bf16.msra.mxu0 %v1796
    %3455 = vmatprep.subr.bf16.mxu0 %v1801
    %3456 = vmatpush1.bf16.msra.mxu0 %v1800
    %3457 = vmatprep.subr.bf16.mxu0 %v1805
    %3458 = vmatpush1.bf16.msra.mxu0 %v1804
    %3459 = vmatprep.subr.bf16.mxu0 %v1809
    %3460 = vmatpush1.bf16.msra.mxu0 %v1808
    %3461 = vmatprep.subr.bf16.mxu0 %v1813
    %3462 = vmatpush1.bf16.msra.mxu0 %v1812
    %3463 = vmatprep.subr.bf16.mxu0 %v1817
    %3464 = vmatpush1.bf16.msra.mxu0 %v1816
    %3465 = vmatprep.subr.bf16.mxu0 %v1821
    %3466 = vmatpush1.bf16.msra.mxu0 %v1820
    %3467 = vmatprep.subr.bf16.mxu0 %v1825
    %3468 = vmatpush1.bf16.msra.mxu0 %v1824
    %3469 = vmatprep.subr.bf16.mxu0 %v1829
    %3470 = vmatpush1.bf16.msra.mxu0 %v1828
    %3471 = vmatprep.subr.bf16.mxu0 %v1833
    %3472 = vmatpush1.bf16.msra.mxu0 %v1832
    %3473 = vmatprep.mubr.bf16.mxu0 %v411
    %3474 = vmatmul.mubr.bf16.gmra.mrb[0].mxu0 %v410
    %v3475 = vpop.f32.mrb[0].mxu0
    %v3476 = vadd.f32 %v3283, %v3475
    %v3477 = vpop.f32.mrb[0].mxu0
    %v3478 = vadd.f32 %v3285, %v3477
    %v3479 = vpop.f32.mrb[0].mxu0
    %v3480 = vadd.f32 %v3287, %v3479
    %v3481 = vpop.f32.mrb[0].mxu0
    %v3482 = vadd.f32 %v3289, %v3481
    %3483 = vmatprep.mubr.bf16.mxu0 %v419
    %3484 = vmatmul.mubr.bf16.gmra.mrb[0].mxu0 %v418
    %v3485 = vpop.f32.mrb[0].mxu0
    %v3486 = vadd.f32 %v3293, %v3485
    %v3487 = vpop.f32.mrb[0].mxu0
    %v3488 = vadd.f32 %v3295, %v3487
    %v3489 = vpop.f32.mrb[0].mxu0
    %v3490 = vadd.f32 %v3297, %v3489
    %v3491 = vpop.f32.mrb[0].mxu0
    %v3492 = vadd.f32 %v3299, %v3491
    %3493 = vmatprep.mubr.bf16.mxu0 %v427
    %3494 = vmatmul.mubr.bf16.gmra.mrb[0].mxu0 %v426
    %v3495 = vpop.f32.mrb[0].mxu0
    %v3496 = vadd.f32 %v3303, %v3495
    %v3497 = vpop.f32.mrb[0].mxu0
    %v3498 = vadd.f32 %v3305, %v3497
    %v3499 = vpop.f32.mrb[0].mxu0
    %v3500 = vadd.f32 %v3307, %v3499
    %v3501 = vpop.f32.mrb[0].mxu0
    %v3502 = vadd.f32 %v3309, %v3501
    %3503 = vmatprep.mubr.bf16.mxu0 %v435
    %3504 = vmatmul.mubr.bf16.gmra.mrb[0].mxu0 %v434
    %v3505 = vpop.f32.mrb[0].mxu0
    %v3506 = vadd.f32 %v3313, %v3505
    %v3507 = vpop.f32.mrb[0].mxu0
    %v3508 = vadd.f32 %v3315, %v3507
    %v3509 = vpop.f32.mrb[0].mxu0
    %v3510 = vadd.f32 %v3317, %v3509
    %v3511 = vpop.f32.mrb[0].mxu0
    %v3512 = vadd.f32 %v3319, %v3511
    %3513 = vmatprep.mubr.bf16.mxu0 %v443
    %3514 = vmatmul.mubr.bf16.gmra.mrb[0].mxu0 %v442
    %v3515 = vpop.f32.mrb[0].mxu0
    %v3516 = vadd.f32 %v3323, %v3515
    %v3517 = vpop.f32.mrb[0].mxu0
    %v3518 = vadd.f32 %v3325, %v3517
    %v3519 = vpop.f32.mrb[0].mxu0
    %v3520 = vadd.f32 %v3327, %v3519
    %v3521 = vpop.f32.mrb[0].mxu0
    %v3522 = vadd.f32 %v3329, %v3521
    %3523 = vmatprep.mubr.bf16.mxu0 %v451
    %3524 = vmatmul.mubr.bf16.gmra.mrb[0].mxu0 %v450
    %v3525 = vpop.f32.mrb[0].mxu0
    %v3526 = vadd.f32 %v3333, %v3525
    %v3527 = vpop.f32.mrb[0].mxu0
    %v3528 = vadd.f32 %v3335, %v3527
    %v3529 = vpop.f32.mrb[0].mxu0
    %v3530 = vadd.f32 %v3337, %v3529
    %v3531 = vpop.f32.mrb[0].mxu0
    %v3532 = vadd.f32 %v3339, %v3531
    %3533 = vmatprep.mubr.bf16.mxu0 %v459
    %3534 = vmatmul.mubr.bf16.gmra.mrb[0].mxu0 %v458
    %v3535 = vpop.f32.mrb[0].mxu0
    %v3536 = vadd.f32 %v3343, %v3535
    %v3537 = vpop.f32.mrb[0].mxu0
    %v3538 = vadd.f32 %v3345, %v3537
    %v3539 = vpop.f32.mrb[0].mxu0
    %v3540 = vadd.f32 %v3347, %v3539
    %v3541 = vpop.f32.mrb[0].mxu0
    %v3542 = vadd.f32 %v3349, %v3541
    %3543 = vmatprep.mubr.bf16.mxu0 %v467
    %3544 = vmatmul.mubr.bf16.gmra.mrb[0].mxu0 %v466
    %v3545 = vpop.f32.mrb[0].mxu0
    %v3546 = vadd.f32 %v3353, %v3545
    %v3547 = vpop.f32.mrb[0].mxu0
    %v3548 = vadd.f32 %v3355, %v3547
    %v3549 = vpop.f32.mrb[0].mxu0
    %v3550 = vadd.f32 %v3357, %v3549
    %v3551 = vpop.f32.mrb[0].mxu0
    %v3552 = vadd.f32 %v3359, %v3551
    %3553 = vmatprep.mubr.bf16.mxu0 %v475
    %3554 = vmatmul.mubr.bf16.gmra.mrb[0].mxu0 %v474
    %v3555 = vpop.f32.mrb[0].mxu0
    %v3556 = vadd.f32 %v3363, %v3555
    %v3557 = vpop.f32.mrb[0].mxu0
    %v3558 = vadd.f32 %v3365, %v3557
    %v3559 = vpop.f32.mrb[0].mxu0
    %v3560 = vadd.f32 %v3367, %v3559
    %v3561 = vpop.f32.mrb[0].mxu0
    %v3562 = vadd.f32 %v3369, %v3561
    %3563 = vmatprep.mubr.bf16.mxu0 %v483
    %3564 = vmatmul.mubr.bf16.gmra.mrb[0].mxu0 %v482
    %v3565 = vpop.f32.mrb[0].mxu0
    %v3566 = vadd.f32 %v3373, %v3565
    %v3567 = vpop.f32.mrb[0].mxu0
    %v3568 = vadd.f32 %v3375, %v3567
    %v3569 = vpop.f32.mrb[0].mxu0
    %v3570 = vadd.f32 %v3377, %v3569
    %v3571 = vpop.f32.mrb[0].mxu0
    %v3572 = vadd.f32 %v3379, %v3571
    %3573 = vmatprep.mubr.bf16.mxu0 %v491
    %3574 = vmatmul.mubr.bf16.gmra.mrb[0].mxu0 %v490
    %v3575 = vpop.f32.mrb[0].mxu0
    %v3576 = vadd.f32 %v3383, %v3575
    %v3577 = vpop.f32.mrb[0].mxu0
    %v3578 = vadd.f32 %v3385, %v3577
    %v3579 = vpop.f32.mrb[0].mxu0
    %v3580 = vadd.f32 %v3387, %v3579
    %v3581 = vpop.f32.mrb[0].mxu0
    %v3582 = vadd.f32 %v3389, %v3581
    %3583 = vmatprep.mubr.bf16.mxu0 %v499
    %3584 = vmatmul.mubr.bf16.gmra.mrb[0].mxu0 %v498
    %v3585 = vpop.f32.mrb[0].mxu0
    %v3586 = vadd.f32 %v3393, %v3585
    %v3587 = vpop.f32.mrb[0].mxu0
    %v3588 = vadd.f32 %v3395, %v3587
    %v3589 = vpop.f32.mrb[0].mxu0
    %v3590 = vadd.f32 %v3397, %v3589
    %v3591 = vpop.f32.mrb[0].mxu0
    %v3592 = vadd.f32 %v3399, %v3591
    %3593 = vmatprep.mubr.bf16.mxu0 %v507
    %3594 = vmatmul.mubr.bf16.gmra.mrb[0].mxu0 %v506
    %v3595 = vpop.f32.mrb[0].mxu0
    %v3596 = vadd.f32 %v3403, %v3595
    %v3597 = vpop.f32.mrb[0].mxu0
    %v3598 = vadd.f32 %v3405, %v3597
    %v3599 = vpop.f32.mrb[0].mxu0
    %v3600 = vadd.f32 %v3407, %v3599
    %v3601 = vpop.f32.mrb[0].mxu0
    %v3602 = vadd.f32 %v3409, %v3601
    %3603 = vmatprep.mubr.bf16.mxu0 %v515
    %3604 = vmatmul.mubr.bf16.gmra.mrb[0].mxu0 %v514
    %v3605 = vpop.f32.mrb[0].mxu0
    %v3606 = vadd.f32 %v3413, %v3605
    %v3607 = vpop.f32.mrb[0].mxu0
    %v3608 = vadd.f32 %v3415, %v3607
    %v3609 = vpop.f32.mrb[0].mxu0
    %v3610 = vadd.f32 %v3417, %v3609
    %v3611 = vpop.f32.mrb[0].mxu0
    %v3612 = vadd.f32 %v3419, %v3611
    %3613 = vmatprep.mubr.bf16.mxu0 %v523
    %3614 = vmatmul.mubr.bf16.gmra.mrb[0].mxu0 %v522
    %v3615 = vpop.f32.mrb[0].mxu0
    %v3616 = vadd.f32 %v3423, %v3615
    %v3617 = vpop.f32.mrb[0].mxu0
    %v3618 = vadd.f32 %v3425, %v3617
    %v3619 = vpop.f32.mrb[0].mxu0
    %v3620 = vadd.f32 %v3427, %v3619
    %v3621 = vpop.f32.mrb[0].mxu0
    %v3622 = vadd.f32 %v3429, %v3621
    %3623 = vmatprep.mubr.bf16.mxu0 %v531
    %3624 = vmatmul.mubr.bf16.gmra.mrb[0].mxu0 %v530
    %v3625 = vpop.f32.mrb[0].mxu0
    %v3626 = vadd.f32 %v3433, %v3625
    %v3627 = vpop.f32.mrb[0].mxu0
    %v3628 = vadd.f32 %v3435, %v3627
    %v3629 = vpop.f32.mrb[0].mxu0
    %v3630 = vadd.f32 %v3437, %v3629
    %v3631 = vpop.f32.mrb[0].mxu0
    %v3632 = vadd.f32 %v3439, %v3631
    %3633 = vdwg.mxu0
    %v3634 = vmax.f32 %v2704, 0.0
    %v3635 = vmax.f32 %v2706, 0.0
    %v3636 = vmax.f32 %v3476, 0.0
    %v3637 = vmax.f32 %v3478, 0.0
    %v3638 = vmax.f32 %v2708, 0.0
    %v3639 = vmax.f32 %v2710, 0.0
    %v3640 = vmax.f32 %v3480, 0.0
    %v3641 = vmax.f32 %v3482, 0.0
    %v3642 = vmax.f32 %v2714, 0.0
    %v3643 = vmax.f32 %v2716, 0.0
    %v3644 = vmax.f32 %v3486, 0.0
    %v3645 = vmax.f32 %v3488, 0.0
    %v3646 = vmax.f32 %v2718, 0.0
    %v3647 = vmax.f32 %v2720, 0.0
    %v3648 = vmax.f32 %v3490, 0.0
    %v3649 = vmax.f32 %v3492, 0.0
    %v3650 = vmax.f32 %v2724, 0.0
    %v3651 = vmax.f32 %v2726, 0.0
    %v3652 = vmax.f32 %v3496, 0.0
    %v3653 = vmax.f32 %v3498, 0.0
    %v3654 = vmax.f32 %v2728, 0.0
    %v3655 = vmax.f32 %v2730, 0.0
    %v3656 = vmax.f32 %v3500, 0.0
    %v3657 = vmax.f32 %v3502, 0.0
    %v3658 = vmax.f32 %v2734, 0.0
    %v3659 = vmax.f32 %v2736, 0.0
    %v3660 = vmax.f32 %v3506, 0.0
    %v3661 = vmax.f32 %v3508, 0.0
    %v3662 = vmax.f32 %v2738, 0.0
    %v3663 = vmax.f32 %v2740, 0.0
    %v3664 = vmax.f32 %v3510, 0.0
    %v3665 = vmax.f32 %v3512, 0.0
    %v3666 = vmax.f32 %v2744, 0.0
    %v3667 = vmax.f32 %v2746, 0.0
    %v3668 = vmax.f32 %v3516, 0.0
    %v3669 = vmax.f32 %v3518, 0.0
    %v3670 = vmax.f32 %v2748, 0.0
    %v3671 = vmax.f32 %v2750, 0.0
    %v3672 = vmax.f32 %v3520, 0.0
    %v3673 = vmax.f32 %v3522, 0.0
    %v3674 = vmax.f32 %v2754, 0.0
    %v3675 = vmax.f32 %v2756, 0.0
    %v3676 = vmax.f32 %v3526, 0.0
    %v3677 = vmax.f32 %v3528, 0.0
    %v3678 = vmax.f32 %v2758, 0.0
    %v3679 = vmax.f32 %v2760, 0.0
    %v3680 = vmax.f32 %v3530, 0.0
    %v3681 = vmax.f32 %v3532, 0.0
    %v3682 = vmax.f32 %v2764, 0.0
    %v3683 = vmax.f32 %v2766, 0.0
    %v3684 = vmax.f32 %v3536, 0.0
    %v3685 = vmax.f32 %v3538, 0.0
    %v3686 = vmax.f32 %v2768, 0.0
    %v3687 = vmax.f32 %v2770, 0.0
    %v3688 = vmax.f32 %v3540, 0.0
    %v3689 = vmax.f32 %v3542, 0.0
    %v3690 = vmax.f32 %v2774, 0.0
    %v3691 = vmax.f32 %v2776, 0.0
    %v3692 = vmax.f32 %v3546, 0.0
    %v3693 = vmax.f32 %v3548, 0.0
    %v3694 = vmax.f32 %v2778, 0.0
    %v3695 = vmax.f32 %v2780, 0.0
    %v3696 = vmax.f32 %v3550, 0.0
    %v3697 = vmax.f32 %v3552, 0.0
    %v3698 = vmax.f32 %v2784, 0.0
    %v3699 = vmax.f32 %v2786, 0.0
    %v3700 = vmax.f32 %v3556, 0.0
    %v3701 = vmax.f32 %v3558, 0.0
    %v3702 = vmax.f32 %v2788, 0.0
    %v3703 = vmax.f32 %v2790, 0.0
    %v3704 = vmax.f32 %v3560, 0.0
    %v3705 = vmax.f32 %v3562, 0.0
    %v3706 = vmax.f32 %v2794, 0.0
    %v3707 = vmax.f32 %v2796, 0.0
    %v3708 = vmax.f32 %v3566, 0.0
    %v3709 = vmax.f32 %v3568, 0.0
    %v3710 = vmax.f32 %v2798, 0.0
    %v3711 = vmax.f32 %v2800, 0.0
    %v3712 = vmax.f32 %v3570, 0.0
    %v3713 = vmax.f32 %v3572, 0.0
    %v3714 = vmax.f32 %v2804, 0.0
    %v3715 = vmax.f32 %v2806, 0.0
    %v3716 = vmax.f32 %v3576, 0.0
    %v3717 = vmax.f32 %v3578, 0.0
    %v3718 = vmax.f32 %v2808, 0.0
    %v3719 = vmax.f32 %v2810, 0.0
    %v3720 = vmax.f32 %v3580, 0.0
    %v3721 = vmax.f32 %v3582, 0.0
    %v3722 = vmax.f32 %v2814, 0.0
    %v3723 = vmax.f32 %v2816, 0.0
    %v3724 = vmax.f32 %v3586, 0.0
    %v3725 = vmax.f32 %v3588, 0.0
    %v3726 = vmax.f32 %v2818, 0.0
    %v3727 = vmax.f32 %v2820, 0.0
    %v3728 = vmax.f32 %v3590, 0.0
    %v3729 = vmax.f32 %v3592, 0.0
    %v3730 = vmax.f32 %v2824, 0.0
    %v3731 = vmax.f32 %v2826, 0.0
    %v3732 = vmax.f32 %v3596, 0.0
    %v3733 = vmax.f32 %v3598, 0.0
    %v3734 = vmax.f32 %v2828, 0.0
    %v3735 = vmax.f32 %v2830, 0.0
    %v3736 = vmax.f32 %v3600, 0.0
    %v3737 = vmax.f32 %v3602, 0.0
    %v3738 = vmax.f32 %v2834, 0.0
    %v3739 = vmax.f32 %v2836, 0.0
    %v3740 = vmax.f32 %v3606, 0.0
    %v3741 = vmax.f32 %v3608, 0.0
    %v3742 = vmax.f32 %v2838, 0.0
    %v3743 = vmax.f32 %v2840, 0.0
    %v3744 = vmax.f32 %v3610, 0.0
    %v3745 = vmax.f32 %v3612, 0.0
    %v3746 = vmax.f32 %v2844, 0.0
    %v3747 = vmax.f32 %v2846, 0.0
    %v3748 = vmax.f32 %v3616, 0.0
    %v3749 = vmax.f32 %v3618, 0.0
    %v3750 = vmax.f32 %v2848, 0.0
    %v3751 = vmax.f32 %v2850, 0.0
    %v3752 = vmax.f32 %v3620, 0.0
    %v3753 = vmax.f32 %v3622, 0.0
    %v3754 = vmax.f32 %v2854, 0.0
    %v3755 = vmax.f32 %v2856, 0.0
    %v3756 = vmax.f32 %v3626, 0.0
    %v3757 = vmax.f32 %v3628, 0.0
    %v3758 = vmax.f32 %v2858, 0.0
    %v3759 = vmax.f32 %v2860, 0.0
    %v3760 = vmax.f32 %v3630, 0.0
    %v3761 = vmax.f32 %v3632, 0.0
    %v3762 = vpack.c.bf16 %v3638, %v3634
    %v3763 = vpack.c.bf16 %v3639, %v3635
    %v3764 = vpack.c.bf16 %v3640, %v3636
    %v3765 = vpack.c.bf16 %v3641, %v3637
    %v3766 = vpack.c.bf16 %v3646, %v3642
    %v3767 = vpack.c.bf16 %v3647, %v3643
    %v3768 = vpack.c.bf16 %v3648, %v3644
    %v3769 = vpack.c.bf16 %v3649, %v3645
    %v3770 = vpack.c.bf16 %v3654, %v3650
    %v3771 = vpack.c.bf16 %v3655, %v3651
    %v3772 = vpack.c.bf16 %v3656, %v3652
    %v3773 = vpack.c.bf16 %v3657, %v3653
    %v3774 = vpack.c.bf16 %v3662, %v3658
    %v3775 = vpack.c.bf16 %v3663, %v3659
    %v3776 = vpack.c.bf16 %v3664, %v3660
    %v3777 = vpack.c.bf16 %v3665, %v3661
    %v3778 = vpack.c.bf16 %v3670, %v3666
    %v3779 = vpack.c.bf16 %v3671, %v3667
    %v3780 = vpack.c.bf16 %v3672, %v3668
    %v3781 = vpack.c.bf16 %v3673, %v3669
    %v3782 = vpack.c.bf16 %v3678, %v3674
    %v3783 = vpack.c.bf16 %v3679, %v3675
    %v3784 = vpack.c.bf16 %v3680, %v3676
    %v3785 = vpack.c.bf16 %v3681, %v3677
    %v3786 = vpack.c.bf16 %v3686, %v3682
    %v3787 = vpack.c.bf16 %v3687, %v3683
    %v3788 = vpack.c.bf16 %v3688, %v3684
    %v3789 = vpack.c.bf16 %v3689, %v3685
    %v3790 = vpack.c.bf16 %v3694, %v3690
    %v3791 = vpack.c.bf16 %v3695, %v3691
    %v3792 = vpack.c.bf16 %v3696, %v3692
    %v3793 = vpack.c.bf16 %v3697, %v3693
    %v3794 = vpack.c.bf16 %v3702, %v3698
    %v3795 = vpack.c.bf16 %v3703, %v3699
    %v3796 = vpack.c.bf16 %v3704, %v3700
    %v3797 = vpack.c.bf16 %v3705, %v3701
    %v3798 = vpack.c.bf16 %v3710, %v3706
    %v3799 = vpack.c.bf16 %v3711, %v3707
    %v3800 = vpack.c.bf16 %v3712, %v3708
    %v3801 = vpack.c.bf16 %v3713, %v3709
    %v3802 = vpack.c.bf16 %v3718, %v3714
    %v3803 = vpack.c.bf16 %v3719, %v3715
    %v3804 = vpack.c.bf16 %v3720, %v3716
    %v3805 = vpack.c.bf16 %v3721, %v3717
    %v3806 = vpack.c.bf16 %v3726, %v3722
    %v3807 = vpack.c.bf16 %v3727, %v3723
    %v3808 = vpack.c.bf16 %v3728, %v3724
    %v3809 = vpack.c.bf16 %v3729, %v3725
    %v3810 = vpack.c.bf16 %v3734, %v3730
    %v3811 = vpack.c.bf16 %v3735, %v3731
    %v3812 = vpack.c.bf16 %v3736, %v3732
    %v3813 = vpack.c.bf16 %v3737, %v3733
    %v3814 = vpack.c.bf16 %v3742, %v3738
    %v3815 = vpack.c.bf16 %v3743, %v3739
    %v3816 = vpack.c.bf16 %v3744, %v3740
    %v3817 = vpack.c.bf16 %v3745, %v3741
    %v3818 = vpack.c.bf16 %v3750, %v3746
    %v3819 = vpack.c.bf16 %v3751, %v3747
    %v3820 = vpack.c.bf16 %v3752, %v3748
    %v3821 = vpack.c.bf16 %v3753, %v3749
    %v3822 = vpack.c.bf16 %v3758, %v3754
    %v3823 = vpack.c.bf16 %v3759, %v3755
    %v3824 = vpack.c.bf16 %v3760, %v3756
    %v3825 = vpack.c.bf16 %v3761, %v3757
    %v3826 = vld [vmem:[#allocation8] sm:$0xf]
    %v3827 = vld [vmem:[#allocation8 + $0x4] sm:$0xf]
    %v3828 = vld [vmem:[#allocation8 + $0x8] sm:$0xf]
    %v3829 = vld [vmem:[#allocation8 + $0xc] sm:$0xf]
    %v3830 = vld [vmem:[#allocation8 + $0x10] sm:$0xf]
    %v3831 = vld [vmem:[#allocation8 + $0x14] sm:$0xf]
    %v3832 = vld [vmem:[#allocation8 + $0x18] sm:$0xf]
    %v3833 = vld [vmem:[#allocation8 + $0x1c] sm:$0xf]
    %v3834 = vld [vmem:[#allocation8 + $0x20] sm:$0xf]
    %v3835 = vld [vmem:[#allocation8 + $0x24] sm:$0xf]
    %v3836 = vld [vmem:[#allocation8 + $0x28] sm:$0xf]
    %v3837 = vld [vmem:[#allocation8 + $0x2c] sm:$0xf]
    %v3838 = vld [vmem:[#allocation8 + $0x30] sm:$0xf]
    %v3839 = vld [vmem:[#allocation8 + $0x34] sm:$0xf]
    %v3840 = vld [vmem:[#allocation8 + $0x38] sm:$0xf]
    %v3841 = vld [vmem:[#allocation8 + $0x3c] sm:$0xf]
    %v3842 = vld [vmem:[#allocation8 + $0x40] sm:$0xf]
    %v3843 = vld [vmem:[#allocation8 + $0x44] sm:$0xf]
    %v3844 = vld [vmem:[#allocation8 + $0x48] sm:$0xf]
    %v3845 = vld [vmem:[#allocation8 + $0x4c] sm:$0xf]
    %v3846 = vld [vmem:[#allocation8 + $0x50] sm:$0xf]
    %v3847 = vld [vmem:[#allocation8 + $0x54] sm:$0xf]
    %v3848 = vld [vmem:[#allocation8 + $0x58] sm:$0xf]
    %v3849 = vld [vmem:[#allocation8 + $0x5c] sm:$0xf]
    %v3850 = vld [vmem:[#allocation8 + $0x60] sm:$0xf]
    %v3851 = vld [vmem:[#allocation8 + $0x64] sm:$0xf]
    %v3852 = vld [vmem:[#allocation8 + $0x68] sm:$0xf]
    %v3853 = vld [vmem:[#allocation8 + $0x6c] sm:$0xf]
    %v3854 = vld [vmem:[#allocation8 + $0x70] sm:$0xf]
    %v3855 = vld [vmem:[#allocation8 + $0x74] sm:$0xf]
    %v3856 = vld [vmem:[#allocation8 + $0x78] sm:$0xf]
    %v3857 = vld [vmem:[#allocation8 + $0x7c] sm:$0xf]
    %v3858 = vld [vmem:[#allocation8 + $0x80] sm:$0xf]
    %v3859 = vld [vmem:[#allocation8 + $0x84] sm:$0xf]
    %v3860 = vld [vmem:[#allocation8 + $0x88] sm:$0xf]
    %v3861 = vld [vmem:[#allocation8 + $0x8c] sm:$0xf]
    %v3862 = vld [vmem:[#allocation8 + $0x90] sm:$0xf]
    %v3863 = vld [vmem:[#allocation8 + $0x94] sm:$0xf]
    %v3864 = vld [vmem:[#allocation8 + $0x98] sm:$0xf]
    %v3865 = vld [vmem:[#allocation8 + $0x9c] sm:$0xf]
    %v3866 = vld [vmem:[#allocation8 + $0xa0] sm:$0xf]
    %v3867 = vld [vmem:[#allocation8 + $0xa4] sm:$0xf]
    %v3868 = vld [vmem:[#allocation8 + $0xa8] sm:$0xf]
    %v3869 = vld [vmem:[#allocation8 + $0xac] sm:$0xf]
    %v3870 = vld [vmem:[#allocation8 + $0xb0] sm:$0xf]
    %v3871 = vld [vmem:[#allocation8 + $0xb4] sm:$0xf]
    %v3872 = vld [vmem:[#allocation8 + $0xb8] sm:$0xf]
    %v3873 = vld [vmem:[#allocation8 + $0xbc] sm:$0xf]
    %v3874 = vld [vmem:[#allocation8 + $0xc0] sm:$0xf]
    %v3875 = vld [vmem:[#allocation8 + $0xc4] sm:$0xf]
    %v3876 = vld [vmem:[#allocation8 + $0xc8] sm:$0xf]
    %v3877 = vld [vmem:[#allocation8 + $0xcc] sm:$0xf]
    %v3878 = vld [vmem:[#allocation8 + $0xd0] sm:$0xf]
    %v3879 = vld [vmem:[#allocation8 + $0xd4] sm:$0xf]
    %v3880 = vld [vmem:[#allocation8 + $0xd8] sm:$0xf]
    %v3881 = vld [vmem:[#allocation8 + $0xdc] sm:$0xf]
    %v3882 = vld [vmem:[#allocation8 + $0xe0] sm:$0xf]
    %v3883 = vld [vmem:[#allocation8 + $0xe4] sm:$0xf]
    %v3884 = vld [vmem:[#allocation8 + $0xe8] sm:$0xf]
    %v3885 = vld [vmem:[#allocation8 + $0xec] sm:$0xf]
    %v3886 = vld [vmem:[#allocation8 + $0xf0] sm:$0xf]
    %v3887 = vld [vmem:[#allocation8 + $0xf4] sm:$0xf]
    %v3888 = vld [vmem:[#allocation8 + $0xf8] sm:$0xf]
    %v3889 = vld [vmem:[#allocation8 + $0xfc] sm:$0xf]
    %v3890 = vld [vmem:[#allocation10] sm:$0x1]
    %v3892 = vlaneseq
    %v3893 = vshrl.u32 %v3892, 7
    %v3894 = vsub.s32 0, %v3893
    %v3895 = vrot.slane %v3890, %v3894
    %v3961 = vunpack.c.l.b16 %v3826
    %v3962 = vunpack.c.l.b16 %v3827
    %v3963 = vunpack.c.l.b16 %v3828
    %v3964 = vunpack.c.l.b16 %v3829
    %v3965 = vunpack.c.l.b16 %v3830
    %v3966 = vunpack.c.l.b16 %v3831
    %v3967 = vunpack.c.l.b16 %v3832
    %v3968 = vunpack.c.l.b16 %v3833
    %v3969 = vunpack.c.l.b16 %v3834
    %v3970 = vunpack.c.l.b16 %v3835
    %v3971 = vunpack.c.l.b16 %v3836
    %v3972 = vunpack.c.l.b16 %v3837
    %v3973 = vunpack.c.l.b16 %v3838
    %v3974 = vunpack.c.l.b16 %v3839
    %v3975 = vunpack.c.l.b16 %v3840
    %v3976 = vunpack.c.l.b16 %v3841
    %v3977 = vunpack.c.l.b16 %v3842
    %v3978 = vunpack.c.l.b16 %v3843
    %v3979 = vunpack.c.l.b16 %v3844
    %v3980 = vunpack.c.l.b16 %v3845
    %v3981 = vunpack.c.l.b16 %v3846
    %v3982 = vunpack.c.l.b16 %v3847
    %v3983 = vunpack.c.l.b16 %v3848
    %v3984 = vunpack.c.l.b16 %v3849
    %v3985 = vunpack.c.l.b16 %v3850
    %v3986 = vunpack.c.l.b16 %v3851
    %v3987 = vunpack.c.l.b16 %v3852
    %v3988 = vunpack.c.l.b16 %v3853
    %v3989 = vunpack.c.l.b16 %v3854
    %v3990 = vunpack.c.l.b16 %v3855
    %v3991 = vunpack.c.l.b16 %v3856
    %v3992 = vunpack.c.l.b16 %v3857
    %v3993 = vunpack.c.l.b16 %v3858
    %v3994 = vunpack.c.l.b16 %v3859
    %v3995 = vunpack.c.l.b16 %v3860
    %v3996 = vunpack.c.l.b16 %v3861
    %v3997 = vunpack.c.l.b16 %v3862
    %v3998 = vunpack.c.l.b16 %v3863
    %v3999 = vunpack.c.l.b16 %v3864
    %v4000 = vunpack.c.l.b16 %v3865
    %v4001 = vunpack.c.l.b16 %v3866
    %v4002 = vunpack.c.l.b16 %v3867
    %v4003 = vunpack.c.l.b16 %v3868
    %v4004 = vunpack.c.l.b16 %v3869
    %v4005 = vunpack.c.l.b16 %v3870
    %v4006 = vunpack.c.l.b16 %v3871
    %v4007 = vunpack.c.l.b16 %v3872
    %v4008 = vunpack.c.l.b16 %v3873
    %v4009 = vunpack.c.l.b16 %v3874
    %v4010 = vunpack.c.l.b16 %v3875
    %v4011 = vunpack.c.l.b16 %v3876
    %v4012 = vunpack.c.l.b16 %v3877
    %v4013 = vunpack.c.l.b16 %v3878
    %v4014 = vunpack.c.l.b16 %v3879
    %v4015 = vunpack.c.l.b16 %v3880
    %v4016 = vunpack.c.l.b16 %v3881
    %v4017 = vunpack.c.l.b16 %v3882
    %v4018 = vunpack.c.l.b16 %v3883
    %v4019 = vunpack.c.l.b16 %v3884
    %v4020 = vunpack.c.l.b16 %v3885
    %v4021 = vunpack.c.l.b16 %v3886
    %v4022 = vunpack.c.l.b16 %v3887
    %v4023 = vunpack.c.l.b16 %v3888
    %v4024 = vunpack.c.l.b16 %v3889
    %v4025 = vpack.c.b16 %v3962, %v3961
    %v4026 = vpack.c.b16 %v3964, %v3963
    %v4027 = vpack.c.b16 %v3966, %v3965
    %v4028 = vpack.c.b16 %v3968, %v3967
    %v4029 = vpack.c.b16 %v3970, %v3969
    %v4030 = vpack.c.b16 %v3972, %v3971
    %v4031 = vpack.c.b16 %v3974, %v3973
    %v4032 = vpack.c.b16 %v3976, %v3975
    %v4033 = vpack.c.b16 %v3978, %v3977
    %v4034 = vpack.c.b16 %v3980, %v3979
    %v4035 = vpack.c.b16 %v3982, %v3981
    %v4036 = vpack.c.b16 %v3984, %v3983
    %v4037 = vpack.c.b16 %v3986, %v3985
    %v4038 = vpack.c.b16 %v3988, %v3987
    %v4039 = vpack.c.b16 %v3990, %v3989
    %v4040 = vpack.c.b16 %v3992, %v3991
    %v4041 = vpack.c.b16 %v3994, %v3993
    %v4042 = vpack.c.b16 %v3996, %v3995
    %v4043 = vpack.c.b16 %v3998, %v3997
    %v4044 = vpack.c.b16 %v4000, %v3999
    %v4045 = vpack.c.b16 %v4002, %v4001
    %v4046 = vpack.c.b16 %v4004, %v4003
    %v4047 = vpack.c.b16 %v4006, %v4005
    %v4048 = vpack.c.b16 %v4008, %v4007
    %v4049 = vpack.c.b16 %v4010, %v4009
    %v4050 = vpack.c.b16 %v4012, %v4011
    %v4051 = vpack.c.b16 %v4014, %v4013
    %v4052 = vpack.c.b16 %v4016, %v4015
    %v4053 = vpack.c.b16 %v4018, %v4017
    %v4054 = vpack.c.b16 %v4020, %v4019
    %v4055 = vpack.c.b16 %v4022, %v4021
    %v4056 = vpack.c.b16 %v4024, %v4023
    %4089 = vmatprep.subr.bf16.mxu0 0
    %4090 = vmatpush1.bf16.msra.mxu0 %v4025
    %4091 = vmatprep.subr.bf16.mxu0 0
    %4092 = vmatpush1.bf16.msra.mxu0 %v4026
    %4093 = vmatprep.subr.bf16.mxu0 0
    %4094 = vmatpush1.bf16.msra.mxu0 %v4027
    %4095 = vmatprep.subr.bf16.mxu0 0
    %4096 = vmatpush1.bf16.msra.mxu0 %v4028
    %4097 = vmatprep.subr.bf16.mxu0 0
    %4098 = vmatpush1.bf16.msra.mxu0 %v4029
    %4099 = vmatprep.subr.bf16.mxu0 0
    %4100 = vmatpush1.bf16.msra.mxu0 %v4030
    %4101 = vmatprep.subr.bf16.mxu0 0
    %4102 = vmatpush1.bf16.msra.mxu0 %v4031
    %4103 = vmatprep.subr.bf16.mxu0 0
    %4104 = vmatpush1.bf16.msra.mxu0 %v4032
    %4105 = vmatprep.subr.bf16.mxu0 0
    %4106 = vmatpush1.bf16.msra.mxu0 %v4033
    %4107 = vmatprep.subr.bf16.mxu0 0
    %4108 = vmatpush1.bf16.msra.mxu0 %v4034
    %4109 = vmatprep.subr.bf16.mxu0 0
    %4110 = vmatpush1.bf16.msra.mxu0 %v4035
    %4111 = vmatprep.subr.bf16.mxu0 0
    %4112 = vmatpush1.bf16.msra.mxu0 %v4036
    %4113 = vmatprep.subr.bf16.mxu0 0
    %4114 = vmatpush1.bf16.msra.mxu0 %v4037
    %4115 = vmatprep.subr.bf16.mxu0 0
    %4116 = vmatpush1.bf16.msra.mxu0 %v4038
    %4117 = vmatprep.subr.bf16.mxu0 0
    %4118 = vmatpush1.bf16.msra.mxu0 %v4039
    %4119 = vmatprep.subr.bf16.mxu0 0
    %4120 = vmatpush1.bf16.msra.mxu0 %v4040
    %4121 = vmatprep.mubr.bf16.mxu0 %v3763
    %4122 = vmatmul.mubr.bf16.gmra.mrb[0].mxu0 %v3762
    %v4123 = vpop.f32.mrb[0].mxu0
    %v4124 = vadd.f32 %v3895, %v4123
    %v4125 = vpop.f32.mrb[0].mxu0
    %v4126 = vpop.f32.mrb[0].mxu0
    %v4127 = vadd.f32 %v3895, %v4126
    %v4128 = vpop.f32.mrb[0].mxu0
    %4129 = vmatprep.mubr.bf16.mxu0 %v3767
    %4130 = vmatmul.mubr.bf16.gmra.mrb[0].mxu0 %v3766
    %v4131 = vpop.f32.mrb[0].mxu0
    %v4132 = vadd.f32 %v3895, %v4131
    %v4133 = vpop.f32.mrb[0].mxu0
    %v4134 = vpop.f32.mrb[0].mxu0
    %v4135 = vadd.f32 %v3895, %v4134
    %v4136 = vpop.f32.mrb[0].mxu0
    %4137 = vmatprep.mubr.bf16.mxu0 %v3771
    %4138 = vmatmul.mubr.bf16.gmra.mrb[0].mxu0 %v3770
    %v4139 = vpop.f32.mrb[0].mxu0
    %v4140 = vadd.f32 %v3895, %v4139
    %v4141 = vpop.f32.mrb[0].mxu0
    %v4142 = vpop.f32.mrb[0].mxu0
    %v4143 = vadd.f32 %v3895, %v4142
    %v4144 = vpop.f32.mrb[0].mxu0
    %4145 = vmatprep.mubr.bf16.mxu0 %v3775
    %4146 = vmatmul.mubr.bf16.gmra.mrb[0].mxu0 %v3774
    %v4147 = vpop.f32.mrb[0].mxu0
    %v4148 = vadd.f32 %v3895, %v4147
    %v4149 = vpop.f32.mrb[0].mxu0
    %v4150 = vpop.f32.mrb[0].mxu0
    %v4151 = vadd.f32 %v3895, %v4150
    %v4152 = vpop.f32.mrb[0].mxu0
    %4153 = vmatprep.mubr.bf16.mxu0 %v3779
    %4154 = vmatmul.mubr.bf16.gmra.mrb[0].mxu0 %v3778
    %v4155 = vpop.f32.mrb[0].mxu0
    %v4156 = vadd.f32 %v3895, %v4155
    %v4157 = vpop.f32.mrb[0].mxu0
    %v4158 = vpop.f32.mrb[0].mxu0
    %v4159 = vadd.f32 %v3895, %v4158
    %v4160 = vpop.f32.mrb[0].mxu0
    %4161 = vmatprep.mubr.bf16.mxu0 %v3783
    %4162 = vmatmul.mubr.bf16.gmra.mrb[0].mxu0 %v3782
    %v4163 = vpop.f32.mrb[0].mxu0
    %v4164 = vadd.f32 %v3895, %v4163
    %v4165 = vpop.f32.mrb[0].mxu0
    %v4166 = vpop.f32.mrb[0].mxu0
    %v4167 = vadd.f32 %v3895, %v4166
    %v4168 = vpop.f32.mrb[0].mxu0
    %4169 = vmatprep.mubr.bf16.mxu0 %v3787
    %4170 = vmatmul.mubr.bf16.gmra.mrb[0].mxu0 %v3786
    %v4171 = vpop.f32.mrb[0].mxu0
    %v4172 = vadd.f32 %v3895, %v4171
    %v4173 = vpop.f32.mrb[0].mxu0
    %v4174 = vpop.f32.mrb[0].mxu0
    %v4175 = vadd.f32 %v3895, %v4174
    %v4176 = vpop.f32.mrb[0].mxu0
    %4177 = vmatprep.mubr.bf16.mxu0 %v3791
    %4178 = vmatmul.mubr.bf16.gmra.mrb[0].mxu0 %v3790
    %v4179 = vpop.f32.mrb[0].mxu0
    %v4180 = vadd.f32 %v3895, %v4179
    %v4181 = vpop.f32.mrb[0].mxu0
    %v4182 = vpop.f32.mrb[0].mxu0
    %v4183 = vadd.f32 %v3895, %v4182
    %v4184 = vpop.f32.mrb[0].mxu0
    %4185 = vmatprep.mubr.bf16.mxu0 %v3795
    %4186 = vmatmul.mubr.bf16.gmra.mrb[0].mxu0 %v3794
    %v4187 = vpop.f32.mrb[0].mxu0
    %v4188 = vadd.f32 %v3895, %v4187
    %v4189 = vpop.f32.mrb[0].mxu0
    %v4190 = vpop.f32.mrb[0].mxu0
    %v4191 = vadd.f32 %v3895, %v4190
    %v4192 = vpop.f32.mrb[0].mxu0
    %4193 = vmatprep.mubr.bf16.mxu0 %v3799
    %4194 = vmatmul.mubr.bf16.gmra.mrb[0].mxu0 %v3798
    %v4195 = vpop.f32.mrb[0].mxu0
    %v4196 = vadd.f32 %v3895, %v4195
    %v4197 = vpop.f32.mrb[0].mxu0
    %v4198 = vpop.f32.mrb[0].mxu0
    %v4199 = vadd.f32 %v3895, %v4198
    %v4200 = vpop.f32.mrb[0].mxu0
    %4201 = vmatprep.mubr.bf16.mxu0 %v3803
    %4202 = vmatmul.mubr.bf16.gmra.mrb[0].mxu0 %v3802
    %v4203 = vpop.f32.mrb[0].mxu0
    %v4204 = vadd.f32 %v3895, %v4203
    %v4205 = vpop.f32.mrb[0].mxu0
    %v4206 = vpop.f32.mrb[0].mxu0
    %v4207 = vadd.f32 %v3895, %v4206
    %v4208 = vpop.f32.mrb[0].mxu0
    %4209 = vmatprep.mubr.bf16.mxu0 %v3807
    %4210 = vmatmul.mubr.bf16.gmra.mrb[0].mxu0 %v3806
    %v4211 = vpop.f32.mrb[0].mxu0
    %v4212 = vadd.f32 %v3895, %v4211
    %v4213 = vpop.f32.mrb[0].mxu0
    %v4214 = vpop.f32.mrb[0].mxu0
    %v4215 = vadd.f32 %v3895, %v4214
    %v4216 = vpop.f32.mrb[0].mxu0
    %4217 = vmatprep.mubr.bf16.mxu0 %v3811
    %4218 = vmatmul.mubr.bf16.gmra.mrb[0].mxu0 %v3810
    %v4219 = vpop.f32.mrb[0].mxu0
    %v4220 = vadd.f32 %v3895, %v4219
    %v4221 = vpop.f32.mrb[0].mxu0
    %v4222 = vpop.f32.mrb[0].mxu0
    %v4223 = vadd.f32 %v3895, %v4222
    %v4224 = vpop.f32.mrb[0].mxu0
    %4225 = vmatprep.mubr.bf16.mxu0 %v3815
    %4226 = vmatmul.mubr.bf16.gmra.mrb[0].mxu0 %v3814
    %v4227 = vpop.f32.mrb[0].mxu0
    %v4228 = vadd.f32 %v3895, %v4227
    %v4229 = vpop.f32.mrb[0].mxu0
    %v4230 = vpop.f32.mrb[0].mxu0
    %v4231 = vadd.f32 %v3895, %v4230
    %v4232 = vpop.f32.mrb[0].mxu0
    %4233 = vmatprep.mubr.bf16.mxu0 %v3819
    %4234 = vmatmul.mubr.bf16.gmra.mrb[0].mxu0 %v3818
    %v4235 = vpop.f32.mrb[0].mxu0
    %v4236 = vadd.f32 %v3895, %v4235
    %v4237 = vpop.f32.mrb[0].mxu0
    %v4238 = vpop.f32.mrb[0].mxu0
    %v4239 = vadd.f32 %v3895, %v4238
    %v4240 = vpop.f32.mrb[0].mxu0
    %4241 = vmatprep.mubr.bf16.mxu0 %v3823
    %4242 = vmatmul.mubr.bf16.gmra.mrb[0].mxu0 %v3822
    %v4243 = vpop.f32.mrb[0].mxu0
    %v4244 = vadd.f32 %v3895, %v4243
    %v4245 = vpop.f32.mrb[0].mxu0
    %v4246 = vpop.f32.mrb[0].mxu0
    %v4247 = vadd.f32 %v3895, %v4246
    %v4248 = vpop.f32.mrb[0].mxu0
    %4249 = vdwg.mxu0
    %4250 = vmatprep.subr.bf16.mxu0 0
    %4251 = vmatpush1.bf16.msra.mxu0 %v4041
    %4252 = vmatprep.subr.bf16.mxu0 0
    %4253 = vmatpush1.bf16.msra.mxu0 %v4042
    %4254 = vmatprep.subr.bf16.mxu0 0
    %4255 = vmatpush1.bf16.msra.mxu0 %v4043
    %4256 = vmatprep.subr.bf16.mxu0 0
    %4257 = vmatpush1.bf16.msra.mxu0 %v4044
    %4258 = vmatprep.subr.bf16.mxu0 0
    %4259 = vmatpush1.bf16.msra.mxu0 %v4045
    %4260 = vmatprep.subr.bf16.mxu0 0
    %4261 = vmatpush1.bf16.msra.mxu0 %v4046
    %4262 = vmatprep.subr.bf16.mxu0 0
    %4263 = vmatpush1.bf16.msra.mxu0 %v4047
    %4264 = vmatprep.subr.bf16.mxu0 0
    %4265 = vmatpush1.bf16.msra.mxu0 %v4048
    %4266 = vmatprep.subr.bf16.mxu0 0
    %4267 = vmatpush1.bf16.msra.mxu0 %v4049
    %4268 = vmatprep.subr.bf16.mxu0 0
    %4269 = vmatpush1.bf16.msra.mxu0 %v4050
    %4270 = vmatprep.subr.bf16.mxu0 0
    %4271 = vmatpush1.bf16.msra.mxu0 %v4051
    %4272 = vmatprep.subr.bf16.mxu0 0
    %4273 = vmatpush1.bf16.msra.mxu0 %v4052
    %4274 = vmatprep.subr.bf16.mxu0 0
    %4275 = vmatpush1.bf16.msra.mxu0 %v4053
    %4276 = vmatprep.subr.bf16.mxu0 0
    %4277 = vmatpush1.bf16.msra.mxu0 %v4054
    %4278 = vmatprep.subr.bf16.mxu0 0
    %4279 = vmatpush1.bf16.msra.mxu0 %v4055
    %4280 = vmatprep.subr.bf16.mxu0 0
    %4281 = vmatpush1.bf16.msra.mxu0 %v4056
    %4282 = vmatprep.mubr.bf16.mxu0 %v3765
    %4283 = vmatmul.mubr.bf16.gmra.mrb[0].mxu0 %v3764
    %v4284 = vpop.f32.mrb[0].mxu0
    %v4285 = vadd.f32 %v4124, %v4284
    %v4286 = vpop.f32.mrb[0].mxu0
    %v4287 = vpop.f32.mrb[0].mxu0
    %v4288 = vadd.f32 %v4127, %v4287
    %v4289 = vpop.f32.mrb[0].mxu0
    %4290 = vmatprep.mubr.bf16.mxu0 %v3769
    %4291 = vmatmul.mubr.bf16.gmra.mrb[0].mxu0 %v3768
    %v4292 = vpop.f32.mrb[0].mxu0
    %v4293 = vadd.f32 %v4132, %v4292
    %v4294 = vpop.f32.mrb[0].mxu0
    %v4295 = vpop.f32.mrb[0].mxu0
    %v4296 = vadd.f32 %v4135, %v4295
    %v4297 = vpop.f32.mrb[0].mxu0
    %4298 = vmatprep.mubr.bf16.mxu0 %v3773
    %4299 = vmatmul.mubr.bf16.gmra.mrb[0].mxu0 %v3772
    %v4300 = vpop.f32.mrb[0].mxu0
    %v4301 = vadd.f32 %v4140, %v4300
    %v4302 = vpop.f32.mrb[0].mxu0
    %v4303 = vpop.f32.mrb[0].mxu0
    %v4304 = vadd.f32 %v4143, %v4303
    %v4305 = vpop.f32.mrb[0].mxu0
    %4306 = vmatprep.mubr.bf16.mxu0 %v3777
    %4307 = vmatmul.mubr.bf16.gmra.mrb[0].mxu0 %v3776
    %v4308 = vpop.f32.mrb[0].mxu0
    %v4309 = vadd.f32 %v4148, %v4308
    %v4310 = vpop.f32.mrb[0].mxu0
    %v4311 = vpop.f32.mrb[0].mxu0
    %v4312 = vadd.f32 %v4151, %v4311
    %v4313 = vpop.f32.mrb[0].mxu0
    %4314 = vmatprep.mubr.bf16.mxu0 %v3781
    %4315 = vmatmul.mubr.bf16.gmra.mrb[0].mxu0 %v3780
    %v4316 = vpop.f32.mrb[0].mxu0
    %v4317 = vadd.f32 %v4156, %v4316
    %v4318 = vpop.f32.mrb[0].mxu0
    %v4319 = vpop.f32.mrb[0].mxu0
    %v4320 = vadd.f32 %v4159, %v4319
    %v4321 = vpop.f32.mrb[0].mxu0
    %4322 = vmatprep.mubr.bf16.mxu0 %v3785
    %4323 = vmatmul.mubr.bf16.gmra.mrb[0].mxu0 %v3784
    %v4324 = vpop.f32.mrb[0].mxu0
    %v4325 = vadd.f32 %v4164, %v4324
    %v4326 = vpop.f32.mrb[0].mxu0
    %v4327 = vpop.f32.mrb[0].mxu0
    %v4328 = vadd.f32 %v4167, %v4327
    %v4329 = vpop.f32.mrb[0].mxu0
    %4330 = vmatprep.mubr.bf16.mxu0 %v3789
    %4331 = vmatmul.mubr.bf16.gmra.mrb[0].mxu0 %v3788
    %v4332 = vpop.f32.mrb[0].mxu0
    %v4333 = vadd.f32 %v4172, %v4332
    %v4334 = vpop.f32.mrb[0].mxu0
    %v4335 = vpop.f32.mrb[0].mxu0
    %v4336 = vadd.f32 %v4175, %v4335
    %v4337 = vpop.f32.mrb[0].mxu0
    %4338 = vmatprep.mubr.bf16.mxu0 %v3793
    %4339 = vmatmul.mubr.bf16.gmra.mrb[0].mxu0 %v3792
    %v4340 = vpop.f32.mrb[0].mxu0
    %v4341 = vadd.f32 %v4180, %v4340
    %v4342 = vpop.f32.mrb[0].mxu0
    %v4343 = vpop.f32.mrb[0].mxu0
    %v4344 = vadd.f32 %v4183, %v4343
    %v4345 = vpop.f32.mrb[0].mxu0
    %4346 = vmatprep.mubr.bf16.mxu0 %v3797
    %4347 = vmatmul.mubr.bf16.gmra.mrb[0].mxu0 %v3796
    %v4348 = vpop.f32.mrb[0].mxu0
    %v4349 = vadd.f32 %v4188, %v4348
    %v4350 = vpop.f32.mrb[0].mxu0
    %v4351 = vpop.f32.mrb[0].mxu0
    %v4352 = vadd.f32 %v4191, %v4351
    %v4353 = vpop.f32.mrb[0].mxu0
    %4354 = vmatprep.mubr.bf16.mxu0 %v3801
    %4355 = vmatmul.mubr.bf16.gmra.mrb[0].mxu0 %v3800
    %v4356 = vpop.f32.mrb[0].mxu0
    %v4357 = vadd.f32 %v4196, %v4356
    %v4358 = vpop.f32.mrb[0].mxu0
    %v4359 = vpop.f32.mrb[0].mxu0
    %v4360 = vadd.f32 %v4199, %v4359
    %v4361 = vpop.f32.mrb[0].mxu0
    %4362 = vmatprep.mubr.bf16.mxu0 %v3805
    %4363 = vmatmul.mubr.bf16.gmra.mrb[0].mxu0 %v3804
    %v4364 = vpop.f32.mrb[0].mxu0
    %v4365 = vadd.f32 %v4204, %v4364
    %v4366 = vpop.f32.mrb[0].mxu0
    %v4367 = vpop.f32.mrb[0].mxu0
    %v4368 = vadd.f32 %v4207, %v4367
    %v4369 = vpop.f32.mrb[0].mxu0
    %4370 = vmatprep.mubr.bf16.mxu0 %v3809
    %4371 = vmatmul.mubr.bf16.gmra.mrb[0].mxu0 %v3808
    %v4372 = vpop.f32.mrb[0].mxu0
    %v4373 = vadd.f32 %v4212, %v4372
    %v4374 = vpop.f32.mrb[0].mxu0
    %v4375 = vpop.f32.mrb[0].mxu0
    %v4376 = vadd.f32 %v4215, %v4375
    %v4377 = vpop.f32.mrb[0].mxu0
    %4378 = vmatprep.mubr.bf16.mxu0 %v3813
    %4379 = vmatmul.mubr.bf16.gmra.mrb[0].mxu0 %v3812
    %v4380 = vpop.f32.mrb[0].mxu0
    %v4381 = vadd.f32 %v4220, %v4380
    %v4382 = vpop.f32.mrb[0].mxu0
    %v4383 = vpop.f32.mrb[0].mxu0
    %v4384 = vadd.f32 %v4223, %v4383
    %v4385 = vpop.f32.mrb[0].mxu0
    %4386 = vmatprep.mubr.bf16.mxu0 %v3817
    %4387 = vmatmul.mubr.bf16.gmra.mrb[0].mxu0 %v3816
    %v4388 = vpop.f32.mrb[0].mxu0
    %v4389 = vadd.f32 %v4228, %v4388
    %v4390 = vpop.f32.mrb[0].mxu0
    %v4391 = vpop.f32.mrb[0].mxu0
    %v4392 = vadd.f32 %v4231, %v4391
    %v4393 = vpop.f32.mrb[0].mxu0
    %4394 = vmatprep.mubr.bf16.mxu0 %v3821
    %4395 = vmatmul.mubr.bf16.gmra.mrb[0].mxu0 %v3820
    %v4396 = vpop.f32.mrb[0].mxu0
    %v4397 = vadd.f32 %v4236, %v4396
    %v4398 = vpop.f32.mrb[0].mxu0
    %v4399 = vpop.f32.mrb[0].mxu0
    %v4400 = vadd.f32 %v4239, %v4399
    %v4401 = vpop.f32.mrb[0].mxu0
    %4402 = vmatprep.mubr.bf16.mxu0 %v3825
    %4403 = vmatmul.mubr.bf16.gmra.mrb[0].mxu0 %v3824
    %v4404 = vpop.f32.mrb[0].mxu0
    %v4405 = vadd.f32 %v4244, %v4404
    %v4406 = vpop.f32.mrb[0].mxu0
    %v4407 = vpop.f32.mrb[0].mxu0
    %v4408 = vadd.f32 %v4247, %v4407
    %v4409 = vpop.f32.mrb[0].mxu0
    %4410 = vdwg.mxu0
    %v4411 = vmax.f32 %v4285, 0.0
    %v4412 = vmax.f32 %v4288, 0.0
    %v4413 = vmax.f32 %v4293, 0.0
    %v4414 = vmax.f32 %v4296, 0.0
    %v4415 = vmax.f32 %v4301, 0.0
    %v4416 = vmax.f32 %v4304, 0.0
    %v4417 = vmax.f32 %v4309, 0.0
    %v4418 = vmax.f32 %v4312, 0.0
    %v4419 = vmax.f32 %v4317, 0.0
    %v4420 = vmax.f32 %v4320, 0.0
    %v4421 = vmax.f32 %v4325, 0.0
    %v4422 = vmax.f32 %v4328, 0.0
    %v4423 = vmax.f32 %v4333, 0.0
    %v4424 = vmax.f32 %v4336, 0.0
    %v4425 = vmax.f32 %v4341, 0.0
    %v4426 = vmax.f32 %v4344, 0.0
    %v4427 = vmax.f32 %v4349, 0.0
    %v4428 = vmax.f32 %v4352, 0.0
    %v4429 = vmax.f32 %v4357, 0.0
    %v4430 = vmax.f32 %v4360, 0.0
    %v4431 = vmax.f32 %v4365, 0.0
    %v4432 = vmax.f32 %v4368, 0.0
    %v4433 = vmax.f32 %v4373, 0.0
    %v4434 = vmax.f32 %v4376, 0.0
    %v4435 = vmax.f32 %v4381, 0.0
    %v4436 = vmax.f32 %v4384, 0.0
    %v4437 = vmax.f32 %v4389, 0.0
    %v4438 = vmax.f32 %v4392, 0.0
    %v4439 = vmax.f32 %v4397, 0.0
    %v4440 = vmax.f32 %v4400, 0.0
    %v4441 = vmax.f32 %v4405, 0.0
    %v4442 = vmax.f32 %v4408, 0.0
    %v4443 = vpack.c.bf16 %v4412, %v4411
    %v4444 = vpack.c.bf16 %v4414, %v4413
    %v4445 = vpack.c.bf16 %v4416, %v4415
    %v4446 = vpack.c.bf16 %v4418, %v4417
    %v4447 = vpack.c.bf16 %v4420, %v4419
    %v4448 = vpack.c.bf16 %v4422, %v4421
    %v4449 = vpack.c.bf16 %v4424, %v4423
    %v4450 = vpack.c.bf16 %v4426, %v4425
    %v4451 = vpack.c.bf16 %v4428, %v4427
    %v4452 = vpack.c.bf16 %v4430, %v4429
    %v4453 = vpack.c.bf16 %v4432, %v4431
    %v4454 = vpack.c.bf16 %v4434, %v4433
    %v4455 = vpack.c.bf16 %v4436, %v4435
    %v4456 = vpack.c.bf16 %v4438, %v4437
    %v4457 = vpack.c.bf16 %v4440, %v4439
    %v4458 = vpack.c.bf16 %v4442, %v4441
    %v4459 = vld [vmem:[#allocation11] sm:$0xf]
    %v4460 = vld [vmem:[#allocation11 + $0x4] sm:$0xf]
    %v4461 = vld [vmem:[#allocation11 + $0x8] sm:$0xf]
    %v4462 = vld [vmem:[#allocation11 + $0xc] sm:$0xf]
    %v4463 = vld [vmem:[#allocation11 + $0x10] sm:$0xf]
    %v4464 = vld [vmem:[#allocation11 + $0x14] sm:$0xf]
    %v4465 = vld [vmem:[#allocation11 + $0x18] sm:$0xf]
    %v4466 = vld [vmem:[#allocation11 + $0x1c] sm:$0xf]
    %v4467 = vld [vmem:[#allocation11 + $0x20] sm:$0xf]
    %v4468 = vld [vmem:[#allocation11 + $0x24] sm:$0xf]
    %v4469 = vld [vmem:[#allocation11 + $0x28] sm:$0xf]
    %v4470 = vld [vmem:[#allocation11 + $0x2c] sm:$0xf]
    %v4471 = vld [vmem:[#allocation11 + $0x30] sm:$0xf]
    %v4472 = vld [vmem:[#allocation11 + $0x34] sm:$0xf]
    %v4473 = vld [vmem:[#allocation11 + $0x38] sm:$0xf]
    %v4474 = vld [vmem:[#allocation11 + $0x3c] sm:$0xf]
    %v4475 = vld [vmem:[#allocation13] sm:$0x1]
    %v4477 = vlaneseq
    %v4478 = vshrl.u32 %v4477, 7
    %v4479 = vsub.s32 0, %v4478
    %v4480 = vrot.slane %v4475, %v4479
    %v4498 = vunpack.c.l.b16 %v4459
    %v4499 = vunpack.c.l.b16 %v4460
    %v4500 = vunpack.c.l.b16 %v4461
    %v4501 = vunpack.c.l.b16 %v4462
    %v4502 = vunpack.c.l.b16 %v4463
    %v4503 = vunpack.c.l.b16 %v4464
    %v4504 = vunpack.c.l.b16 %v4465
    %v4505 = vunpack.c.l.b16 %v4466
    %v4506 = vunpack.c.l.b16 %v4467
    %v4507 = vunpack.c.l.b16 %v4468
    %v4508 = vunpack.c.l.b16 %v4469
    %v4509 = vunpack.c.l.b16 %v4470
    %v4510 = vunpack.c.l.b16 %v4471
    %v4511 = vunpack.c.l.b16 %v4472
    %v4512 = vunpack.c.l.b16 %v4473
    %v4513 = vunpack.c.l.b16 %v4474
    %v4514 = vpack.c.b16 %v4499, %v4498
    %v4515 = vpack.c.b16 %v4501, %v4500
    %v4516 = vpack.c.b16 %v4503, %v4502
    %v4517 = vpack.c.b16 %v4505, %v4504
    %v4518 = vpack.c.b16 %v4507, %v4506
    %v4519 = vpack.c.b16 %v4509, %v4508
    %v4520 = vpack.c.b16 %v4511, %v4510
    %v4521 = vpack.c.b16 %v4513, %v4512
    %4530 = vmatprep.subr.bf16.mxu0 0
    %4531 = vmatpush1.bf16.msra.mxu0 %v4514
    %4532 = vmatprep.subr.bf16.mxu0 0
    %4533 = vmatpush1.bf16.msra.mxu0 %v4515
    %4534 = vmatprep.subr.bf16.mxu0 0
    %4535 = vmatpush1.bf16.msra.mxu0 %v4516
    %4536 = vmatprep.subr.bf16.mxu0 0
    %4537 = vmatpush1.bf16.msra.mxu0 %v4517
    %4538 = vmatprep.subr.bf16.mxu0 0
    %4539 = vmatpush1.bf16.msra.mxu0 %v4518
    %4540 = vmatprep.subr.bf16.mxu0 0
    %4541 = vmatpush1.bf16.msra.mxu0 %v4519
    %4542 = vmatprep.subr.bf16.mxu0 0
    %4543 = vmatpush1.bf16.msra.mxu0 %v4520
    %4544 = vmatprep.subr.bf16.mxu0 0
    %4545 = vmatpush1.bf16.msra.mxu0 %v4521
    %4546 = vmatprep.subr.bf16.mxu0 0
    %4547 = vmatpush1.bf16.msra.mxu0 0
    %4548 = vmatprep.subr.bf16.mxu0 0
    %4549 = vmatpush1.bf16.msra.mxu0 0
    %4550 = vmatprep.subr.bf16.mxu0 0
    %4551 = vmatpush1.bf16.msra.mxu0 0
    %4552 = vmatprep.subr.bf16.mxu0 0
    %4553 = vmatpush1.bf16.msra.mxu0 0
    %4554 = vmatprep.subr.bf16.mxu0 0
    %4555 = vmatpush1.bf16.msra.mxu0 0
    %4556 = vmatprep.subr.bf16.mxu0 0
    %4557 = vmatpush1.bf16.msra.mxu0 0
    %4558 = vmatprep.subr.bf16.mxu0 0
    %4559 = vmatpush1.bf16.msra.mxu0 0
    %4560 = vmatprep.subr.bf16.mxu0 0
    %4561 = vmatpush1.bf16.msra.mxu0 0
    %4562 = vmatprep.mubr.bf16.mxu0 0
    %4563 = vmatmul.mubr.bf16.gmra.mrb[0].mxu0 %v4443
    %v4564 = vpop.f32.mrb[0].mxu0
    %v4565 = vadd.f32 %v4480, %v4564
    %v4566 = vpop.f32.mrb[0].mxu0
    %v4567 = vpop.f32.mrb[0].mxu0
    %v4568 = vadd.f32 %v4480, %v4567
    %v4569 = vpop.f32.mrb[0].mxu0
    %4570 = vmatprep.mubr.bf16.mxu0 0
    %4571 = vmatmul.mubr.bf16.gmra.mrb[0].mxu0 %v4444
    %v4572 = vpop.f32.mrb[0].mxu0
    %v4573 = vadd.f32 %v4480, %v4572
    %v4574 = vpop.f32.mrb[0].mxu0
    %v4575 = vpop.f32.mrb[0].mxu0
    %v4576 = vadd.f32 %v4480, %v4575
    %v4577 = vpop.f32.mrb[0].mxu0
    %4578 = vmatprep.mubr.bf16.mxu0 0
    %4579 = vmatmul.mubr.bf16.gmra.mrb[0].mxu0 %v4445
    %v4580 = vpop.f32.mrb[0].mxu0
    %v4581 = vadd.f32 %v4480, %v4580
    %v4582 = vpop.f32.mrb[0].mxu0
    %v4583 = vpop.f32.mrb[0].mxu0
    %v4584 = vadd.f32 %v4480, %v4583
    %v4585 = vpop.f32.mrb[0].mxu0
    %4586 = vmatprep.mubr.bf16.mxu0 0
    %4587 = vmatmul.mubr.bf16.gmra.mrb[0].mxu0 %v4446
    %v4588 = vpop.f32.mrb[0].mxu0
    %v4589 = vadd.f32 %v4480, %v4588
    %v4590 = vpop.f32.mrb[0].mxu0
    %v4591 = vpop.f32.mrb[0].mxu0
    %v4592 = vadd.f32 %v4480, %v4591
    %v4593 = vpop.f32.mrb[0].mxu0
    %4594 = vmatprep.mubr.bf16.mxu0 0
    %4595 = vmatmul.mubr.bf16.gmra.mrb[0].mxu0 %v4447
    %v4596 = vpop.f32.mrb[0].mxu0
    %v4597 = vadd.f32 %v4480, %v4596
    %v4598 = vpop.f32.mrb[0].mxu0
    %v4599 = vpop.f32.mrb[0].mxu0
    %v4600 = vadd.f32 %v4480, %v4599
    %v4601 = vpop.f32.mrb[0].mxu0
    %4602 = vmatprep.mubr.bf16.mxu0 0
    %4603 = vmatmul.mubr.bf16.gmra.mrb[0].mxu0 %v4448
    %v4604 = vpop.f32.mrb[0].mxu0
    %v4605 = vadd.f32 %v4480, %v4604
    %v4606 = vpop.f32.mrb[0].mxu0
    %v4607 = vpop.f32.mrb[0].mxu0
    %v4608 = vadd.f32 %v4480, %v4607
    %v4609 = vpop.f32.mrb[0].mxu0
    %4610 = vmatprep.mubr.bf16.mxu0 0
    %4611 = vmatmul.mubr.bf16.gmra.mrb[0].mxu0 %v4449
    %v4612 = vpop.f32.mrb[0].mxu0
    %v4613 = vadd.f32 %v4480, %v4612
    %v4614 = vpop.f32.mrb[0].mxu0
    %v4615 = vpop.f32.mrb[0].mxu0
    %v4616 = vadd.f32 %v4480, %v4615
    %v4617 = vpop.f32.mrb[0].mxu0
    %4618 = vmatprep.mubr.bf16.mxu0 0
    %4619 = vmatmul.mubr.bf16.gmra.mrb[0].mxu0 %v4450
    %v4620 = vpop.f32.mrb[0].mxu0
    %v4621 = vadd.f32 %v4480, %v4620
    %v4622 = vpop.f32.mrb[0].mxu0
    %v4623 = vpop.f32.mrb[0].mxu0
    %v4624 = vadd.f32 %v4480, %v4623
    %v4625 = vpop.f32.mrb[0].mxu0
    %4626 = vmatprep.mubr.bf16.mxu0 0
    %4627 = vmatmul.mubr.bf16.gmra.mrb[0].mxu0 %v4451
    %v4628 = vpop.f32.mrb[0].mxu0
    %v4629 = vadd.f32 %v4480, %v4628
    %v4630 = vpop.f32.mrb[0].mxu0
    %v4631 = vpop.f32.mrb[0].mxu0
    %v4632 = vadd.f32 %v4480, %v4631
    %v4633 = vpop.f32.mrb[0].mxu0
    %4634 = vmatprep.mubr.bf16.mxu0 0
    %4635 = vmatmul.mubr.bf16.gmra.mrb[0].mxu0 %v4452
    %v4636 = vpop.f32.mrb[0].mxu0
    %v4637 = vadd.f32 %v4480, %v4636
    %v4638 = vpop.f32.mrb[0].mxu0
    %v4639 = vpop.f32.mrb[0].mxu0
    %v4640 = vadd.f32 %v4480, %v4639
    %v4641 = vpop.f32.mrb[0].mxu0
    %4642 = vmatprep.mubr.bf16.mxu0 0
    %4643 = vmatmul.mubr.bf16.gmra.mrb[0].mxu0 %v4453
    %v4644 = vpop.f32.mrb[0].mxu0
    %v4645 = vadd.f32 %v4480, %v4644
    %v4646 = vpop.f32.mrb[0].mxu0
    %v4647 = vpop.f32.mrb[0].mxu0
    %v4648 = vadd.f32 %v4480, %v4647
    %v4649 = vpop.f32.mrb[0].mxu0
    %4650 = vmatprep.mubr.bf16.mxu0 0
    %4651 = vmatmul.mubr.bf16.gmra.mrb[0].mxu0 %v4454
    %v4652 = vpop.f32.mrb[0].mxu0
    %v4653 = vadd.f32 %v4480, %v4652
    %v4654 = vpop.f32.mrb[0].mxu0
    %v4655 = vpop.f32.mrb[0].mxu0
    %v4656 = vadd.f32 %v4480, %v4655
    %v4657 = vpop.f32.mrb[0].mxu0
    %4658 = vmatprep.mubr.bf16.mxu0 0
    %4659 = vmatmul.mubr.bf16.gmra.mrb[0].mxu0 %v4455
    %v4660 = vpop.f32.mrb[0].mxu0
    %v4661 = vadd.f32 %v4480, %v4660
    %v4662 = vpop.f32.mrb[0].mxu0
    %v4663 = vpop.f32.mrb[0].mxu0
    %v4664 = vadd.f32 %v4480, %v4663
    %v4665 = vpop.f32.mrb[0].mxu0
    %4666 = vmatprep.mubr.bf16.mxu0 0
    %4667 = vmatmul.mubr.bf16.gmra.mrb[0].mxu0 %v4456
    %v4668 = vpop.f32.mrb[0].mxu0
    %v4669 = vadd.f32 %v4480, %v4668
    %v4670 = vpop.f32.mrb[0].mxu0
    %v4671 = vpop.f32.mrb[0].mxu0
    %v4672 = vadd.f32 %v4480, %v4671
    %v4673 = vpop.f32.mrb[0].mxu0
    %4674 = vmatprep.mubr.bf16.mxu0 0
    %4675 = vmatmul.mubr.bf16.gmra.mrb[0].mxu0 %v4457
    %v4676 = vpop.f32.mrb[0].mxu0
    %v4677 = vadd.f32 %v4480, %v4676
    %v4678 = vpop.f32.mrb[0].mxu0
    %v4679 = vpop.f32.mrb[0].mxu0
    %v4680 = vadd.f32 %v4480, %v4679
    %v4681 = vpop.f32.mrb[0].mxu0
    %4682 = vmatprep.mubr.bf16.mxu0 0
    %4683 = vmatmul.mubr.bf16.gmra.mrb[0].mxu0 %v4458
    %v4684 = vpop.f32.mrb[0].mxu0
    %v4685 = vadd.f32 %v4480, %v4684
    %v4686 = vpop.f32.mrb[0].mxu0
    %v4687 = vpop.f32.mrb[0].mxu0
    %v4688 = vadd.f32 %v4480, %v4687
    %v4689 = vpop.f32.mrb[0].mxu0
    %4690 = vdwg.mxu0
    %v4691 = vmax.f32 %v4565, 0.0
    %v4692 = vmax.f32 %v4568, 0.0
    %v4693 = vmax.f32 %v4573, 0.0
    %v4694 = vmax.f32 %v4576, 0.0
    %v4695 = vmax.f32 %v4581, 0.0
    %v4696 = vmax.f32 %v4584, 0.0
    %v4697 = vmax.f32 %v4589, 0.0
    %v4698 = vmax.f32 %v4592, 0.0
    %v4699 = vmax.f32 %v4597, 0.0
    %v4700 = vmax.f32 %v4600, 0.0
    %v4701 = vmax.f32 %v4605, 0.0
    %v4702 = vmax.f32 %v4608, 0.0
    %v4703 = vmax.f32 %v4613, 0.0
    %v4704 = vmax.f32 %v4616, 0.0
    %v4705 = vmax.f32 %v4621, 0.0
    %v4706 = vmax.f32 %v4624, 0.0
    %v4707 = vmax.f32 %v4629, 0.0
    %v4708 = vmax.f32 %v4632, 0.0
    %v4709 = vmax.f32 %v4637, 0.0
    %v4710 = vmax.f32 %v4640, 0.0
    %v4711 = vmax.f32 %v4645, 0.0
    %v4712 = vmax.f32 %v4648, 0.0
    %v4713 = vmax.f32 %v4653, 0.0
    %v4714 = vmax.f32 %v4656, 0.0
    %v4715 = vmax.f32 %v4661, 0.0
    %v4716 = vmax.f32 %v4664, 0.0
    %v4717 = vmax.f32 %v4669, 0.0
    %v4718 = vmax.f32 %v4672, 0.0
    %v4719 = vmax.f32 %v4677, 0.0
    %v4720 = vmax.f32 %v4680, 0.0
    %v4721 = vmax.f32 %v4685, 0.0
    %v4722 = vmax.f32 %v4688, 0.0
    %v4723 = vpack.c.bf16 %v4692, %v4691
    %v4724 = vpack.c.bf16 %v4694, %v4693
    %v4725 = vpack.c.bf16 %v4696, %v4695
    %v4726 = vpack.c.bf16 %v4698, %v4697
    %v4727 = vpack.c.bf16 %v4700, %v4699
    %v4728 = vpack.c.bf16 %v4702, %v4701
    %v4729 = vpack.c.bf16 %v4704, %v4703
    %v4730 = vpack.c.bf16 %v4706, %v4705
    %v4731 = vpack.c.bf16 %v4708, %v4707
    %v4732 = vpack.c.bf16 %v4710, %v4709
    %v4733 = vpack.c.bf16 %v4712, %v4711
    %v4734 = vpack.c.bf16 %v4714, %v4713
    %v4735 = vpack.c.bf16 %v4716, %v4715
    %v4736 = vpack.c.bf16 %v4718, %v4717
    %v4737 = vpack.c.bf16 %v4720, %v4719
    %v4738 = vpack.c.bf16 %v4722, %v4721
    %v4739 = vld [vmem:[#allocation14] sm:$0xf]
    %v4740 = vld [vmem:[#allocation14 + $0x4] sm:$0xf]
    %v4741 = vld [vmem:[#allocation14 + $0x8] sm:$0xf]
    %v4742 = vld [vmem:[#allocation14 + $0xc] sm:$0xf]
    %v4743 = vld [vmem:[#allocation14 + $0x10] sm:$0xf]
    %v4744 = vld [vmem:[#allocation14 + $0x14] sm:$0xf]
    %v4745 = vld [vmem:[#allocation14 + $0x18] sm:$0xf]
    %v4746 = vld [vmem:[#allocation14 + $0x1c] sm:$0xf]
    %v4747 = vld [vmem:[#allocation16] sm:$0x1]
    %v4749 = vlaneseq
    %v4750 = vshrl.u32 %v4749, 7
    %v4751 = vsub.s32 0, %v4750
    %v4752 = vrot.slane %v4747, %v4751
    %v4762 = vunpack.c.l.b16 %v4739
    %v4763 = vunpack.c.l.b16 %v4740
    %v4764 = vunpack.c.l.b16 %v4741
    %v4765 = vunpack.c.l.b16 %v4742
    %v4766 = vunpack.c.l.b16 %v4743
    %v4767 = vunpack.c.l.b16 %v4744
    %v4768 = vunpack.c.l.b16 %v4745
    %v4769 = vunpack.c.l.b16 %v4746
    %v4770 = vpack.c.b16 %v4763, %v4762
    %v4771 = vpack.c.b16 %v4765, %v4764
    %v4772 = vpack.c.b16 %v4767, %v4766
    %v4773 = vpack.c.b16 %v4769, %v4768
    %vm4778 = vcmask 523264
    %v4780 = vsel %vm4778, %v4723, 0
    %v4783 = vsel %vm4778, %v4724, 0
    %v4786 = vsel %vm4778, %v4725, 0
    %v4789 = vsel %vm4778, %v4726, 0
    %v4792 = vsel %vm4778, %v4727, 0
    %v4795 = vsel %vm4778, %v4728, 0
    %v4798 = vsel %vm4778, %v4729, 0
    %v4801 = vsel %vm4778, %v4730, 0
    %v4804 = vsel %vm4778, %v4731, 0
    %v4807 = vsel %vm4778, %v4732, 0
    %v4810 = vsel %vm4778, %v4733, 0
    %v4813 = vsel %vm4778, %v4734, 0
    %v4816 = vsel %vm4778, %v4735, 0
    %v4819 = vsel %vm4778, %v4736, 0
    %v4822 = vsel %vm4778, %v4737, 0
    %v4825 = vsel %vm4778, %v4738, 0
    %4827 = vmatprep.subr.bf16.mxu0 0
    %4828 = vmatpush1.bf16.msra.mxu0 %v4770
    %4829 = vmatprep.subr.bf16.mxu0 0
    %4830 = vmatpush1.bf16.msra.mxu0 %v4771
    %4831 = vmatprep.subr.bf16.mxu0 0
    %4832 = vmatpush1.bf16.msra.mxu0 %v4772
    %4833 = vmatprep.subr.bf16.mxu0 0
    %4834 = vmatpush1.bf16.msra.mxu0 %v4773
    %4835 = vmatprep.subr.bf16.mxu0 0
    %4836 = vmatpush1.bf16.msra.mxu0 0
    %4837 = vmatprep.subr.bf16.mxu0 0
    %4838 = vmatpush1.bf16.msra.mxu0 0
    %4839 = vmatprep.subr.bf16.mxu0 0
    %4840 = vmatpush1.bf16.msra.mxu0 0
    %4841 = vmatprep.subr.bf16.mxu0 0
    %4842 = vmatpush1.bf16.msra.mxu0 0
    %4843 = vmatprep.subr.bf16.mxu0 0
    %4844 = vmatpush1.bf16.msra.mxu0 0
    %4845 = vmatprep.subr.bf16.mxu0 0
    %4846 = vmatpush1.bf16.msra.mxu0 0
    %4847 = vmatprep.subr.bf16.mxu0 0
    %4848 = vmatpush1.bf16.msra.mxu0 0
    %4849 = vmatprep.subr.bf16.mxu0 0
    %4850 = vmatpush1.bf16.msra.mxu0 0
    %4851 = vmatprep.subr.bf16.mxu0 0
    %4852 = vmatpush1.bf16.msra.mxu0 0
    %4853 = vmatprep.subr.bf16.mxu0 0
    %4854 = vmatpush1.bf16.msra.mxu0 0
    %4855 = vmatprep.subr.bf16.mxu0 0
    %4856 = vmatpush1.bf16.msra.mxu0 0
    %4857 = vmatprep.subr.bf16.mxu0 0
    %4858 = vmatpush1.bf16.msra.mxu0 0
    %4859 = vmatprep.mubr.bf16.mxu0 0
    %4860 = vmatmul.mubr.bf16.gmra.mrb[0].mxu0 %v4780
    %v4861 = vpop.f32.mrb[0].mxu0
    %v4862 = vadd.f32 %v4752, %v4861
    %v4863 = vpop.f32.mrb[0].mxu0
    %v4864 = vpop.f32.mrb[0].mxu0
    %v4865 = vadd.f32 %v4752, %v4864
    %v4866 = vpop.f32.mrb[0].mxu0
    %4867 = vmatprep.mubr.bf16.mxu0 0
    %4868 = vmatmul.mubr.bf16.gmra.mrb[0].mxu0 %v4783
    %v4869 = vpop.f32.mrb[0].mxu0
    %v4870 = vadd.f32 %v4752, %v4869
    %v4871 = vpop.f32.mrb[0].mxu0
    %v4872 = vpop.f32.mrb[0].mxu0
    %v4873 = vadd.f32 %v4752, %v4872
    %v4874 = vpop.f32.mrb[0].mxu0
    %4875 = vmatprep.mubr.bf16.mxu0 0
    %4876 = vmatmul.mubr.bf16.gmra.mrb[0].mxu0 %v4786
    %v4877 = vpop.f32.mrb[0].mxu0
    %v4878 = vadd.f32 %v4752, %v4877
    %v4879 = vpop.f32.mrb[0].mxu0
    %v4880 = vpop.f32.mrb[0].mxu0
    %v4881 = vadd.f32 %v4752, %v4880
    %v4882 = vpop.f32.mrb[0].mxu0
    %4883 = vmatprep.mubr.bf16.mxu0 0
    %4884 = vmatmul.mubr.bf16.gmra.mrb[0].mxu0 %v4789
    %v4885 = vpop.f32.mrb[0].mxu0
    %v4886 = vadd.f32 %v4752, %v4885
    %v4887 = vpop.f32.mrb[0].mxu0
    %v4888 = vpop.f32.mrb[0].mxu0
    %v4889 = vadd.f32 %v4752, %v4888
    %v4890 = vpop.f32.mrb[0].mxu0
    %4891 = vmatprep.mubr.bf16.mxu0 0
    %4892 = vmatmul.mubr.bf16.gmra.mrb[0].mxu0 %v4792
    %v4893 = vpop.f32.mrb[0].mxu0
    %v4894 = vadd.f32 %v4752, %v4893
    %v4895 = vpop.f32.mrb[0].mxu0
    %v4896 = vpop.f32.mrb[0].mxu0
    %v4897 = vadd.f32 %v4752, %v4896
    %v4898 = vpop.f32.mrb[0].mxu0
    %4899 = vmatprep.mubr.bf16.mxu0 0
    %4900 = vmatmul.mubr.bf16.gmra.mrb[0].mxu0 %v4795
    %v4901 = vpop.f32.mrb[0].mxu0
    %v4902 = vadd.f32 %v4752, %v4901
    %v4903 = vpop.f32.mrb[0].mxu0
    %v4904 = vpop.f32.mrb[0].mxu0
    %v4905 = vadd.f32 %v4752, %v4904
    %v4906 = vpop.f32.mrb[0].mxu0
    %4907 = vmatprep.mubr.bf16.mxu0 0
    %4908 = vmatmul.mubr.bf16.gmra.mrb[0].mxu0 %v4798
    %v4909 = vpop.f32.mrb[0].mxu0
    %v4910 = vadd.f32 %v4752, %v4909
    %v4911 = vpop.f32.mrb[0].mxu0
    %v4912 = vpop.f32.mrb[0].mxu0
    %v4913 = vadd.f32 %v4752, %v4912
    %v4914 = vpop.f32.mrb[0].mxu0
    %4915 = vmatprep.mubr.bf16.mxu0 0
    %4916 = vmatmul.mubr.bf16.gmra.mrb[0].mxu0 %v4801
    %v4917 = vpop.f32.mrb[0].mxu0
    %v4918 = vadd.f32 %v4752, %v4917
    %v4919 = vpop.f32.mrb[0].mxu0
    %v4920 = vpop.f32.mrb[0].mxu0
    %v4921 = vadd.f32 %v4752, %v4920
    %v4922 = vpop.f32.mrb[0].mxu0
    %4923 = vmatprep.mubr.bf16.mxu0 0
    %4924 = vmatmul.mubr.bf16.gmra.mrb[0].mxu0 %v4804
    %v4925 = vpop.f32.mrb[0].mxu0
    %v4926 = vadd.f32 %v4752, %v4925
    %v4927 = vpop.f32.mrb[0].mxu0
    %v4928 = vpop.f32.mrb[0].mxu0
    %v4929 = vadd.f32 %v4752, %v4928
    %v4930 = vpop.f32.mrb[0].mxu0
    %4931 = vmatprep.mubr.bf16.mxu0 0
    %4932 = vmatmul.mubr.bf16.gmra.mrb[0].mxu0 %v4807
    %v4933 = vpop.f32.mrb[0].mxu0
    %v4934 = vadd.f32 %v4752, %v4933
    %v4935 = vpop.f32.mrb[0].mxu0
    %v4936 = vpop.f32.mrb[0].mxu0
    %v4937 = vadd.f32 %v4752, %v4936
    %v4938 = vpop.f32.mrb[0].mxu0
    %4939 = vmatprep.mubr.bf16.mxu0 0
    %4940 = vmatmul.mubr.bf16.gmra.mrb[0].mxu0 %v4810
    %v4941 = vpop.f32.mrb[0].mxu0
    %v4942 = vadd.f32 %v4752, %v4941
    %v4943 = vpop.f32.mrb[0].mxu0
    %v4944 = vpop.f32.mrb[0].mxu0
    %v4945 = vadd.f32 %v4752, %v4944
    %v4946 = vpop.f32.mrb[0].mxu0
    %4947 = vmatprep.mubr.bf16.mxu0 0
    %4948 = vmatmul.mubr.bf16.gmra.mrb[0].mxu0 %v4813
    %v4949 = vpop.f32.mrb[0].mxu0
    %v4950 = vadd.f32 %v4752, %v4949
    %v4951 = vpop.f32.mrb[0].mxu0
    %v4952 = vpop.f32.mrb[0].mxu0
    %v4953 = vadd.f32 %v4752, %v4952
    %v4954 = vpop.f32.mrb[0].mxu0
    %4955 = vmatprep.mubr.bf16.mxu0 0
    %4956 = vmatmul.mubr.bf16.gmra.mrb[0].mxu0 %v4816
    %v4957 = vpop.f32.mrb[0].mxu0
    %v4958 = vadd.f32 %v4752, %v4957
    %v4959 = vpop.f32.mrb[0].mxu0
    %v4960 = vpop.f32.mrb[0].mxu0
    %v4961 = vadd.f32 %v4752, %v4960
    %v4962 = vpop.f32.mrb[0].mxu0
    %4963 = vmatprep.mubr.bf16.mxu0 0
    %4964 = vmatmul.mubr.bf16.gmra.mrb[0].mxu0 %v4819
    %v4965 = vpop.f32.mrb[0].mxu0
    %v4966 = vadd.f32 %v4752, %v4965
    %v4967 = vpop.f32.mrb[0].mxu0
    %v4968 = vpop.f32.mrb[0].mxu0
    %v4969 = vadd.f32 %v4752, %v4968
    %v4970 = vpop.f32.mrb[0].mxu0
    %4971 = vmatprep.mubr.bf16.mxu0 0
    %4972 = vmatmul.mubr.bf16.gmra.mrb[0].mxu0 %v4822
    %v4973 = vpop.f32.mrb[0].mxu0
    %v4974 = vadd.f32 %v4752, %v4973
    %v4975 = vpop.f32.mrb[0].mxu0
    %v4976 = vpop.f32.mrb[0].mxu0
    %v4977 = vadd.f32 %v4752, %v4976
    %v4978 = vpop.f32.mrb[0].mxu0
    %4979 = vmatprep.mubr.bf16.mxu0 0
    %4980 = vmatmul.mubr.bf16.gmra.mrb[0].mxu0 %v4825
    %v4981 = vpop.f32.mrb[0].mxu0
    %v4982 = vadd.f32 %v4752, %v4981
    %v4983 = vpop.f32.mrb[0].mxu0
    %v4984 = vpop.f32.mrb[0].mxu0
    %v4985 = vadd.f32 %v4752, %v4984
    %v4986 = vpop.f32.mrb[0].mxu0
    %4987 = vdwg.mxu0
    %4988 = vst [vmem:[#allocation17] sm:$0xff] %v4862
    %4989 = vst [vmem:[#allocation17 + $0x8] sm:$0xff] %v4865
    %4990 = vst [vmem:[#allocation17 + $0x10] sm:$0xff] %v4870
    %4991 = vst [vmem:[#allocation17 + $0x18] sm:$0xff] %v4873
    %4992 = vst [vmem:[#allocation17 + $0x20] sm:$0xff] %v4878
    %4993 = vst [vmem:[#allocation17 + $0x28] sm:$0xff] %v4881
    %4994 = vst [vmem:[#allocation17 + $0x30] sm:$0xff] %v4886
    %4995 = vst [vmem:[#allocation17 + $0x38] sm:$0xff] %v4889
    %4996 = vst [vmem:[#allocation17 + $0x40] sm:$0xff] %v4894
    %4997 = vst [vmem:[#allocation17 + $0x48] sm:$0xff] %v4897
    %4998 = vst [vmem:[#allocation17 + $0x50] sm:$0xff] %v4902
    %4999 = vst [vmem:[#allocation17 + $0x58] sm:$0xff] %v4905
    %5000 = vst [vmem:[#allocation17 + $0x60] sm:$0xff] %v4910
    %5001 = vst [vmem:[#allocation17 + $0x68] sm:$0xff] %v4913
    %5002 = vst [vmem:[#allocation17 + $0x70] sm:$0xff] %v4918
    %5003 = vst [vmem:[#allocation17 + $0x78] sm:$0xff] %v4921
    %5004 = vst [vmem:[#allocation17 + $0x80] sm:$0xff] %v4926
    %5005 = vst [vmem:[#allocation17 + $0x88] sm:$0xff] %v4929
    %5006 = vst [vmem:[#allocation17 + $0x90] sm:$0xff] %v4934
    %5007 = vst [vmem:[#allocation17 + $0x98] sm:$0xff] %v4937
    %5008 = vst [vmem:[#allocation17 + $0xa0] sm:$0xff] %v4942
    %5009 = vst [vmem:[#allocation17 + $0xa8] sm:$0xff] %v4945
    %5010 = vst [vmem:[#allocation17 + $0xb0] sm:$0xff] %v4950
    %5011 = vst [vmem:[#allocation17 + $0xb8] sm:$0xff] %v4953
    %5012 = vst [vmem:[#allocation17 + $0xc0] sm:$0xff] %v4958
    %5013 = vst [vmem:[#allocation17 + $0xc8] sm:$0xff] %v4961
    %5014 = vst [vmem:[#allocation17 + $0xd0] sm:$0xff] %v4966
    %5015 = vst [vmem:[#allocation17 + $0xd8] sm:$0xff] %v4969
    %5016 = vst [vmem:[#allocation17 + $0xe0] sm:$0xff] %v4974
    %5017 = vst [vmem:[#allocation17 + $0xe8] sm:$0xff] %v4977
    %5018 = vst [vmem:[#allocation17 + $0xf0] sm:$0xff] %v4982
    %5019 = vst [vmem:[#allocation17 + $0xf8] sm:$0xff] %v4985
    // Predicated region
    $region74: #{tpu_custom_call.1} parent=1 // pred_check
      _
    $region75: #{tpu_custom_call.1} parent=1 // pred_check_branch
      %5021 = sbr.rel (0) target = $region77
    $region76: #{tpu_custom_call.1} parent=1 // pred_region
      %s5023 = ssub.s32 4096, 4096
      %5024 = vsyncadd [#allocation4], %s5023
      %s5025 = sshll.u32 [#allocation17], 4
      %s5026 = int_to_ptr.vmem [resolvable:$true] %s5025
      %5031 = dma.vmem_to_hbm [thread:$0]  %s5026, 4096, %s9, [#allocation4], 128, 128, 8
    $region77: #{tpu_custom_call.1} parent=1 // pred_fallthru
      _
    // Predicated region
    $region78: #{tpu_custom_call.1} parent=1 // pred_check
      _
    $region79: #{tpu_custom_call.1} parent=1 // pred_check_branch
      %5033 = sbr.rel (0) target = $region81
    $region80: #{tpu_custom_call.1} parent=1 // pred_region
      %5034 = dma.done [#allocation4], 4096
    $region81: #{tpu_custom_call.1} parent=1 // pred_fallthru
      _
    %5035 = vsyncpa [#allocation3], 1
    %5036 = vsyncpa [#allocation6], 1
    %5037 = vsyncpa [#allocation9], 1
    %5038 = vsyncpa [#allocation12], 1
    %5039 = vsyncpa [#allocation15], 1
    %5040 = vsyncpa [#allocation4], 1

</llo_original>
